<compile_context>
chip_gen: v7x
topology: tpu7x:2x2x1
jax: 0.10.0
libtpu: 0.0.40
codegen_flags: <defaults>
</compile_context>

<pallas_src>
import functools

import jax
import jax.numpy as jnp
from jax import lax
from jax.experimental import pallas as pl
from jax.experimental.pallas import tpu as pltpu


def _pick_time_chunk(T):
    """Largest Tc in {16, 8, 4, 2, 1} dividing T (timesteps per grid step)."""
    for tc in (16, 8, 4, 2, 1):
        if T % tc == 0:
            return tc
    return 1


# ---------------------------------------------------------------------------
# Fused bidirectional GRU kernel (dense layer folded into input projections).
#
# Grid axis: time blocks, sequential ("arbitrary").  At grid step s the
# forward direction consumes time block s and the backward direction consumes
# time block nb-1-s; within the block the backward direction walks local
# indices Tc-1 .. 0.  Hidden states are carried across grid steps in f32 VMEM
# scratch.  PyTorch GRU cell (gate order r, z, n):
#   r = sigmoid(xg_r + hg_r); z = sigmoid(xg_z + hg_z)
#   n = tanh(xg_n + r * hg_n); h' = (1 - z) * n + z * h
# ---------------------------------------------------------------------------
def _bigru_kernel(vid_f_ref, vid_b_ref,
                  wcf_ref, wcb_ref, bcf_ref, bcb_ref,
                  whhf_ref, whhb_ref, bhhf_ref, bhhb_ref,
                  out_f_ref, out_b_ref,
                  hf_scr, hb_scr):
    s = pl.program_id(0)
    Tc = out_f_ref.shape[0]
    H = hf_scr.shape[1]

    @pl.when(s == 0)
    def _():
        hf_scr[...] = jnp.zeros_like(hf_scr)
        hb_scr[...] = jnp.zeros_like(hb_scr)

    # Weights are VMEM-resident across grid steps (constant index maps);
    # read once per grid step, outside the unrolled time loop.
    wc_f = wcf_ref[...]
    wc_b = wcb_ref[...]
    bc_f = bcf_ref[...]
    bc_b = bcb_ref[...]
    whh_f = whhf_ref[...]
    whh_b = whhb_ref[...]
    bhh_f = bhhf_ref[...]
    bhh_b = bhhb_ref[...]

    def gru_cell(x, h_prev, wc, bc, whh, bhh):
        # x: (B, Dv) raw video features; the dense layer is folded into wc/bc.
        xg = jnp.dot(x, wc, preferred_element_type=jnp.float32) + bc       # (B, 3H)
        hg = jnp.dot(h_prev, whh, preferred_element_type=jnp.float32) + bhh
        r = jax.nn.sigmoid(xg[:, :H] + hg[:, :H])
        z = jax.nn.sigmoid(xg[:, H:2 * H] + hg[:, H:2 * H])
        n = jnp.tanh(xg[:, 2 * H:] + r * hg[:, 2 * H:])
        return (1.0 - z) * n + z * h_prev

    def body(i, carry):
        h_f, h_b = carry
        j = Tc - 1 - i                              # backward direction's local index
        x_f = vid_f_ref[i].astype(jnp.float32)      # (B, Dv)
        x_b = vid_b_ref[j].astype(jnp.float32)      # (B, Dv)
        h_f = gru_cell(x_f, h_f, wc_f, bc_f, whh_f, bhh_f)
        h_b = gru_cell(x_b, h_b, wc_b, bc_b, whh_b, bhh_b)
        out_f_ref[i] = h_f.astype(out_f_ref.dtype)
        out_b_ref[j] = h_b.astype(out_b_ref.dtype)
        return h_f, h_b

    h_f, h_b = lax.fori_loop(0, Tc, body, (hf_scr[...], hb_scr[...]),
                             unroll=True)
    hf_scr[...] = h_f
    hb_scr[...] = h_b


def _bigru_pallas(x_tm, prep, dim_hidden):
    """x_tm: time-major video features (T, B, Dv). Returns (out_f, out_b),
    each (T, B, H) in original time order."""
    T, B, Dv = x_tm.shape
    H = dim_hidden
    Tc = _pick_time_chunk(T)
    nb = T // Tc

    out_f, out_b = pl.pallas_call(
        _bigru_kernel,
        out_shape=(jax.ShapeDtypeStruct((T, B, H), x_tm.dtype),
                   jax.ShapeDtypeStruct((T, B, H), x_tm.dtype)),
        grid_spec=pltpu.PrefetchScalarGridSpec(
            num_scalar_prefetch=0,
            grid=(nb,),
            in_specs=[
                # video features: forward / backward time blocks
                pl.BlockSpec((Tc, B, Dv), lambda s: (s, 0, 0)),
                pl.BlockSpec((Tc, B, Dv), lambda s: (nb - 1 - s, 0, 0)),
                # folded (dense -> W_ih) weights / biases, VMEM-resident
                pl.BlockSpec((Dv, 3 * H), lambda s: (0, 0)),
                pl.BlockSpec((Dv, 3 * H), lambda s: (0, 0)),
                pl.BlockSpec((1, 3 * H), lambda s: (0, 0)),
                pl.BlockSpec((1, 3 * H), lambda s: (0, 0)),
                # hidden-to-hidden weights / biases, VMEM-resident
                pl.BlockSpec((H, 3 * H), lambda s: (0, 0)),
                pl.BlockSpec((H, 3 * H), lambda s: (0, 0)),
                pl.BlockSpec((1, 3 * H), lambda s: (0, 0)),
                pl.BlockSpec((1, 3 * H), lambda s: (0, 0)),
            ],
            out_specs=[
                pl.BlockSpec((Tc, B, H), lambda s: (s, 0, 0)),
                pl.BlockSpec((Tc, B, H), lambda s: (nb - 1 - s, 0, 0)),
            ],
            scratch_shapes=[pltpu.VMEM((B, H), jnp.float32),
                            pltpu.VMEM((B, H), jnp.float32)],
        ),
        compiler_params=pltpu.CompilerParams(
            dimension_semantics=("arbitrary",)),
    )(x_tm, x_tm,
      prep["wc_f"], prep["wc_b"], prep["bc_f"], prep["bc_b"],
      prep["whh_f"], prep["whh_b"], prep["bhh_f"], prep["bhh_b"])
    return out_f, out_b


# ---------------------------------------------------------------------------
# Parameters (synthetic, PyTorch layout) + one-time folding/pre-transpose.
# ---------------------------------------------------------------------------
def init_encoder_params(key, dim_vid, dim_hidden):
    ks = jax.random.split(key, 10)
    H = dim_hidden
    xav_std = (2.0 / (dim_vid + H)) ** 0.5
    params = {
        "dense_w": xav_std * jax.random.normal(ks[0], (H, dim_vid), jnp.float32),
        "dense_b": 0.01 * jax.random.normal(ks[1], (H,), jnp.float32),
    }
    s = 1.0 / (H ** 0.5)

    def u(k, shape):
        return jax.random.uniform(k, shape, jnp.float32, -s, s)

    params.update({
        "w_ih_f": u(ks[2], (3 * H, H)), "w_hh_f": u(ks[3], (3 * H, H)),
        "b_ih_f": u(ks[4], (3 * H,)),   "b_hh_f": u(ks[5], (3 * H,)),
        "w_ih_b": u(ks[6], (3 * H, H)), "w_hh_b": u(ks[7], (3 * H, H)),
        "b_ih_b": u(ks[8], (3 * H,)),   "b_hh_b": u(ks[9], (3 * H,)),
    })
    return params


def prepare_encoder_params(params):
    """Fold dense into the GRU input projections and pre-transpose all weights
    into the kernel layout.  Run once, outside the forward pass."""
    dense_wt = params["dense_w"].T          # (Dv, H)
    dense_b = params["dense_b"]             # (H,)
    prep = {}
    for d in ("f", "b"):
        w_ih_t = params[f"w_ih_{d}"].T      # (H, 3H)
        prep[f"wc_{d}"] = dense_wt @ w_ih_t                       # (Dv, 3H)
        prep[f"bc_{d}"] = (dense_b @ w_ih_t
                           + params[f"b_ih_{d}"]).reshape(1, -1)  # (1, 3H)
        prep[f"whh_{d}"] = params[f"w_hh_{d}"].T                  # (H, 3H)
        prep[f"bhh_{d}"] = params[f"b_hh_{d}"].reshape(1, -1)     # (1, 3H)
    return prep


@functools.partial(jax.jit, static_argnames=("dim_hidden",))
def encoder_forward(prep, vid_feats, dim_hidden):
    """vid_feats: (B, T, dim_vid) -> (output (B, T, 2H), hidden (2, B, H))."""
    B, T, Dv = vid_feats.shape
    H = dim_hidden
    # Single transpose of the smallest tensor to time-major; everything else
    # (reversal, dense, projections, both directions) is inside the kernel.
    x_tm = jnp.transpose(vid_feats, (1, 0, 2))             # (T, B, Dv)
    out_f, out_b = _bigru_pallas(x_tm, prep, H)            # (T, B, H) each
    output = jnp.transpose(jnp.concatenate([out_f, out_b], axis=-1),
                           (1, 0, 2))                      # (B, T, 2H)
    hidden = jnp.stack([out_f[T - 1], out_b[0]], axis=0)   # (2, B, H)
    return output, hidden


# ---------------------------------------------------------------------------
# Pure-JAX reference (mirrors the PyTorch module in eval mode).
# ---------------------------------------------------------------------------
def encoder_reference(params, vid_feats):
    B, T, Dv = vid_feats.shape
    H = params["dense_w"].shape[0]
    x = vid_feats.reshape(-1, Dv) @ params["dense_w"].T + params["dense_b"]
    x = x.reshape(B, T, H)

    def run_dir(w_ih, b_ih, w_hh, b_hh, reverse):
        xs = x[:, ::-1, :] if reverse else x

        def step(h, x_t):
            xg = x_t @ w_ih.T + b_ih
            hg = h @ w_hh.T + b_hh
            r = jax.nn.sigmoid(xg[:, :H] + hg[:, :H])
            z = jax.nn.sigmoid(xg[:, H:2 * H] + hg[:, H:2 * H])
            n = jnp.tanh(xg[:, 2 * H:] + r * hg[:, 2 * H:])
            h = (1.0 - z) * n + z * h
            return h, h

        h_last, outs = lax.scan(step, jnp.zeros((B, H), jnp.float32),
                                jnp.transpose(xs, (1, 0, 2)))
        outs = jnp.transpose(outs, (1, 0, 2))
        if reverse:
            outs = outs[:, ::-1, :]
        return outs, h_last

    out_f, h_f = run_dir(params["w_ih_f"], params["b_ih_f"],
                         params["w_hh_f"], params["b_hh_f"], False)
    out_b, h_b = run_dir(params["w_ih_b"], params["b_ih_b"],
                         params["w_hh_b"], params["b_hh_b"], True)
    return jnp.concatenate([out_f, out_b], axis=-1), jnp.stack([h_f, h_b], 0)


if __name__ == "__main__":
    B, T, DIM_VID, DIM_HIDDEN = 2, 8, 32, 32
    key = jax.random.PRNGKey(0)
    pkey, xkey = jax.random.split(key)
    params = init_encoder_params(pkey, DIM_VID, DIM_HIDDEN)
    prep = prepare_encoder_params(params)
    vid_feats = jax.random.normal(xkey, (B, T, DIM_VID), jnp.float32)

    output, hidden = encoder_forward(prep, vid_feats, DIM_HIDDEN)
    jax.block_until_ready((output, hidden))

    assert output.shape == (B, T, 2 * DIM_HIDDEN), output.shape
    assert hidden.shape == (2, B, DIM_HIDDEN), hidden.shape

    # Numerical check against the pure-JAX reference of the PyTorch module.
    ref_out, ref_hid = encoder_reference(params, vid_feats)
    assert jnp.allclose(output, ref_out, atol=1e-3, rtol=1e-3), \
        float(jnp.max(jnp.abs(output - ref_out)))
    assert jnp.allclose(hidden, ref_hid, atol=1e-3, rtol=1e-3), \
        float(jnp.max(jnp.abs(hidden - ref_hid)))

    print("KERNEL_OK")
</pallas_src>

<mosaic_0001>
module attributes {stable_mosaic.version = 11 : i64} {
  func.func @_bigru_kernel(%arg0: i32, %arg1: memref<8x2x32xf32, #tpu.memory_space<vmem>>, %arg2: memref<8x2x32xf32, #tpu.memory_space<vmem>>, %arg3: memref<32x96xf32, #tpu.memory_space<vmem>>, %arg4: memref<32x96xf32, #tpu.memory_space<vmem>>, %arg5: memref<1x96xf32, #tpu.memory_space<vmem>>, %arg6: memref<1x96xf32, #tpu.memory_space<vmem>>, %arg7: memref<32x96xf32, #tpu.memory_space<vmem>>, %arg8: memref<32x96xf32, #tpu.memory_space<vmem>>, %arg9: memref<1x96xf32, #tpu.memory_space<vmem>>, %arg10: memref<1x96xf32, #tpu.memory_space<vmem>>, %arg11: memref<8x2x32xf32, #tpu.memory_space<vmem>>, %arg12: memref<8x2x32xf32, #tpu.memory_space<vmem>>, %arg13: memref<2x32xf32, #tpu.memory_space<vmem>>, %arg14: memref<2x32xf32, #tpu.memory_space<vmem>>) attributes {dimension_semantics = [#tpu.dimension_semantics<arbitrary>], iteration_bounds = array<i64: 1>, scalar_prefetch = 0 : i64, scratch_operands = 2 : i64, tpu.core_type = #tpu.core_type<tc>, window_params = [{transform_indices = @transform_0, window_bounds = array<i64: 8, 2, 32>}, {transform_indices = @transform_1, window_bounds = array<i64: 8, 2, 32>}, {pipeline_mode = #tpu.pipeline_mode<synchronous>, transform_indices = @transform_2, window_bounds = array<i64: 32, 96>}, {pipeline_mode = #tpu.pipeline_mode<synchronous>, transform_indices = @transform_3, window_bounds = array<i64: 32, 96>}, {pipeline_mode = #tpu.pipeline_mode<synchronous>, transform_indices = @transform_4, window_bounds = array<i64: 1, 96>}, {pipeline_mode = #tpu.pipeline_mode<synchronous>, transform_indices = @transform_5, window_bounds = array<i64: 1, 96>}, {pipeline_mode = #tpu.pipeline_mode<synchronous>, transform_indices = @transform_6, window_bounds = array<i64: 32, 96>}, {pipeline_mode = #tpu.pipeline_mode<synchronous>, transform_indices = @transform_7, window_bounds = array<i64: 32, 96>}, {pipeline_mode = #tpu.pipeline_mode<synchronous>, transform_indices = @transform_8, window_bounds = array<i64: 1, 96>}, {pipeline_mode = #tpu.pipeline_mode<synchronous>, transform_indices = @transform_9, window_bounds = array<i64: 1, 96>}, {transform_indices = @transform_10, window_bounds = array<i64: 8, 2, 32>}, {transform_indices = @transform_11, window_bounds = array<i64: 8, 2, 32>}]} {
    %c0_i32 = arith.constant 0 : i32
    %0 = arith.cmpi eq, %arg0, %c0_i32 : i32
    %1 = arith.extui %0 : i1 to i32
    %c0_i32_0 = arith.constant 0 : i32
    %2 = arith.cmpi ne, %1, %c0_i32_0 : i32
    scf.if %2 {
      %cst_176 = arith.constant 0.000000e+00 : f32
      %647 = vector.broadcast %cst_176 : f32 to vector<2x32xf32>
      %c0_177 = arith.constant 0 : index
      %c0_178 = arith.constant 0 : index
      %648 = vector.load %arg13[%c0_177, %c0_178] : memref<2x32xf32, #tpu.memory_space<vmem>>, vector<2x32xf32>
      tpu.vector_store %arg13[%c0_177, %c0_178], %647 {strides = array<i32>} : memref<2x32xf32, #tpu.memory_space<vmem>>, vector<2x32xf32>,
      %cst_179 = arith.constant 0.000000e+00 : f32
      %649 = vector.broadcast %cst_179 : f32 to vector<2x32xf32>
      %c0_180 = arith.constant 0 : index
      %c0_181 = arith.constant 0 : index
      %650 = vector.load %arg14[%c0_180, %c0_181] : memref<2x32xf32, #tpu.memory_space<vmem>>, vector<2x32xf32>
      tpu.vector_store %arg14[%c0_180, %c0_181], %649 {strides = array<i32>} : memref<2x32xf32, #tpu.memory_space<vmem>>, vector<2x32xf32>,
    } else {
    }
    %c0 = arith.constant 0 : index
    %c0_1 = arith.constant 0 : index
    %3 = vector.load %arg3[%c0, %c0_1] : memref<32x96xf32, #tpu.memory_space<vmem>>, vector<32x96xf32>
    %c0_2 = arith.constant 0 : index
    %c0_3 = arith.constant 0 : index
    %4 = vector.load %arg4[%c0_2, %c0_3] : memref<32x96xf32, #tpu.memory_space<vmem>>, vector<32x96xf32>
    %c0_4 = arith.constant 0 : index
    %c0_5 = arith.constant 0 : index
    %5 = vector.load %arg5[%c0_4, %c0_5] : memref<1x96xf32, #tpu.memory_space<vmem>>, vector<1x96xf32>
    %c0_6 = arith.constant 0 : index
    %c0_7 = arith.constant 0 : index
    %6 = vector.load %arg6[%c0_6, %c0_7] : memref<1x96xf32, #tpu.memory_space<vmem>>, vector<1x96xf32>
    %c0_8 = arith.constant 0 : index
    %c0_9 = arith.constant 0 : index
    %7 = vector.load %arg7[%c0_8, %c0_9] : memref<32x96xf32, #tpu.memory_space<vmem>>, vector<32x96xf32>
    %c0_10 = arith.constant 0 : index
    %c0_11 = arith.constant 0 : index
    %8 = vector.load %arg8[%c0_10, %c0_11] : memref<32x96xf32, #tpu.memory_space<vmem>>, vector<32x96xf32>
    %c0_12 = arith.constant 0 : index
    %c0_13 = arith.constant 0 : index
    %9 = vector.load %arg9[%c0_12, %c0_13] : memref<1x96xf32, #tpu.memory_space<vmem>>, vector<1x96xf32>
    %c0_14 = arith.constant 0 : index
    %c0_15 = arith.constant 0 : index
    %10 = vector.load %arg10[%c0_14, %c0_15] : memref<1x96xf32, #tpu.memory_space<vmem>>, vector<1x96xf32>
    %c0_16 = arith.constant 0 : index
    %c0_17 = arith.constant 0 : index
    %11 = vector.load %arg13[%c0_16, %c0_17] : memref<2x32xf32, #tpu.memory_space<vmem>>, vector<2x32xf32>
    %c0_18 = arith.constant 0 : index
    %c0_19 = arith.constant 0 : index
    %12 = vector.load %arg14[%c0_18, %c0_19] : memref<2x32xf32, #tpu.memory_space<vmem>>, vector<2x32xf32>
    %c0_i32_20 = arith.constant 0 : i32
    %c7_i32 = arith.constant 7 : i32
    %13 = arith.subi %c7_i32, %c0_i32_20 : i32
    %14 = arith.index_cast %c0_i32_20 : i32 to index
    %c0_21 = arith.constant 0 : index
    %c0_22 = arith.constant 0 : index
    %15 = vector.load %arg1[%14, %c0_21, %c0_22] : memref<8x2x32xf32, #tpu.memory_space<vmem>>, vector<1x2x32xf32>
    %16 = vector.shape_cast %15 : vector<1x2x32xf32> to vector<2x32xf32>
    %17 = arith.index_cast %13 : i32 to index
    %c0_23 = arith.constant 0 : index
    %c0_24 = arith.constant 0 : index
    %18 = vector.load %arg2[%17, %c0_23, %c0_24] : memref<8x2x32xf32, #tpu.memory_space<vmem>>, vector<1x2x32xf32>
    %19 = vector.shape_cast %18 : vector<1x2x32xf32> to vector<2x32xf32>
    %cst = arith.constant dense<0.000000e+00> : vector<2x96xf32>
    %20 = tpu.matmul %16, %3, %cst {dimension_numbers = #tpu.dot_dimension_numbers<[1], [0], [0], [1], [0, 0, 1, 1], [], []>} : vector<2x32xf32>, vector<32x96xf32>, vector<2x96xf32> -> vector<2x96xf32>
    %21 = vector.broadcast %5 : vector<1x96xf32> to vector<2x96xf32>
    %22 = arith.addf %20, %21 : vector<2x96xf32>
    %cst_25 = arith.constant dense<0.000000e+00> : vector<2x96xf32>
    %23 = tpu.matmul %11, %7, %cst_25 {dimension_numbers = #tpu.dot_dimension_numbers<[1], [0], [0], [1], [0, 0, 1, 1], [], []>} : vector<2x32xf32>, vector<32x96xf32>, vector<2x96xf32> -> vector<2x96xf32>
    %24 = vector.broadcast %9 : vector<1x96xf32> to vector<2x96xf32>
    %25 = arith.addf %23, %24 : vector<2x96xf32>
    %26 = vector.extract_strided_slice %22 {offsets = [0, 0], sizes = [2, 32], strides = [1, 1]} : vector<2x96xf32> to vector<2x32xf32>
    %27 = vector.extract_strided_slice %25 {offsets = [0, 0], sizes = [2, 32], strides = [1, 1]} : vector<2x96xf32> to vector<2x32xf32>
    %28 = arith.addf %26, %27 : vector<2x32xf32>
    %29 = arith.negf %28 : vector<2x32xf32>
    %30 = math.exp %29 : vector<2x32xf32>
    %cst_26 = arith.constant 1.000000e+00 : f32
    %31 = vector.broadcast %cst_26 : f32 to vector<2x32xf32>
    %32 = arith.addf %31, %30 : vector<2x32xf32>
    %33 = arith.divf %31, %32 : vector<2x32xf32>
    %34 = vector.extract_strided_slice %22 {offsets = [0, 32], sizes = [2, 32], strides = [1, 1]} : vector<2x96xf32> to vector<2x32xf32>
    %35 = vector.extract_strided_slice %25 {offsets = [0, 32], sizes = [2, 32], strides = [1, 1]} : vector<2x96xf32> to vector<2x32xf32>
    %36 = arith.addf %34, %35 : vector<2x32xf32>
    %37 = arith.negf %36 : vector<2x32xf32>
    %38 = math.exp %37 : vector<2x32xf32>
    %cst_27 = arith.constant 1.000000e+00 : f32
    %39 = vector.broadcast %cst_27 : f32 to vector<2x32xf32>
    %40 = arith.addf %39, %38 : vector<2x32xf32>
    %41 = arith.divf %39, %40 : vector<2x32xf32>
    %42 = vector.extract_strided_slice %22 {offsets = [0, 64], sizes = [2, 32], strides = [1, 1]} : vector<2x96xf32> to vector<2x32xf32>
    %43 = vector.extract_strided_slice %25 {offsets = [0, 64], sizes = [2, 32], strides = [1, 1]} : vector<2x96xf32> to vector<2x32xf32>
    %44 = arith.mulf %33, %43 : vector<2x32xf32>
    %45 = arith.addf %42, %44 : vector<2x32xf32>
    %46 = math.tanh %45 : vector<2x32xf32>
    %cst_28 = arith.constant 1.000000e+00 : f32
    %47 = vector.broadcast %cst_28 : f32 to vector<2x32xf32>
    %48 = arith.subf %47, %41 : vector<2x32xf32>
    %49 = arith.mulf %48, %46 : vector<2x32xf32>
    %50 = arith.mulf %41, %11 : vector<2x32xf32>
    %51 = arith.addf %49, %50 : vector<2x32xf32>
    %cst_29 = arith.constant dense<0.000000e+00> : vector<2x96xf32>
    %52 = tpu.matmul %19, %4, %cst_29 {dimension_numbers = #tpu.dot_dimension_numbers<[1], [0], [0], [1], [0, 0, 1, 1], [], []>} : vector<2x32xf32>, vector<32x96xf32>, vector<2x96xf32> -> vector<2x96xf32>
    %53 = vector.broadcast %6 : vector<1x96xf32> to vector<2x96xf32>
    %54 = arith.addf %52, %53 : vector<2x96xf32>
    %cst_30 = arith.constant dense<0.000000e+00> : vector<2x96xf32>
    %55 = tpu.matmul %12, %8, %cst_30 {dimension_numbers = #tpu.dot_dimension_numbers<[1], [0], [0], [1], [0, 0, 1, 1], [], []>} : vector<2x32xf32>, vector<32x96xf32>, vector<2x96xf32> -> vector<2x96xf32>
    %56 = vector.broadcast %10 : vector<1x96xf32> to vector<2x96xf32>
    %57 = arith.addf %55, %56 : vector<2x96xf32>
    %58 = vector.extract_strided_slice %54 {offsets = [0, 0], sizes = [2, 32], strides = [1, 1]} : vector<2x96xf32> to vector<2x32xf32>
    %59 = vector.extract_strided_slice %57 {offsets = [0, 0], sizes = [2, 32], strides = [1, 1]} : vector<2x96xf32> to vector<2x32xf32>
    %60 = arith.addf %58, %59 : vector<2x32xf32>
    %61 = arith.negf %60 : vector<2x32xf32>
    %62 = math.exp %61 : vector<2x32xf32>
    %cst_31 = arith.constant 1.000000e+00 : f32
    %63 = vector.broadcast %cst_31 : f32 to vector<2x32xf32>
    %64 = arith.addf %63, %62 : vector<2x32xf32>
    %65 = arith.divf %63, %64 : vector<2x32xf32>
    %66 = vector.extract_strided_slice %54 {offsets = [0, 32], sizes = [2, 32], strides = [1, 1]} : vector<2x96xf32> to vector<2x32xf32>
    %67 = vector.extract_strided_slice %57 {offsets = [0, 32], sizes = [2, 32], strides = [1, 1]} : vector<2x96xf32> to vector<2x32xf32>
    %68 = arith.addf %66, %67 : vector<2x32xf32>
    %69 = arith.negf %68 : vector<2x32xf32>
    %70 = math.exp %69 : vector<2x32xf32>
    %cst_32 = arith.constant 1.000000e+00 : f32
    %71 = vector.broadcast %cst_32 : f32 to vector<2x32xf32>
    %72 = arith.addf %71, %70 : vector<2x32xf32>
    %73 = arith.divf %71, %72 : vector<2x32xf32>
    %74 = vector.extract_strided_slice %54 {offsets = [0, 64], sizes = [2, 32], strides = [1, 1]} : vector<2x96xf32> to vector<2x32xf32>
    %75 = vector.extract_strided_slice %57 {offsets = [0, 64], sizes = [2, 32], strides = [1, 1]} : vector<2x96xf32> to vector<2x32xf32>
    %76 = arith.mulf %65, %75 : vector<2x32xf32>
    %77 = arith.addf %74, %76 : vector<2x32xf32>
    %78 = math.tanh %77 : vector<2x32xf32>
    %cst_33 = arith.constant 1.000000e+00 : f32
    %79 = vector.broadcast %cst_33 : f32 to vector<2x32xf32>
    %80 = arith.subf %79, %73 : vector<2x32xf32>
    %81 = arith.mulf %80, %78 : vector<2x32xf32>
    %82 = arith.mulf %73, %12 : vector<2x32xf32>
    %83 = arith.addf %81, %82 : vector<2x32xf32>
    %84 = arith.index_cast %c0_i32_20 : i32 to index
    %c0_34 = arith.constant 0 : index
    %c0_35 = arith.constant 0 : index
    %85 = vector.load %arg11[%84, %c0_34, %c0_35] : memref<8x2x32xf32, #tpu.memory_space<vmem>>, vector<1x2x32xf32>
    %86 = vector.shape_cast %85 : vector<1x2x32xf32> to vector<2x32xf32>
    %87 = vector.shape_cast %51 : vector<2x32xf32> to vector<1x2x32xf32>
    tpu.vector_store %arg11[%84, %c0_34, %c0_35], %87 {strides = array<i32>} : memref<8x2x32xf32, #tpu.memory_space<vmem>>, vector<1x2x32xf32>,
    %88 = arith.index_cast %13 : i32 to index
    %c0_36 = arith.constant 0 : index
    %c0_37 = arith.constant 0 : index
    %89 = vector.load %arg12[%88, %c0_36, %c0_37] : memref<8x2x32xf32, #tpu.memory_space<vmem>>, vector<1x2x32xf32>
    %90 = vector.shape_cast %89 : vector<1x2x32xf32> to vector<2x32xf32>
    %91 = vector.shape_cast %83 : vector<2x32xf32> to vector<1x2x32xf32>
    tpu.vector_store %arg12[%88, %c0_36, %c0_37], %91 {strides = array<i32>} : memref<8x2x32xf32, #tpu.memory_space<vmem>>, vector<1x2x32xf32>,
    %c1_i32 = arith.constant 1 : i32
    %c7_i32_38 = arith.constant 7 : i32
    %92 = arith.subi %c7_i32_38, %c1_i32 : i32
    %93 = arith.index_cast %c1_i32 : i32 to index
    %c0_39 = arith.constant 0 : index
    %c0_40 = arith.constant 0 : index
    %94 = vector.load %arg1[%93, %c0_39, %c0_40] : memref<8x2x32xf32, #tpu.memory_space<vmem>>, vector<1x2x32xf32>
    %95 = vector.shape_cast %94 : vector<1x2x32xf32> to vector<2x32xf32>
    %96 = arith.index_cast %92 : i32 to index
    %c0_41 = arith.constant 0 : index
    %c0_42 = arith.constant 0 : index
    %97 = vector.load %arg2[%96, %c0_41, %c0_42] : memref<8x2x32xf32, #tpu.memory_space<vmem>>, vector<1x2x32xf32>
    %98 = vector.shape_cast %97 : vector<1x2x32xf32> to vector<2x32xf32>
    %cst_43 = arith.constant dense<0.000000e+00> : vector<2x96xf32>
    %99 = tpu.matmul %95, %3, %cst_43 {dimension_numbers = #tpu.dot_dimension_numbers<[1], [0], [0], [1], [0, 0, 1, 1], [], []>} : vector<2x32xf32>, vector<32x96xf32>, vector<2x96xf32> -> vector<2x96xf32>
    %100 = vector.broadcast %5 : vector<1x96xf32> to vector<2x96xf32>
    %101 = arith.addf %99, %100 : vector<2x96xf32>
    %cst_44 = arith.constant dense<0.000000e+00> : vector<2x96xf32>
    %102 = tpu.matmul %51, %7, %cst_44 {dimension_numbers = #tpu.dot_dimension_numbers<[1], [0], [0], [1], [0, 0, 1, 1], [], []>} : vector<2x32xf32>, vector<32x96xf32>, vector<2x96xf32> -> vector<2x96xf32>
    %103 = vector.broadcast %9 : vector<1x96xf32> to vector<2x96xf32>
    %104 = arith.addf %102, %103 : vector<2x96xf32>
    %105 = vector.extract_strided_slice %101 {offsets = [0, 0], sizes = [2, 32], strides = [1, 1]} : vector<2x96xf32> to vector<2x32xf32>
    %106 = vector.extract_strided_slice %104 {offsets = [0, 0], sizes = [2, 32], strides = [1, 1]} : vector<2x96xf32> to vector<2x32xf32>
    %107 = arith.addf %105, %106 : vector<2x32xf32>
    %108 = arith.negf %107 : vector<2x32xf32>
    %109 = math.exp %108 : vector<2x32xf32>
    %cst_45 = arith.constant 1.000000e+00 : f32
    %110 = vector.broadcast %cst_45 : f32 to vector<2x32xf32>
    %111 = arith.addf %110, %109 : vector<2x32xf32>
    %112 = arith.divf %110, %111 : vector<2x32xf32>
    %113 = vector.extract_strided_slice %101 {offsets = [0, 32], sizes = [2, 32], strides = [1, 1]} : vector<2x96xf32> to vector<2x32xf32>
    %114 = vector.extract_strided_slice %104 {offsets = [0, 32], sizes = [2, 32], strides = [1, 1]} : vector<2x96xf32> to vector<2x32xf32>
    %115 = arith.addf %113, %114 : vector<2x32xf32>
    %116 = arith.negf %115 : vector<2x32xf32>
    %117 = math.exp %116 : vector<2x32xf32>
    %cst_46 = arith.constant 1.000000e+00 : f32
    %118 = vector.broadcast %cst_46 : f32 to vector<2x32xf32>
    %119 = arith.addf %118, %117 : vector<2x32xf32>
    %120 = arith.divf %118, %119 : vector<2x32xf32>
    %121 = vector.extract_strided_slice %101 {offsets = [0, 64], sizes = [2, 32], strides = [1, 1]} : vector<2x96xf32> to vector<2x32xf32>
    %122 = vector.extract_strided_slice %104 {offsets = [0, 64], sizes = [2, 32], strides = [1, 1]} : vector<2x96xf32> to vector<2x32xf32>
    %123 = arith.mulf %112, %122 : vector<2x32xf32>
    %124 = arith.addf %121, %123 : vector<2x32xf32>
    %125 = math.tanh %124 : vector<2x32xf32>
    %cst_47 = arith.constant 1.000000e+00 : f32
    %126 = vector.broadcast %cst_47 : f32 to vector<2x32xf32>
    %127 = arith.subf %126, %120 : vector<2x32xf32>
    %128 = arith.mulf %127, %125 : vector<2x32xf32>
    %129 = arith.mulf %120, %51 : vector<2x32xf32>
    %130 = arith.addf %128, %129 : vector<2x32xf32>
    %cst_48 = arith.constant dense<0.000000e+00> : vector<2x96xf32>
    %131 = tpu.matmul %98, %4, %cst_48 {dimension_numbers = #tpu.dot_dimension_numbers<[1], [0], [0], [1], [0, 0, 1, 1], [], []>} : vector<2x32xf32>, vector<32x96xf32>, vector<2x96xf32> -> vector<2x96xf32>
    %132 = vector.broadcast %6 : vector<1x96xf32> to vector<2x96xf32>
    %133 = arith.addf %131, %132 : vector<2x96xf32>
    %cst_49 = arith.constant dense<0.000000e+00> : vector<2x96xf32>
    %134 = tpu.matmul %83, %8, %cst_49 {dimension_numbers = #tpu.dot_dimension_numbers<[1], [0], [0], [1], [0, 0, 1, 1], [], []>} : vector<2x32xf32>, vector<32x96xf32>, vector<2x96xf32> -> vector<2x96xf32>
    %135 = vector.broadcast %10 : vector<1x96xf32> to vector<2x96xf32>
    %136 = arith.addf %134, %135 : vector<2x96xf32>
    %137 = vector.extract_strided_slice %133 {offsets = [0, 0], sizes = [2, 32], strides = [1, 1]} : vector<2x96xf32> to vector<2x32xf32>
    %138 = vector.extract_strided_slice %136 {offsets = [0, 0], sizes = [2, 32], strides = [1, 1]} : vector<2x96xf32> to vector<2x32xf32>
    %139 = arith.addf %137, %138 : vector<2x32xf32>
    %140 = arith.negf %139 : vector<2x32xf32>
    %141 = math.exp %140 : vector<2x32xf32>
    %cst_50 = arith.constant 1.000000e+00 : f32
    %142 = vector.broadcast %cst_50 : f32 to vector<2x32xf32>
    %143 = arith.addf %142, %141 : vector<2x32xf32>
    %144 = arith.divf %142, %143 : vector<2x32xf32>
    %145 = vector.extract_strided_slice %133 {offsets = [0, 32], sizes = [2, 32], strides = [1, 1]} : vector<2x96xf32> to vector<2x32xf32>
    %146 = vector.extract_strided_slice %136 {offsets = [0, 32], sizes = [2, 32], strides = [1, 1]} : vector<2x96xf32> to vector<2x32xf32>
    %147 = arith.addf %145, %146 : vector<2x32xf32>
    %148 = arith.negf %147 : vector<2x32xf32>
    %149 = math.exp %148 : vector<2x32xf32>
    %cst_51 = arith.constant 1.000000e+00 : f32
    %150 = vector.broadcast %cst_51 : f32 to vector<2x32xf32>
    %151 = arith.addf %150, %149 : vector<2x32xf32>
    %152 = arith.divf %150, %151 : vector<2x32xf32>
    %153 = vector.extract_strided_slice %133 {offsets = [0, 64], sizes = [2, 32], strides = [1, 1]} : vector<2x96xf32> to vector<2x32xf32>
    %154 = vector.extract_strided_slice %136 {offsets = [0, 64], sizes = [2, 32], strides = [1, 1]} : vector<2x96xf32> to vector<2x32xf32>
    %155 = arith.mulf %144, %154 : vector<2x32xf32>
    %156 = arith.addf %153, %155 : vector<2x32xf32>
    %157 = math.tanh %156 : vector<2x32xf32>
    %cst_52 = arith.constant 1.000000e+00 : f32
    %158 = vector.broadcast %cst_52 : f32 to vector<2x32xf32>
    %159 = arith.subf %158, %152 : vector<2x32xf32>
    %160 = arith.mulf %159, %157 : vector<2x32xf32>
    %161 = arith.mulf %152, %83 : vector<2x32xf32>
    %162 = arith.addf %160, %161 : vector<2x32xf32>
    %163 = arith.index_cast %c1_i32 : i32 to index
    %c0_53 = arith.constant 0 : index
    %c0_54 = arith.constant 0 : index
    %164 = vector.load %arg11[%163, %c0_53, %c0_54] : memref<8x2x32xf32, #tpu.memory_space<vmem>>, vector<1x2x32xf32>
    %165 = vector.shape_cast %164 : vector<1x2x32xf32> to vector<2x32xf32>
    %166 = vector.shape_cast %130 : vector<2x32xf32> to vector<1x2x32xf32>
    tpu.vector_store %arg11[%163, %c0_53, %c0_54], %166 {strides = array<i32>} : memref<8x2x32xf32, #tpu.memory_space<vmem>>, vector<1x2x32xf32>,
    %167 = arith.index_cast %92 : i32 to index
    %c0_55 = arith.constant 0 : index
    %c0_56 = arith.constant 0 : index
    %168 = vector.load %arg12[%167, %c0_55, %c0_56] : memref<8x2x32xf32, #tpu.memory_space<vmem>>, vector<1x2x32xf32>
    %169 = vector.shape_cast %168 : vector<1x2x32xf32> to vector<2x32xf32>
    %170 = vector.shape_cast %162 : vector<2x32xf32> to vector<1x2x32xf32>
    tpu.vector_store %arg12[%167, %c0_55, %c0_56], %170 {strides = array<i32>} : memref<8x2x32xf32, #tpu.memory_space<vmem>>, vector<1x2x32xf32>,
    %c2_i32 = arith.constant 2 : i32
    %c7_i32_57 = arith.constant 7 : i32
    %171 = arith.subi %c7_i32_57, %c2_i32 : i32
    %172 = arith.index_cast %c2_i32 : i32 to index
    %c0_58 = arith.constant 0 : index
    %c0_59 = arith.constant 0 : index
    %173 = vector.load %arg1[%172, %c0_58, %c0_59] : memref<8x2x32xf32, #tpu.memory_space<vmem>>, vector<1x2x32xf32>
    %174 = vector.shape_cast %173 : vector<1x2x32xf32> to vector<2x32xf32>
    %175 = arith.index_cast %171 : i32 to index
    %c0_60 = arith.constant 0 : index
    %c0_61 = arith.constant 0 : index
    %176 = vector.load %arg2[%175, %c0_60, %c0_61] : memref<8x2x32xf32, #tpu.memory_space<vmem>>, vector<1x2x32xf32>
    %177 = vector.shape_cast %176 : vector<1x2x32xf32> to vector<2x32xf32>
    %cst_62 = arith.constant dense<0.000000e+00> : vector<2x96xf32>
    %178 = tpu.matmul %174, %3, %cst_62 {dimension_numbers = #tpu.dot_dimension_numbers<[1], [0], [0], [1], [0, 0, 1, 1], [], []>} : vector<2x32xf32>, vector<32x96xf32>, vector<2x96xf32> -> vector<2x96xf32>
    %179 = vector.broadcast %5 : vector<1x96xf32> to vector<2x96xf32>
    %180 = arith.addf %178, %179 : vector<2x96xf32>
    %cst_63 = arith.constant dense<0.000000e+00> : vector<2x96xf32>
    %181 = tpu.matmul %130, %7, %cst_63 {dimension_numbers = #tpu.dot_dimension_numbers<[1], [0], [0], [1], [0, 0, 1, 1], [], []>} : vector<2x32xf32>, vector<32x96xf32>, vector<2x96xf32> -> vector<2x96xf32>
    %182 = vector.broadcast %9 : vector<1x96xf32> to vector<2x96xf32>
    %183 = arith.addf %181, %182 : vector<2x96xf32>
    %184 = vector.extract_strided_slice %180 {offsets = [0, 0], sizes = [2, 32], strides = [1, 1]} : vector<2x96xf32> to vector<2x32xf32>
    %185 = vector.extract_strided_slice %183 {offsets = [0, 0], sizes = [2, 32], strides = [1, 1]} : vector<2x96xf32> to vector<2x32xf32>
    %186 = arith.addf %184, %185 : vector<2x32xf32>
    %187 = arith.negf %186 : vector<2x32xf32>
    %188 = math.exp %187 : vector<2x32xf32>
    %cst_64 = arith.constant 1.000000e+00 : f32
    %189 = vector.broadcast %cst_64 : f32 to vector<2x32xf32>
    %190 = arith.addf %189, %188 : vector<2x32xf32>
    %191 = arith.divf %189, %190 : vector<2x32xf32>
    %192 = vector.extract_strided_slice %180 {offsets = [0, 32], sizes = [2, 32], strides = [1, 1]} : vector<2x96xf32> to vector<2x32xf32>
    %193 = vector.extract_strided_slice %183 {offsets = [0, 32], sizes = [2, 32], strides = [1, 1]} : vector<2x96xf32> to vector<2x32xf32>
    %194 = arith.addf %192, %193 : vector<2x32xf32>
    %195 = arith.negf %194 : vector<2x32xf32>
    %196 = math.exp %195 : vector<2x32xf32>
    %cst_65 = arith.constant 1.000000e+00 : f32
    %197 = vector.broadcast %cst_65 : f32 to vector<2x32xf32>
    %198 = arith.addf %197, %196 : vector<2x32xf32>
    %199 = arith.divf %197, %198 : vector<2x32xf32>
    %200 = vector.extract_strided_slice %180 {offsets = [0, 64], sizes = [2, 32], strides = [1, 1]} : vector<2x96xf32> to vector<2x32xf32>
    %201 = vector.extract_strided_slice %183 {offsets = [0, 64], sizes = [2, 32], strides = [1, 1]} : vector<2x96xf32> to vector<2x32xf32>
    %202 = arith.mulf %191, %201 : vector<2x32xf32>
    %203 = arith.addf %200, %202 : vector<2x32xf32>
    %204 = math.tanh %203 : vector<2x32xf32>
    %cst_66 = arith.constant 1.000000e+00 : f32
    %205 = vector.broadcast %cst_66 : f32 to vector<2x32xf32>
    %206 = arith.subf %205, %199 : vector<2x32xf32>
    %207 = arith.mulf %206, %204 : vector<2x32xf32>
    %208 = arith.mulf %199, %130 : vector<2x32xf32>
    %209 = arith.addf %207, %208 : vector<2x32xf32>
    %cst_67 = arith.constant dense<0.000000e+00> : vector<2x96xf32>
    %210 = tpu.matmul %177, %4, %cst_67 {dimension_numbers = #tpu.dot_dimension_numbers<[1], [0], [0], [1], [0, 0, 1, 1], [], []>} : vector<2x32xf32>, vector<32x96xf32>, vector<2x96xf32> -> vector<2x96xf32>
    %211 = vector.broadcast %6 : vector<1x96xf32> to vector<2x96xf32>
    %212 = arith.addf %210, %211 : vector<2x96xf32>
    %cst_68 = arith.constant dense<0.000000e+00> : vector<2x96xf32>
    %213 = tpu.matmul %162, %8, %cst_68 {dimension_numbers = #tpu.dot_dimension_numbers<[1], [0], [0], [1], [0, 0, 1, 1], [], []>} : vector<2x32xf32>, vector<32x96xf32>, vector<2x96xf32> -> vector<2x96xf32>
    %214 = vector.broadcast %10 : vector<1x96xf32> to vector<2x96xf32>
    %215 = arith.addf %213, %214 : vector<2x96xf32>
    %216 = vector.extract_strided_slice %212 {offsets = [0, 0], sizes = [2, 32], strides = [1, 1]} : vector<2x96xf32> to vector<2x32xf32>
    %217 = vector.extract_strided_slice %215 {offsets = [0, 0], sizes = [2, 32], strides = [1, 1]} : vector<2x96xf32> to vector<2x32xf32>
    %218 = arith.addf %216, %217 : vector<2x32xf32>
    %219 = arith.negf %218 : vector<2x32xf32>
    %220 = math.exp %219 : vector<2x32xf32>
    %cst_69 = arith.constant 1.000000e+00 : f32
    %221 = vector.broadcast %cst_69 : f32 to vector<2x32xf32>
    %222 = arith.addf %221, %220 : vector<2x32xf32>
    %223 = arith.divf %221, %222 : vector<2x32xf32>
    %224 = vector.extract_strided_slice %212 {offsets = [0, 32], sizes = [2, 32], strides = [1, 1]} : vector<2x96xf32> to vector<2x32xf32>
    %225 = vector.extract_strided_slice %215 {offsets = [0, 32], sizes = [2, 32], strides = [1, 1]} : vector<2x96xf32> to vector<2x32xf32>
    %226 = arith.addf %224, %225 : vector<2x32xf32>
    %227 = arith.negf %226 : vector<2x32xf32>
    %228 = math.exp %227 : vector<2x32xf32>
    %cst_70 = arith.constant 1.000000e+00 : f32
    %229 = vector.broadcast %cst_70 : f32 to vector<2x32xf32>
    %230 = arith.addf %229, %228 : vector<2x32xf32>
    %231 = arith.divf %229, %230 : vector<2x32xf32>
    %232 = vector.extract_strided_slice %212 {offsets = [0, 64], sizes = [2, 32], strides = [1, 1]} : vector<2x96xf32> to vector<2x32xf32>
    %233 = vector.extract_strided_slice %215 {offsets = [0, 64], sizes = [2, 32], strides = [1, 1]} : vector<2x96xf32> to vector<2x32xf32>
    %234 = arith.mulf %223, %233 : vector<2x32xf32>
    %235 = arith.addf %232, %234 : vector<2x32xf32>
    %236 = math.tanh %235 : vector<2x32xf32>
    %cst_71 = arith.constant 1.000000e+00 : f32
    %237 = vector.broadcast %cst_71 : f32 to vector<2x32xf32>
    %238 = arith.subf %237, %231 : vector<2x32xf32>
    %239 = arith.mulf %238, %236 : vector<2x32xf32>
    %240 = arith.mulf %231, %162 : vector<2x32xf32>
    %241 = arith.addf %239, %240 : vector<2x32xf32>
    %242 = arith.index_cast %c2_i32 : i32 to index
    %c0_72 = arith.constant 0 : index
    %c0_73 = arith.constant 0 : index
    %243 = vector.load %arg11[%242, %c0_72, %c0_73] : memref<8x2x32xf32, #tpu.memory_space<vmem>>, vector<1x2x32xf32>
    %244 = vector.shape_cast %243 : vector<1x2x32xf32> to vector<2x32xf32>
    %245 = vector.shape_cast %209 : vector<2x32xf32> to vector<1x2x32xf32>
    tpu.vector_store %arg11[%242, %c0_72, %c0_73], %245 {strides = array<i32>} : memref<8x2x32xf32, #tpu.memory_space<vmem>>, vector<1x2x32xf32>,
    %246 = arith.index_cast %171 : i32 to index
    %c0_74 = arith.constant 0 : index
    %c0_75 = arith.constant 0 : index
    %247 = vector.load %arg12[%246, %c0_74, %c0_75] : memref<8x2x32xf32, #tpu.memory_space<vmem>>, vector<1x2x32xf32>
    %248 = vector.shape_cast %247 : vector<1x2x32xf32> to vector<2x32xf32>
    %249 = vector.shape_cast %241 : vector<2x32xf32> to vector<1x2x32xf32>
    tpu.vector_store %arg12[%246, %c0_74, %c0_75], %249 {strides = array<i32>} : memref<8x2x32xf32, #tpu.memory_space<vmem>>, vector<1x2x32xf32>,
    %c3_i32 = arith.constant 3 : i32
    %c7_i32_76 = arith.constant 7 : i32
    %250 = arith.subi %c7_i32_76, %c3_i32 : i32
    %251 = arith.index_cast %c3_i32 : i32 to index
    %c0_77 = arith.constant 0 : index
    %c0_78 = arith.constant 0 : index
    %252 = vector.load %arg1[%251, %c0_77, %c0_78] : memref<8x2x32xf32, #tpu.memory_space<vmem>>, vector<1x2x32xf32>
    %253 = vector.shape_cast %252 : vector<1x2x32xf32> to vector<2x32xf32>
    %254 = arith.index_cast %250 : i32 to index
    %c0_79 = arith.constant 0 : index
    %c0_80 = arith.constant 0 : index
    %255 = vector.load %arg2[%254, %c0_79, %c0_80] : memref<8x2x32xf32, #tpu.memory_space<vmem>>, vector<1x2x32xf32>
    %256 = vector.shape_cast %255 : vector<1x2x32xf32> to vector<2x32xf32>
    %cst_81 = arith.constant dense<0.000000e+00> : vector<2x96xf32>
    %257 = tpu.matmul %253, %3, %cst_81 {dimension_numbers = #tpu.dot_dimension_numbers<[1], [0], [0], [1], [0, 0, 1, 1], [], []>} : vector<2x32xf32>, vector<32x96xf32>, vector<2x96xf32> -> vector<2x96xf32>
    %258 = vector.broadcast %5 : vector<1x96xf32> to vector<2x96xf32>
    %259 = arith.addf %257, %258 : vector<2x96xf32>
    %cst_82 = arith.constant dense<0.000000e+00> : vector<2x96xf32>
    %260 = tpu.matmul %209, %7, %cst_82 {dimension_numbers = #tpu.dot_dimension_numbers<[1], [0], [0], [1], [0, 0, 1, 1], [], []>} : vector<2x32xf32>, vector<32x96xf32>, vector<2x96xf32> -> vector<2x96xf32>
    %261 = vector.broadcast %9 : vector<1x96xf32> to vector<2x96xf32>
    %262 = arith.addf %260, %261 : vector<2x96xf32>
    %263 = vector.extract_strided_slice %259 {offsets = [0, 0], sizes = [2, 32], strides = [1, 1]} : vector<2x96xf32> to vector<2x32xf32>
    %264 = vector.extract_strided_slice %262 {offsets = [0, 0], sizes = [2, 32], strides = [1, 1]} : vector<2x96xf32> to vector<2x32xf32>
    %265 = arith.addf %263, %264 : vector<2x32xf32>
    %266 = arith.negf %265 : vector<2x32xf32>
    %267 = math.exp %266 : vector<2x32xf32>
    %cst_83 = arith.constant 1.000000e+00 : f32
    %268 = vector.broadcast %cst_83 : f32 to vector<2x32xf32>
    %269 = arith.addf %268, %267 : vector<2x32xf32>
    %270 = arith.divf %268, %269 : vector<2x32xf32>
    %271 = vector.extract_strided_slice %259 {offsets = [0, 32], sizes = [2, 32], strides = [1, 1]} : vector<2x96xf32> to vector<2x32xf32>
    %272 = vector.extract_strided_slice %262 {offsets = [0, 32], sizes = [2, 32], strides = [1, 1]} : vector<2x96xf32> to vector<2x32xf32>
    %273 = arith.addf %271, %272 : vector<2x32xf32>
    %274 = arith.negf %273 : vector<2x32xf32>
    %275 = math.exp %274 : vector<2x32xf32>
    %cst_84 = arith.constant 1.000000e+00 : f32
    %276 = vector.broadcast %cst_84 : f32 to vector<2x32xf32>
    %277 = arith.addf %276, %275 : vector<2x32xf32>
    %278 = arith.divf %276, %277 : vector<2x32xf32>
    %279 = vector.extract_strided_slice %259 {offsets = [0, 64], sizes = [2, 32], strides = [1, 1]} : vector<2x96xf32> to vector<2x32xf32>
    %280 = vector.extract_strided_slice %262 {offsets = [0, 64], sizes = [2, 32], strides = [1, 1]} : vector<2x96xf32> to vector<2x32xf32>
    %281 = arith.mulf %270, %280 : vector<2x32xf32>
    %282 = arith.addf %279, %281 : vector<2x32xf32>
    %283 = math.tanh %282 : vector<2x32xf32>
    %cst_85 = arith.constant 1.000000e+00 : f32
    %284 = vector.broadcast %cst_85 : f32 to vector<2x32xf32>
    %285 = arith.subf %284, %278 : vector<2x32xf32>
    %286 = arith.mulf %285, %283 : vector<2x32xf32>
    %287 = arith.mulf %278, %209 : vector<2x32xf32>
    %288 = arith.addf %286, %287 : vector<2x32xf32>
    %cst_86 = arith.constant dense<0.000000e+00> : vector<2x96xf32>
    %289 = tpu.matmul %256, %4, %cst_86 {dimension_numbers = #tpu.dot_dimension_numbers<[1], [0], [0], [1], [0, 0, 1, 1], [], []>} : vector<2x32xf32>, vector<32x96xf32>, vector<2x96xf32> -> vector<2x96xf32>
    %290 = vector.broadcast %6 : vector<1x96xf32> to vector<2x96xf32>
    %291 = arith.addf %289, %290 : vector<2x96xf32>
    %cst_87 = arith.constant dense<0.000000e+00> : vector<2x96xf32>
    %292 = tpu.matmul %241, %8, %cst_87 {dimension_numbers = #tpu.dot_dimension_numbers<[1], [0], [0], [1], [0, 0, 1, 1], [], []>} : vector<2x32xf32>, vector<32x96xf32>, vector<2x96xf32> -> vector<2x96xf32>
    %293 = vector.broadcast %10 : vector<1x96xf32> to vector<2x96xf32>
    %294 = arith.addf %292, %293 : vector<2x96xf32>
    %295 = vector.extract_strided_slice %291 {offsets = [0, 0], sizes = [2, 32], strides = [1, 1]} : vector<2x96xf32> to vector<2x32xf32>
    %296 = vector.extract_strided_slice %294 {offsets = [0, 0], sizes = [2, 32], strides = [1, 1]} : vector<2x96xf32> to vector<2x32xf32>
    %297 = arith.addf %295, %296 : vector<2x32xf32>
    %298 = arith.negf %297 : vector<2x32xf32>
    %299 = math.exp %298 : vector<2x32xf32>
    %cst_88 = arith.constant 1.000000e+00 : f32
    %300 = vector.broadcast %cst_88 : f32 to vector<2x32xf32>
    %301 = arith.addf %300, %299 : vector<2x32xf32>
    %302 = arith.divf %300, %301 : vector<2x32xf32>
    %303 = vector.extract_strided_slice %291 {offsets = [0, 32], sizes = [2, 32], strides = [1, 1]} : vector<2x96xf32> to vector<2x32xf32>
    %304 = vector.extract_strided_slice %294 {offsets = [0, 32], sizes = [2, 32], strides = [1, 1]} : vector<2x96xf32> to vector<2x32xf32>
    %305 = arith.addf %303, %304 : vector<2x32xf32>
    %306 = arith.negf %305 : vector<2x32xf32>
    %307 = math.exp %306 : vector<2x32xf32>
    %cst_89 = arith.constant 1.000000e+00 : f32
    %308 = vector.broadcast %cst_89 : f32 to vector<2x32xf32>
    %309 = arith.addf %308, %307 : vector<2x32xf32>
    %310 = arith.divf %308, %309 : vector<2x32xf32>
    %311 = vector.extract_strided_slice %291 {offsets = [0, 64], sizes = [2, 32], strides = [1, 1]} : vector<2x96xf32> to vector<2x32xf32>
    %312 = vector.extract_strided_slice %294 {offsets = [0, 64], sizes = [2, 32], strides = [1, 1]} : vector<2x96xf32> to vector<2x32xf32>
    %313 = arith.mulf %302, %312 : vector<2x32xf32>
    %314 = arith.addf %311, %313 : vector<2x32xf32>
    %315 = math.tanh %314 : vector<2x32xf32>
    %cst_90 = arith.constant 1.000000e+00 : f32
    %316 = vector.broadcast %cst_90 : f32 to vector<2x32xf32>
    %317 = arith.subf %316, %310 : vector<2x32xf32>
    %318 = arith.mulf %317, %315 : vector<2x32xf32>
    %319 = arith.mulf %310, %241 : vector<2x32xf32>
    %320 = arith.addf %318, %319 : vector<2x32xf32>
    %321 = arith.index_cast %c3_i32 : i32 to index
    %c0_91 = arith.constant 0 : index
    %c0_92 = arith.constant 0 : index
    %322 = vector.load %arg11[%321, %c0_91, %c0_92] : memref<8x2x32xf32, #tpu.memory_space<vmem>>, vector<1x2x32xf32>
    %323 = vector.shape_cast %322 : vector<1x2x32xf32> to vector<2x32xf32>
    %324 = vector.shape_cast %288 : vector<2x32xf32> to vector<1x2x32xf32>
    tpu.vector_store %arg11[%321, %c0_91, %c0_92], %324 {strides = array<i32>} : memref<8x2x32xf32, #tpu.memory_space<vmem>>, vector<1x2x32xf32>,
    %325 = arith.index_cast %250 : i32 to index
    %c0_93 = arith.constant 0 : index
    %c0_94 = arith.constant 0 : index
    %326 = vector.load %arg12[%325, %c0_93, %c0_94] : memref<8x2x32xf32, #tpu.memory_space<vmem>>, vector<1x2x32xf32>
    %327 = vector.shape_cast %326 : vector<1x2x32xf32> to vector<2x32xf32>
    %328 = vector.shape_cast %320 : vector<2x32xf32> to vector<1x2x32xf32>
    tpu.vector_store %arg12[%325, %c0_93, %c0_94], %328 {strides = array<i32>} : memref<8x2x32xf32, #tpu.memory_space<vmem>>, vector<1x2x32xf32>,
    %c4_i32 = arith.constant 4 : i32
    %c7_i32_95 = arith.constant 7 : i32
    %329 = arith.subi %c7_i32_95, %c4_i32 : i32
    %330 = arith.index_cast %c4_i32 : i32 to index
    %c0_96 = arith.constant 0 : index
    %c0_97 = arith.constant 0 : index
    %331 = vector.load %arg1[%330, %c0_96, %c0_97] : memref<8x2x32xf32, #tpu.memory_space<vmem>>, vector<1x2x32xf32>
    %332 = vector.shape_cast %331 : vector<1x2x32xf32> to vector<2x32xf32>
    %333 = arith.index_cast %329 : i32 to index
    %c0_98 = arith.constant 0 : index
    %c0_99 = arith.constant 0 : index
    %334 = vector.load %arg2[%333, %c0_98, %c0_99] : memref<8x2x32xf32, #tpu.memory_space<vmem>>, vector<1x2x32xf32>
    %335 = vector.shape_cast %334 : vector<1x2x32xf32> to vector<2x32xf32>
    %cst_100 = arith.constant dense<0.000000e+00> : vector<2x96xf32>
    %336 = tpu.matmul %332, %3, %cst_100 {dimension_numbers = #tpu.dot_dimension_numbers<[1], [0], [0], [1], [0, 0, 1, 1], [], []>} : vector<2x32xf32>, vector<32x96xf32>, vector<2x96xf32> -> vector<2x96xf32>
    %337 = vector.broadcast %5 : vector<1x96xf32> to vector<2x96xf32>
    %338 = arith.addf %336, %337 : vector<2x96xf32>
    %cst_101 = arith.constant dense<0.000000e+00> : vector<2x96xf32>
    %339 = tpu.matmul %288, %7, %cst_101 {dimension_numbers = #tpu.dot_dimension_numbers<[1], [0], [0], [1], [0, 0, 1, 1], [], []>} : vector<2x32xf32>, vector<32x96xf32>, vector<2x96xf32> -> vector<2x96xf32>
    %340 = vector.broadcast %9 : vector<1x96xf32> to vector<2x96xf32>
    %341 = arith.addf %339, %340 : vector<2x96xf32>
    %342 = vector.extract_strided_slice %338 {offsets = [0, 0], sizes = [2, 32], strides = [1, 1]} : vector<2x96xf32> to vector<2x32xf32>
    %343 = vector.extract_strided_slice %341 {offsets = [0, 0], sizes = [2, 32], strides = [1, 1]} : vector<2x96xf32> to vector<2x32xf32>
    %344 = arith.addf %342, %343 : vector<2x32xf32>
    %345 = arith.negf %344 : vector<2x32xf32>
    %346 = math.exp %345 : vector<2x32xf32>
    %cst_102 = arith.constant 1.000000e+00 : f32
    %347 = vector.broadcast %cst_102 : f32 to vector<2x32xf32>
    %348 = arith.addf %347, %346 : vector<2x32xf32>
    %349 = arith.divf %347, %348 : vector<2x32xf32>
    %350 = vector.extract_strided_slice %338 {offsets = [0, 32], sizes = [2, 32], strides = [1, 1]} : vector<2x96xf32> to vector<2x32xf32>
    %351 = vector.extract_strided_slice %341 {offsets = [0, 32], sizes = [2, 32], strides = [1, 1]} : vector<2x96xf32> to vector<2x32xf32>
    %352 = arith.addf %350, %351 : vector<2x32xf32>
    %353 = arith.negf %352 : vector<2x32xf32>
    %354 = math.exp %353 : vector<2x32xf32>
    %cst_103 = arith.constant 1.000000e+00 : f32
    %355 = vector.broadcast %cst_103 : f32 to vector<2x32xf32>
    %356 = arith.addf %355, %354 : vector<2x32xf32>
    %357 = arith.divf %355, %356 : vector<2x32xf32>
    %358 = vector.extract_strided_slice %338 {offsets = [0, 64], sizes = [2, 32], strides = [1, 1]} : vector<2x96xf32> to vector<2x32xf32>
    %359 = vector.extract_strided_slice %341 {offsets = [0, 64], sizes = [2, 32], strides = [1, 1]} : vector<2x96xf32> to vector<2x32xf32>
    %360 = arith.mulf %349, %359 : vector<2x32xf32>
    %361 = arith.addf %358, %360 : vector<2x32xf32>
    %362 = math.tanh %361 : vector<2x32xf32>
    %cst_104 = arith.constant 1.000000e+00 : f32
    %363 = vector.broadcast %cst_104 : f32 to vector<2x32xf32>
    %364 = arith.subf %363, %357 : vector<2x32xf32>
    %365 = arith.mulf %364, %362 : vector<2x32xf32>
    %366 = arith.mulf %357, %288 : vector<2x32xf32>
    %367 = arith.addf %365, %366 : vector<2x32xf32>
    %cst_105 = arith.constant dense<0.000000e+00> : vector<2x96xf32>
    %368 = tpu.matmul %335, %4, %cst_105 {dimension_numbers = #tpu.dot_dimension_numbers<[1], [0], [0], [1], [0, 0, 1, 1], [], []>} : vector<2x32xf32>, vector<32x96xf32>, vector<2x96xf32> -> vector<2x96xf32>
    %369 = vector.broadcast %6 : vector<1x96xf32> to vector<2x96xf32>
    %370 = arith.addf %368, %369 : vector<2x96xf32>
    %cst_106 = arith.constant dense<0.000000e+00> : vector<2x96xf32>
    %371 = tpu.matmul %320, %8, %cst_106 {dimension_numbers = #tpu.dot_dimension_numbers<[1], [0], [0], [1], [0, 0, 1, 1], [], []>} : vector<2x32xf32>, vector<32x96xf32>, vector<2x96xf32> -> vector<2x96xf32>
    %372 = vector.broadcast %10 : vector<1x96xf32> to vector<2x96xf32>
    %373 = arith.addf %371, %372 : vector<2x96xf32>
    %374 = vector.extract_strided_slice %370 {offsets = [0, 0], sizes = [2, 32], strides = [1, 1]} : vector<2x96xf32> to vector<2x32xf32>
    %375 = vector.extract_strided_slice %373 {offsets = [0, 0], sizes = [2, 32], strides = [1, 1]} : vector<2x96xf32> to vector<2x32xf32>
    %376 = arith.addf %374, %375 : vector<2x32xf32>
    %377 = arith.negf %376 : vector<2x32xf32>
    %378 = math.exp %377 : vector<2x32xf32>
    %cst_107 = arith.constant 1.000000e+00 : f32
    %379 = vector.broadcast %cst_107 : f32 to vector<2x32xf32>
    %380 = arith.addf %379, %378 : vector<2x32xf32>
    %381 = arith.divf %379, %380 : vector<2x32xf32>
    %382 = vector.extract_strided_slice %370 {offsets = [0, 32], sizes = [2, 32], strides = [1, 1]} : vector<2x96xf32> to vector<2x32xf32>
    %383 = vector.extract_strided_slice %373 {offsets = [0, 32], sizes = [2, 32], strides = [1, 1]} : vector<2x96xf32> to vector<2x32xf32>
    %384 = arith.addf %382, %383 : vector<2x32xf32>
    %385 = arith.negf %384 : vector<2x32xf32>
    %386 = math.exp %385 : vector<2x32xf32>
    %cst_108 = arith.constant 1.000000e+00 : f32
    %387 = vector.broadcast %cst_108 : f32 to vector<2x32xf32>
    %388 = arith.addf %387, %386 : vector<2x32xf32>
    %389 = arith.divf %387, %388 : vector<2x32xf32>
    %390 = vector.extract_strided_slice %370 {offsets = [0, 64], sizes = [2, 32], strides = [1, 1]} : vector<2x96xf32> to vector<2x32xf32>
    %391 = vector.extract_strided_slice %373 {offsets = [0, 64], sizes = [2, 32], strides = [1, 1]} : vector<2x96xf32> to vector<2x32xf32>
    %392 = arith.mulf %381, %391 : vector<2x32xf32>
    %393 = arith.addf %390, %392 : vector<2x32xf32>
    %394 = math.tanh %393 : vector<2x32xf32>
    %cst_109 = arith.constant 1.000000e+00 : f32
    %395 = vector.broadcast %cst_109 : f32 to vector<2x32xf32>
    %396 = arith.subf %395, %389 : vector<2x32xf32>
    %397 = arith.mulf %396, %394 : vector<2x32xf32>
    %398 = arith.mulf %389, %320 : vector<2x32xf32>
    %399 = arith.addf %397, %398 : vector<2x32xf32>
    %400 = arith.index_cast %c4_i32 : i32 to index
    %c0_110 = arith.constant 0 : index
    %c0_111 = arith.constant 0 : index
    %401 = vector.load %arg11[%400, %c0_110, %c0_111] : memref<8x2x32xf32, #tpu.memory_space<vmem>>, vector<1x2x32xf32>
    %402 = vector.shape_cast %401 : vector<1x2x32xf32> to vector<2x32xf32>
    %403 = vector.shape_cast %367 : vector<2x32xf32> to vector<1x2x32xf32>
    tpu.vector_store %arg11[%400, %c0_110, %c0_111], %403 {strides = array<i32>} : memref<8x2x32xf32, #tpu.memory_space<vmem>>, vector<1x2x32xf32>,
    %404 = arith.index_cast %329 : i32 to index
    %c0_112 = arith.constant 0 : index
    %c0_113 = arith.constant 0 : index
    %405 = vector.load %arg12[%404, %c0_112, %c0_113] : memref<8x2x32xf32, #tpu.memory_space<vmem>>, vector<1x2x32xf32>
    %406 = vector.shape_cast %405 : vector<1x2x32xf32> to vector<2x32xf32>
    %407 = vector.shape_cast %399 : vector<2x32xf32> to vector<1x2x32xf32>
    tpu.vector_store %arg12[%404, %c0_112, %c0_113], %407 {strides = array<i32>} : memref<8x2x32xf32, #tpu.memory_space<vmem>>, vector<1x2x32xf32>,
    %c5_i32 = arith.constant 5 : i32
    %c7_i32_114 = arith.constant 7 : i32
    %408 = arith.subi %c7_i32_114, %c5_i32 : i32
    %409 = arith.index_cast %c5_i32 : i32 to index
    %c0_115 = arith.constant 0 : index
    %c0_116 = arith.constant 0 : index
    %410 = vector.load %arg1[%409, %c0_115, %c0_116] : memref<8x2x32xf32, #tpu.memory_space<vmem>>, vector<1x2x32xf32>
    %411 = vector.shape_cast %410 : vector<1x2x32xf32> to vector<2x32xf32>
    %412 = arith.index_cast %408 : i32 to index
    %c0_117 = arith.constant 0 : index
    %c0_118 = arith.constant 0 : index
    %413 = vector.load %arg2[%412, %c0_117, %c0_118] : memref<8x2x32xf32, #tpu.memory_space<vmem>>, vector<1x2x32xf32>
    %414 = vector.shape_cast %413 : vector<1x2x32xf32> to vector<2x32xf32>
    %cst_119 = arith.constant dense<0.000000e+00> : vector<2x96xf32>
    %415 = tpu.matmul %411, %3, %cst_119 {dimension_numbers = #tpu.dot_dimension_numbers<[1], [0], [0], [1], [0, 0, 1, 1], [], []>} : vector<2x32xf32>, vector<32x96xf32>, vector<2x96xf32> -> vector<2x96xf32>
    %416 = vector.broadcast %5 : vector<1x96xf32> to vector<2x96xf32>
    %417 = arith.addf %415, %416 : vector<2x96xf32>
    %cst_120 = arith.constant dense<0.000000e+00> : vector<2x96xf32>
    %418 = tpu.matmul %367, %7, %cst_120 {dimension_numbers = #tpu.dot_dimension_numbers<[1], [0], [0], [1], [0, 0, 1, 1], [], []>} : vector<2x32xf32>, vector<32x96xf32>, vector<2x96xf32> -> vector<2x96xf32>
    %419 = vector.broadcast %9 : vector<1x96xf32> to vector<2x96xf32>
    %420 = arith.addf %418, %419 : vector<2x96xf32>
    %421 = vector.extract_strided_slice %417 {offsets = [0, 0], sizes = [2, 32], strides = [1, 1]} : vector<2x96xf32> to vector<2x32xf32>
    %422 = vector.extract_strided_slice %420 {offsets = [0, 0], sizes = [2, 32], strides = [1, 1]} : vector<2x96xf32> to vector<2x32xf32>
    %423 = arith.addf %421, %422 : vector<2x32xf32>
    %424 = arith.negf %423 : vector<2x32xf32>
    %425 = math.exp %424 : vector<2x32xf32>
    %cst_121 = arith.constant 1.000000e+00 : f32
    %426 = vector.broadcast %cst_121 : f32 to vector<2x32xf32>
    %427 = arith.addf %426, %425 : vector<2x32xf32>
    %428 = arith.divf %426, %427 : vector<2x32xf32>
    %429 = vector.extract_strided_slice %417 {offsets = [0, 32], sizes = [2, 32], strides = [1, 1]} : vector<2x96xf32> to vector<2x32xf32>
    %430 = vector.extract_strided_slice %420 {offsets = [0, 32], sizes = [2, 32], strides = [1, 1]} : vector<2x96xf32> to vector<2x32xf32>
    %431 = arith.addf %429, %430 : vector<2x32xf32>
    %432 = arith.negf %431 : vector<2x32xf32>
    %433 = math.exp %432 : vector<2x32xf32>
    %cst_122 = arith.constant 1.000000e+00 : f32
    %434 = vector.broadcast %cst_122 : f32 to vector<2x32xf32>
    %435 = arith.addf %434, %433 : vector<2x32xf32>
    %436 = arith.divf %434, %435 : vector<2x32xf32>
    %437 = vector.extract_strided_slice %417 {offsets = [0, 64], sizes = [2, 32], strides = [1, 1]} : vector<2x96xf32> to vector<2x32xf32>
    %438 = vector.extract_strided_slice %420 {offsets = [0, 64], sizes = [2, 32], strides = [1, 1]} : vector<2x96xf32> to vector<2x32xf32>
    %439 = arith.mulf %428, %438 : vector<2x32xf32>
    %440 = arith.addf %437, %439 : vector<2x32xf32>
    %441 = math.tanh %440 : vector<2x32xf32>
    %cst_123 = arith.constant 1.000000e+00 : f32
    %442 = vector.broadcast %cst_123 : f32 to vector<2x32xf32>
    %443 = arith.subf %442, %436 : vector<2x32xf32>
    %444 = arith.mulf %443, %441 : vector<2x32xf32>
    %445 = arith.mulf %436, %367 : vector<2x32xf32>
    %446 = arith.addf %444, %445 : vector<2x32xf32>
    %cst_124 = arith.constant dense<0.000000e+00> : vector<2x96xf32>
    %447 = tpu.matmul %414, %4, %cst_124 {dimension_numbers = #tpu.dot_dimension_numbers<[1], [0], [0], [1], [0, 0, 1, 1], [], []>} : vector<2x32xf32>, vector<32x96xf32>, vector<2x96xf32> -> vector<2x96xf32>
    %448 = vector.broadcast %6 : vector<1x96xf32> to vector<2x96xf32>
    %449 = arith.addf %447, %448 : vector<2x96xf32>
    %cst_125 = arith.constant dense<0.000000e+00> : vector<2x96xf32>
    %450 = tpu.matmul %399, %8, %cst_125 {dimension_numbers = #tpu.dot_dimension_numbers<[1], [0], [0], [1], [0, 0, 1, 1], [], []>} : vector<2x32xf32>, vector<32x96xf32>, vector<2x96xf32> -> vector<2x96xf32>
    %451 = vector.broadcast %10 : vector<1x96xf32> to vector<2x96xf32>
    %452 = arith.addf %450, %451 : vector<2x96xf32>
    %453 = vector.extract_strided_slice %449 {offsets = [0, 0], sizes = [2, 32], strides = [1, 1]} : vector<2x96xf32> to vector<2x32xf32>
    %454 = vector.extract_strided_slice %452 {offsets = [0, 0], sizes = [2, 32], strides = [1, 1]} : vector<2x96xf32> to vector<2x32xf32>
    %455 = arith.addf %453, %454 : vector<2x32xf32>
    %456 = arith.negf %455 : vector<2x32xf32>
    %457 = math.exp %456 : vector<2x32xf32>
    %cst_126 = arith.constant 1.000000e+00 : f32
    %458 = vector.broadcast %cst_126 : f32 to vector<2x32xf32>
    %459 = arith.addf %458, %457 : vector<2x32xf32>
    %460 = arith.divf %458, %459 : vector<2x32xf32>
    %461 = vector.extract_strided_slice %449 {offsets = [0, 32], sizes = [2, 32], strides = [1, 1]} : vector<2x96xf32> to vector<2x32xf32>
    %462 = vector.extract_strided_slice %452 {offsets = [0, 32], sizes = [2, 32], strides = [1, 1]} : vector<2x96xf32> to vector<2x32xf32>
    %463 = arith.addf %461, %462 : vector<2x32xf32>
    %464 = arith.negf %463 : vector<2x32xf32>
    %465 = math.exp %464 : vector<2x32xf32>
    %cst_127 = arith.constant 1.000000e+00 : f32
    %466 = vector.broadcast %cst_127 : f32 to vector<2x32xf32>
    %467 = arith.addf %466, %465 : vector<2x32xf32>
    %468 = arith.divf %466, %467 : vector<2x32xf32>
    %469 = vector.extract_strided_slice %449 {offsets = [0, 64], sizes = [2, 32], strides = [1, 1]} : vector<2x96xf32> to vector<2x32xf32>
    %470 = vector.extract_strided_slice %452 {offsets = [0, 64], sizes = [2, 32], strides = [1, 1]} : vector<2x96xf32> to vector<2x32xf32>
    %471 = arith.mulf %460, %470 : vector<2x32xf32>
    %472 = arith.addf %469, %471 : vector<2x32xf32>
    %473 = math.tanh %472 : vector<2x32xf32>
    %cst_128 = arith.constant 1.000000e+00 : f32
    %474 = vector.broadcast %cst_128 : f32 to vector<2x32xf32>
    %475 = arith.subf %474, %468 : vector<2x32xf32>
    %476 = arith.mulf %475, %473 : vector<2x32xf32>
    %477 = arith.mulf %468, %399 : vector<2x32xf32>
    %478 = arith.addf %476, %477 : vector<2x32xf32>
    %479 = arith.index_cast %c5_i32 : i32 to index
    %c0_129 = arith.constant 0 : index
    %c0_130 = arith.constant 0 : index
    %480 = vector.load %arg11[%479, %c0_129, %c0_130] : memref<8x2x32xf32, #tpu.memory_space<vmem>>, vector<1x2x32xf32>
    %481 = vector.shape_cast %480 : vector<1x2x32xf32> to vector<2x32xf32>
    %482 = vector.shape_cast %446 : vector<2x32xf32> to vector<1x2x32xf32>
    tpu.vector_store %arg11[%479, %c0_129, %c0_130], %482 {strides = array<i32>} : memref<8x2x32xf32, #tpu.memory_space<vmem>>, vector<1x2x32xf32>,
    %483 = arith.index_cast %408 : i32 to index
    %c0_131 = arith.constant 0 : index
    %c0_132 = arith.constant 0 : index
    %484 = vector.load %arg12[%483, %c0_131, %c0_132] : memref<8x2x32xf32, #tpu.memory_space<vmem>>, vector<1x2x32xf32>
    %485 = vector.shape_cast %484 : vector<1x2x32xf32> to vector<2x32xf32>
    %486 = vector.shape_cast %478 : vector<2x32xf32> to vector<1x2x32xf32>
    tpu.vector_store %arg12[%483, %c0_131, %c0_132], %486 {strides = array<i32>} : memref<8x2x32xf32, #tpu.memory_space<vmem>>, vector<1x2x32xf32>,
    %c6_i32 = arith.constant 6 : i32
    %c7_i32_133 = arith.constant 7 : i32
    %487 = arith.subi %c7_i32_133, %c6_i32 : i32
    %488 = arith.index_cast %c6_i32 : i32 to index
    %c0_134 = arith.constant 0 : index
    %c0_135 = arith.constant 0 : index
    %489 = vector.load %arg1[%488, %c0_134, %c0_135] : memref<8x2x32xf32, #tpu.memory_space<vmem>>, vector<1x2x32xf32>
    %490 = vector.shape_cast %489 : vector<1x2x32xf32> to vector<2x32xf32>
    %491 = arith.index_cast %487 : i32 to index
    %c0_136 = arith.constant 0 : index
    %c0_137 = arith.constant 0 : index
    %492 = vector.load %arg2[%491, %c0_136, %c0_137] : memref<8x2x32xf32, #tpu.memory_space<vmem>>, vector<1x2x32xf32>
    %493 = vector.shape_cast %492 : vector<1x2x32xf32> to vector<2x32xf32>
    %cst_138 = arith.constant dense<0.000000e+00> : vector<2x96xf32>
    %494 = tpu.matmul %490, %3, %cst_138 {dimension_numbers = #tpu.dot_dimension_numbers<[1], [0], [0], [1], [0, 0, 1, 1], [], []>} : vector<2x32xf32>, vector<32x96xf32>, vector<2x96xf32> -> vector<2x96xf32>
    %495 = vector.broadcast %5 : vector<1x96xf32> to vector<2x96xf32>
    %496 = arith.addf %494, %495 : vector<2x96xf32>
    %cst_139 = arith.constant dense<0.000000e+00> : vector<2x96xf32>
    %497 = tpu.matmul %446, %7, %cst_139 {dimension_numbers = #tpu.dot_dimension_numbers<[1], [0], [0], [1], [0, 0, 1, 1], [], []>} : vector<2x32xf32>, vector<32x96xf32>, vector<2x96xf32> -> vector<2x96xf32>
    %498 = vector.broadcast %9 : vector<1x96xf32> to vector<2x96xf32>
    %499 = arith.addf %497, %498 : vector<2x96xf32>
    %500 = vector.extract_strided_slice %496 {offsets = [0, 0], sizes = [2, 32], strides = [1, 1]} : vector<2x96xf32> to vector<2x32xf32>
    %501 = vector.extract_strided_slice %499 {offsets = [0, 0], sizes = [2, 32], strides = [1, 1]} : vector<2x96xf32> to vector<2x32xf32>
    %502 = arith.addf %500, %501 : vector<2x32xf32>
    %503 = arith.negf %502 : vector<2x32xf32>
    %504 = math.exp %503 : vector<2x32xf32>
    %cst_140 = arith.constant 1.000000e+00 : f32
    %505 = vector.broadcast %cst_140 : f32 to vector<2x32xf32>
    %506 = arith.addf %505, %504 : vector<2x32xf32>
    %507 = arith.divf %505, %506 : vector<2x32xf32>
    %508 = vector.extract_strided_slice %496 {offsets = [0, 32], sizes = [2, 32], strides = [1, 1]} : vector<2x96xf32> to vector<2x32xf32>
    %509 = vector.extract_strided_slice %499 {offsets = [0, 32], sizes = [2, 32], strides = [1, 1]} : vector<2x96xf32> to vector<2x32xf32>
    %510 = arith.addf %508, %509 : vector<2x32xf32>
    %511 = arith.negf %510 : vector<2x32xf32>
    %512 = math.exp %511 : vector<2x32xf32>
    %cst_141 = arith.constant 1.000000e+00 : f32
    %513 = vector.broadcast %cst_141 : f32 to vector<2x32xf32>
    %514 = arith.addf %513, %512 : vector<2x32xf32>
    %515 = arith.divf %513, %514 : vector<2x32xf32>
    %516 = vector.extract_strided_slice %496 {offsets = [0, 64], sizes = [2, 32], strides = [1, 1]} : vector<2x96xf32> to vector<2x32xf32>
    %517 = vector.extract_strided_slice %499 {offsets = [0, 64], sizes = [2, 32], strides = [1, 1]} : vector<2x96xf32> to vector<2x32xf32>
    %518 = arith.mulf %507, %517 : vector<2x32xf32>
    %519 = arith.addf %516, %518 : vector<2x32xf32>
    %520 = math.tanh %519 : vector<2x32xf32>
    %cst_142 = arith.constant 1.000000e+00 : f32
    %521 = vector.broadcast %cst_142 : f32 to vector<2x32xf32>
    %522 = arith.subf %521, %515 : vector<2x32xf32>
    %523 = arith.mulf %522, %520 : vector<2x32xf32>
    %524 = arith.mulf %515, %446 : vector<2x32xf32>
    %525 = arith.addf %523, %524 : vector<2x32xf32>
    %cst_143 = arith.constant dense<0.000000e+00> : vector<2x96xf32>
    %526 = tpu.matmul %493, %4, %cst_143 {dimension_numbers = #tpu.dot_dimension_numbers<[1], [0], [0], [1], [0, 0, 1, 1], [], []>} : vector<2x32xf32>, vector<32x96xf32>, vector<2x96xf32> -> vector<2x96xf32>
    %527 = vector.broadcast %6 : vector<1x96xf32> to vector<2x96xf32>
    %528 = arith.addf %526, %527 : vector<2x96xf32>
    %cst_144 = arith.constant dense<0.000000e+00> : vector<2x96xf32>
    %529 = tpu.matmul %478, %8, %cst_144 {dimension_numbers = #tpu.dot_dimension_numbers<[1], [0], [0], [1], [0, 0, 1, 1], [], []>} : vector<2x32xf32>, vector<32x96xf32>, vector<2x96xf32> -> vector<2x96xf32>
    %530 = vector.broadcast %10 : vector<1x96xf32> to vector<2x96xf32>
    %531 = arith.addf %529, %530 : vector<2x96xf32>
    %532 = vector.extract_strided_slice %528 {offsets = [0, 0], sizes = [2, 32], strides = [1, 1]} : vector<2x96xf32> to vector<2x32xf32>
    %533 = vector.extract_strided_slice %531 {offsets = [0, 0], sizes = [2, 32], strides = [1, 1]} : vector<2x96xf32> to vector<2x32xf32>
    %534 = arith.addf %532, %533 : vector<2x32xf32>
    %535 = arith.negf %534 : vector<2x32xf32>
    %536 = math.exp %535 : vector<2x32xf32>
    %cst_145 = arith.constant 1.000000e+00 : f32
    %537 = vector.broadcast %cst_145 : f32 to vector<2x32xf32>
    %538 = arith.addf %537, %536 : vector<2x32xf32>
    %539 = arith.divf %537, %538 : vector<2x32xf32>
    %540 = vector.extract_strided_slice %528 {offsets = [0, 32], sizes = [2, 32], strides = [1, 1]} : vector<2x96xf32> to vector<2x32xf32>
    %541 = vector.extract_strided_slice %531 {offsets = [0, 32], sizes = [2, 32], strides = [1, 1]} : vector<2x96xf32> to vector<2x32xf32>
    %542 = arith.addf %540, %541 : vector<2x32xf32>
    %543 = arith.negf %542 : vector<2x32xf32>
    %544 = math.exp %543 : vector<2x32xf32>
    %cst_146 = arith.constant 1.000000e+00 : f32
    %545 = vector.broadcast %cst_146 : f32 to vector<2x32xf32>
    %546 = arith.addf %545, %544 : vector<2x32xf32>
    %547 = arith.divf %545, %546 : vector<2x32xf32>
    %548 = vector.extract_strided_slice %528 {offsets = [0, 64], sizes = [2, 32], strides = [1, 1]} : vector<2x96xf32> to vector<2x32xf32>
    %549 = vector.extract_strided_slice %531 {offsets = [0, 64], sizes = [2, 32], strides = [1, 1]} : vector<2x96xf32> to vector<2x32xf32>
    %550 = arith.mulf %539, %549 : vector<2x32xf32>
    %551 = arith.addf %548, %550 : vector<2x32xf32>
    %552 = math.tanh %551 : vector<2x32xf32>
    %cst_147 = arith.constant 1.000000e+00 : f32
    %553 = vector.broadcast %cst_147 : f32 to vector<2x32xf32>
    %554 = arith.subf %553, %547 : vector<2x32xf32>
    %555 = arith.mulf %554, %552 : vector<2x32xf32>
    %556 = arith.mulf %547, %478 : vector<2x32xf32>
    %557 = arith.addf %555, %556 : vector<2x32xf32>
    %558 = arith.index_cast %c6_i32 : i32 to index
    %c0_148 = arith.constant 0 : index
    %c0_149 = arith.constant 0 : index
    %559 = vector.load %arg11[%558, %c0_148, %c0_149] : memref<8x2x32xf32, #tpu.memory_space<vmem>>, vector<1x2x32xf32>
    %560 = vector.shape_cast %559 : vector<1x2x32xf32> to vector<2x32xf32>
    %561 = vector.shape_cast %525 : vector<2x32xf32> to vector<1x2x32xf32>
    tpu.vector_store %arg11[%558, %c0_148, %c0_149], %561 {strides = array<i32>} : memref<8x2x32xf32, #tpu.memory_space<vmem>>, vector<1x2x32xf32>,
    %562 = arith.index_cast %487 : i32 to index
    %c0_150 = arith.constant 0 : index
    %c0_151 = arith.constant 0 : index
    %563 = vector.load %arg12[%562, %c0_150, %c0_151] : memref<8x2x32xf32, #tpu.memory_space<vmem>>, vector<1x2x32xf32>
    %564 = vector.shape_cast %563 : vector<1x2x32xf32> to vector<2x32xf32>
    %565 = vector.shape_cast %557 : vector<2x32xf32> to vector<1x2x32xf32>
    tpu.vector_store %arg12[%562, %c0_150, %c0_151], %565 {strides = array<i32>} : memref<8x2x32xf32, #tpu.memory_space<vmem>>, vector<1x2x32xf32>,
    %c7_i32_152 = arith.constant 7 : i32
    %c7_i32_153 = arith.constant 7 : i32
    %566 = arith.subi %c7_i32_153, %c7_i32_152 : i32
    %567 = arith.index_cast %c7_i32_152 : i32 to index
    %c0_154 = arith.constant 0 : index
    %c0_155 = arith.constant 0 : index
    %568 = vector.load %arg1[%567, %c0_154, %c0_155] : memref<8x2x32xf32, #tpu.memory_space<vmem>>, vector<1x2x32xf32>
    %569 = vector.shape_cast %568 : vector<1x2x32xf32> to vector<2x32xf32>
    %570 = arith.index_cast %566 : i32 to index
    %c0_156 = arith.constant 0 : index
    %c0_157 = arith.constant 0 : index
    %571 = vector.load %arg2[%570, %c0_156, %c0_157] : memref<8x2x32xf32, #tpu.memory_space<vmem>>, vector<1x2x32xf32>
    %572 = vector.shape_cast %571 : vector<1x2x32xf32> to vector<2x32xf32>
    %cst_158 = arith.constant dense<0.000000e+00> : vector<2x96xf32>
    %573 = tpu.matmul %569, %3, %cst_158 {dimension_numbers = #tpu.dot_dimension_numbers<[1], [0], [0], [1], [0, 0, 1, 1], [], []>} : vector<2x32xf32>, vector<32x96xf32>, vector<2x96xf32> -> vector<2x96xf32>
    %574 = vector.broadcast %5 : vector<1x96xf32> to vector<2x96xf32>
    %575 = arith.addf %573, %574 : vector<2x96xf32>
    %cst_159 = arith.constant dense<0.000000e+00> : vector<2x96xf32>
    %576 = tpu.matmul %525, %7, %cst_159 {dimension_numbers = #tpu.dot_dimension_numbers<[1], [0], [0], [1], [0, 0, 1, 1], [], []>} : vector<2x32xf32>, vector<32x96xf32>, vector<2x96xf32> -> vector<2x96xf32>
    %577 = vector.broadcast %9 : vector<1x96xf32> to vector<2x96xf32>
    %578 = arith.addf %576, %577 : vector<2x96xf32>
    %579 = vector.extract_strided_slice %575 {offsets = [0, 0], sizes = [2, 32], strides = [1, 1]} : vector<2x96xf32> to vector<2x32xf32>
    %580 = vector.extract_strided_slice %578 {offsets = [0, 0], sizes = [2, 32], strides = [1, 1]} : vector<2x96xf32> to vector<2x32xf32>
    %581 = arith.addf %579, %580 : vector<2x32xf32>
    %582 = arith.negf %581 : vector<2x32xf32>
    %583 = math.exp %582 : vector<2x32xf32>
    %cst_160 = arith.constant 1.000000e+00 : f32
    %584 = vector.broadcast %cst_160 : f32 to vector<2x32xf32>
    %585 = arith.addf %584, %583 : vector<2x32xf32>
    %586 = arith.divf %584, %585 : vector<2x32xf32>
    %587 = vector.extract_strided_slice %575 {offsets = [0, 32], sizes = [2, 32], strides = [1, 1]} : vector<2x96xf32> to vector<2x32xf32>
    %588 = vector.extract_strided_slice %578 {offsets = [0, 32], sizes = [2, 32], strides = [1, 1]} : vector<2x96xf32> to vector<2x32xf32>
    %589 = arith.addf %587, %588 : vector<2x32xf32>
    %590 = arith.negf %589 : vector<2x32xf32>
    %591 = math.exp %590 : vector<2x32xf32>
    %cst_161 = arith.constant 1.000000e+00 : f32
    %592 = vector.broadcast %cst_161 : f32 to vector<2x32xf32>
    %593 = arith.addf %592, %591 : vector<2x32xf32>
    %594 = arith.divf %592, %593 : vector<2x32xf32>
    %595 = vector.extract_strided_slice %575 {offsets = [0, 64], sizes = [2, 32], strides = [1, 1]} : vector<2x96xf32> to vector<2x32xf32>
    %596 = vector.extract_strided_slice %578 {offsets = [0, 64], sizes = [2, 32], strides = [1, 1]} : vector<2x96xf32> to vector<2x32xf32>
    %597 = arith.mulf %586, %596 : vector<2x32xf32>
    %598 = arith.addf %595, %597 : vector<2x32xf32>
    %599 = math.tanh %598 : vector<2x32xf32>
    %cst_162 = arith.constant 1.000000e+00 : f32
    %600 = vector.broadcast %cst_162 : f32 to vector<2x32xf32>
    %601 = arith.subf %600, %594 : vector<2x32xf32>
    %602 = arith.mulf %601, %599 : vector<2x32xf32>
    %603 = arith.mulf %594, %525 : vector<2x32xf32>
    %604 = arith.addf %602, %603 : vector<2x32xf32>
    %cst_163 = arith.constant dense<0.000000e+00> : vector<2x96xf32>
    %605 = tpu.matmul %572, %4, %cst_163 {dimension_numbers = #tpu.dot_dimension_numbers<[1], [0], [0], [1], [0, 0, 1, 1], [], []>} : vector<2x32xf32>, vector<32x96xf32>, vector<2x96xf32> -> vector<2x96xf32>
    %606 = vector.broadcast %6 : vector<1x96xf32> to vector<2x96xf32>
    %607 = arith.addf %605, %606 : vector<2x96xf32>
    %cst_164 = arith.constant dense<0.000000e+00> : vector<2x96xf32>
    %608 = tpu.matmul %557, %8, %cst_164 {dimension_numbers = #tpu.dot_dimension_numbers<[1], [0], [0], [1], [0, 0, 1, 1], [], []>} : vector<2x32xf32>, vector<32x96xf32>, vector<2x96xf32> -> vector<2x96xf32>
    %609 = vector.broadcast %10 : vector<1x96xf32> to vector<2x96xf32>
    %610 = arith.addf %608, %609 : vector<2x96xf32>
    %611 = vector.extract_strided_slice %607 {offsets = [0, 0], sizes = [2, 32], strides = [1, 1]} : vector<2x96xf32> to vector<2x32xf32>
    %612 = vector.extract_strided_slice %610 {offsets = [0, 0], sizes = [2, 32], strides = [1, 1]} : vector<2x96xf32> to vector<2x32xf32>
    %613 = arith.addf %611, %612 : vector<2x32xf32>
    %614 = arith.negf %613 : vector<2x32xf32>
    %615 = math.exp %614 : vector<2x32xf32>
    %cst_165 = arith.constant 1.000000e+00 : f32
    %616 = vector.broadcast %cst_165 : f32 to vector<2x32xf32>
    %617 = arith.addf %616, %615 : vector<2x32xf32>
    %618 = arith.divf %616, %617 : vector<2x32xf32>
    %619 = vector.extract_strided_slice %607 {offsets = [0, 32], sizes = [2, 32], strides = [1, 1]} : vector<2x96xf32> to vector<2x32xf32>
    %620 = vector.extract_strided_slice %610 {offsets = [0, 32], sizes = [2, 32], strides = [1, 1]} : vector<2x96xf32> to vector<2x32xf32>
    %621 = arith.addf %619, %620 : vector<2x32xf32>
    %622 = arith.negf %621 : vector<2x32xf32>
    %623 = math.exp %622 : vector<2x32xf32>
    %cst_166 = arith.constant 1.000000e+00 : f32
    %624 = vector.broadcast %cst_166 : f32 to vector<2x32xf32>
    %625 = arith.addf %624, %623 : vector<2x32xf32>
    %626 = arith.divf %624, %625 : vector<2x32xf32>
    %627 = vector.extract_strided_slice %607 {offsets = [0, 64], sizes = [2, 32], strides = [1, 1]} : vector<2x96xf32> to vector<2x32xf32>
    %628 = vector.extract_strided_slice %610 {offsets = [0, 64], sizes = [2, 32], strides = [1, 1]} : vector<2x96xf32> to vector<2x32xf32>
    %629 = arith.mulf %618, %628 : vector<2x32xf32>
    %630 = arith.addf %627, %629 : vector<2x32xf32>
    %631 = math.tanh %630 : vector<2x32xf32>
    %cst_167 = arith.constant 1.000000e+00 : f32
    %632 = vector.broadcast %cst_167 : f32 to vector<2x32xf32>
    %633 = arith.subf %632, %626 : vector<2x32xf32>
    %634 = arith.mulf %633, %631 : vector<2x32xf32>
    %635 = arith.mulf %626, %557 : vector<2x32xf32>
    %636 = arith.addf %634, %635 : vector<2x32xf32>
    %637 = arith.index_cast %c7_i32_152 : i32 to index
    %c0_168 = arith.constant 0 : index
    %c0_169 = arith.constant 0 : index
    %638 = vector.load %arg11[%637, %c0_168, %c0_169] : memref<8x2x32xf32, #tpu.memory_space<vmem>>, vector<1x2x32xf32>
    %639 = vector.shape_cast %638 : vector<1x2x32xf32> to vector<2x32xf32>
    %640 = vector.shape_cast %604 : vector<2x32xf32> to vector<1x2x32xf32>
    tpu.vector_store %arg11[%637, %c0_168, %c0_169], %640 {strides = array<i32>} : memref<8x2x32xf32, #tpu.memory_space<vmem>>, vector<1x2x32xf32>,
    %641 = arith.index_cast %566 : i32 to index
    %c0_170 = arith.constant 0 : index
    %c0_171 = arith.constant 0 : index
    %642 = vector.load %arg12[%641, %c0_170, %c0_171] : memref<8x2x32xf32, #tpu.memory_space<vmem>>, vector<1x2x32xf32>
    %643 = vector.shape_cast %642 : vector<1x2x32xf32> to vector<2x32xf32>
    %644 = vector.shape_cast %636 : vector<2x32xf32> to vector<1x2x32xf32>
    tpu.vector_store %arg12[%641, %c0_170, %c0_171], %644 {strides = array<i32>} : memref<8x2x32xf32, #tpu.memory_space<vmem>>, vector<1x2x32xf32>,
    %c8_i32 = arith.constant 8 : i32
    %c0_172 = arith.constant 0 : index
    %c0_173 = arith.constant 0 : index
    %645 = vector.load %arg13[%c0_172, %c0_173] : memref<2x32xf32, #tpu.memory_space<vmem>>, vector<2x32xf32>
    tpu.vector_store %arg13[%c0_172, %c0_173], %604 {strides = array<i32>} : memref<2x32xf32, #tpu.memory_space<vmem>>, vector<2x32xf32>,
    %c0_174 = arith.constant 0 : index
    %c0_175 = arith.constant 0 : index
    %646 = vector.load %arg14[%c0_174, %c0_175] : memref<2x32xf32, #tpu.memory_space<vmem>>, vector<2x32xf32>
    tpu.vector_store %arg14[%c0_174, %c0_175], %636 {strides = array<i32>} : memref<2x32xf32, #tpu.memory_space<vmem>>, vector<2x32xf32>,
    return
  }
  func.func @transform_0(%arg0: i32) -> (i32, i32, i32) {
    %c0_i32 = arith.constant 0 : i32
    %c0_i32_0 = arith.constant 0 : i32
    %c0_i32_1 = arith.constant 0 : i32
    return %arg0, %c0_i32, %c0_i32_0 : i32, i32, i32
  }
  func.func @transform_1(%arg0: i32) -> (i32, i32, i32) {
    %c0_i32 = arith.constant 0 : i32
    %0 = arith.subi %c0_i32, %arg0 : i32
    %c0_i32_0 = arith.constant 0 : i32
    %c0_i32_1 = arith.constant 0 : i32
    %c0_i32_2 = arith.constant 0 : i32
    return %0, %c0_i32_0, %c0_i32_1 : i32, i32, i32
  }
  func.func @transform_2(%arg0: i32) -> (i32, i32) {
    %c0_i32 = arith.constant 0 : i32
    %c0_i32_0 = arith.constant 0 : i32
    %c0_i32_1 = arith.constant 0 : i32
    return %c0_i32, %c0_i32_0 : i32, i32
  }
  func.func @transform_3(%arg0: i32) -> (i32, i32) {
    %c0_i32 = arith.constant 0 : i32
    %c0_i32_0 = arith.constant 0 : i32
    %c0_i32_1 = arith.constant 0 : i32
    return %c0_i32, %c0_i32_0 : i32, i32
  }
  func.func @transform_4(%arg0: i32) -> (i32, i32) {
    %c0_i32 = arith.constant 0 : i32
    %c0_i32_0 = arith.constant 0 : i32
    %c0_i32_1 = arith.constant 0 : i32
    return %c0_i32, %c0_i32_0 : i32, i32
  }
  func.func @transform_5(%arg0: i32) -> (i32, i32) {
    %c0_i32 = arith.constant 0 : i32
    %c0_i32_0 = arith.constant 0 : i32
    %c0_i32_1 = arith.constant 0 : i32
    return %c0_i32, %c0_i32_0 : i32, i32
  }
  func.func @transform_6(%arg0: i32) -> (i32, i32) {
    %c0_i32 = arith.constant 0 : i32
    %c0_i32_0 = arith.constant 0 : i32
    %c0_i32_1 = arith.constant 0 : i32
    return %c0_i32, %c0_i32_0 : i32, i32
  }
  func.func @transform_7(%arg0: i32) -> (i32, i32) {
    %c0_i32 = arith.constant 0 : i32
    %c0_i32_0 = arith.constant 0 : i32
    %c0_i32_1 = arith.constant 0 : i32
    return %c0_i32, %c0_i32_0 : i32, i32
  }
  func.func @transform_8(%arg0: i32) -> (i32, i32) {
    %c0_i32 = arith.constant 0 : i32
    %c0_i32_0 = arith.constant 0 : i32
    %c0_i32_1 = arith.constant 0 : i32
    return %c0_i32, %c0_i32_0 : i32, i32
  }
  func.func @transform_9(%arg0: i32) -> (i32, i32) {
    %c0_i32 = arith.constant 0 : i32
    %c0_i32_0 = arith.constant 0 : i32
    %c0_i32_1 = arith.constant 0 : i32
    return %c0_i32, %c0_i32_0 : i32, i32
  }
  func.func @transform_10(%arg0: i32) -> (i32, i32, i32) {
    %c0_i32 = arith.constant 0 : i32
    %c0_i32_0 = arith.constant 0 : i32
    %c0_i32_1 = arith.constant 0 : i32
    return %arg0, %c0_i32, %c0_i32_0 : i32, i32, i32
  }
  func.func @transform_11(%arg0: i32) -> (i32, i32, i32) {
    %c0_i32 = arith.constant 0 : i32
    %0 = arith.subi %c0_i32, %arg0 : i32
    %c0_i32_0 = arith.constant 0 : i32
    %c0_i32_1 = arith.constant 0 : i32
    %c0_i32_2 = arith.constant 0 : i32
    return %0, %c0_i32_0, %c0_i32_1 : i32, i32, i32
  }
}

</mosaic_0001>

<llo_original>
// kernel: encoder_forward.1
$region0: #{encoder_forward.1}
  #allocation0 [shape = 'u32[]', space=smem, size = 0x4, offset = 0x4, fixed_abs, tag = 'smem constant byte address 0x4 - core index']
  #allocation1 [shape = 'u32[144,128]{1,0:T(1,128)}', space=vmem, size = 0x12000, scoped, tag = 'internal scratch']
  #allocation2 [shape = 'f32[2,32]{1,0:T(2,128)}', space=vmem, size = 0x400, scoped, tag = 'scratch operand']
  #allocation3 [shape = 'f32[2,32]{1,0:T(2,128)}', space=vmem, size = 0x400, scoped, tag = 'scratch operand']
  %s0 = inlined_call_operand.vmem [shape: f32[8,2,32], index: 0, kind: input, shape index: {}, may-alias: {0,1}]
  %s1 = inlined_call_operand.vmem [shape: f32[8,2,32], index: 1, kind: input, shape index: {}, may-alias: {0,1}]
  %s2 = inlined_call_operand.vmem [shape: f32[32,96], index: 2, kind: input, shape index: {}]
  %s3 = inlined_call_operand.hbm [shape: f32[32,96], index: 3, kind: input, shape index: {}]
  %s4 = inlined_call_operand.vmem [shape: f32[1,96], index: 4, kind: input, shape index: {}]
  %s5 = inlined_call_operand.vmem [shape: f32[1,96], index: 5, kind: input, shape index: {}]
  %s6 = inlined_call_operand.hbm [shape: f32[32,96], index: 6, kind: input, shape index: {}]
  %s7 = inlined_call_operand.hbm [shape: f32[32,96], index: 7, kind: input, shape index: {}]
  %s8 = inlined_call_operand.vmem [shape: f32[1,96], index: 8, kind: input, shape index: {}]
  %s9 = inlined_call_operand.vmem [shape: f32[1,96], index: 9, kind: input, shape index: {}]
  %s10 = inlined_call_operand.vmem [shape: f32[8,2,32], index: 10, kind: output, shape index: {0}]
  %s11 = inlined_call_operand.vmem [shape: f32[8,2,32], index: 11, kind: output, shape index: {1}]
  %12 = xla_tuple %s10, %s11
  %s13 = sld [smem:[#allocation0]]
  $region74: #{encoder_forward.1} parent=0
    _
  %s15 = ssub.s32 1, %s13
  %s16 = scalar_select 0, %s15, %s13
  $region1: #{encoder_forward.1} parent=0
    #allocation4 [shape = 'u8[16384]{0}', space=vmem, size = 0x4000, scoped, tag = 'input window, operand 3, single buffered']
    #allocation5 [shape = 's32[1]{0}', space=sflag, size = 0x4, scoped, tag = 'scoped memory for encoder_forward.1']
    #allocation6 [shape = 'u8[16384]{0}', space=vmem, size = 0x4000, scoped, tag = 'input window, operand 6, single buffered']
    #allocation7 [shape = 's32[1]{0}', space=sflag, size = 0x4, scoped, tag = 'scoped memory for encoder_forward.1']
    #allocation8 [shape = 'u8[16384]{0}', space=vmem, size = 0x4000, scoped, tag = 'input window, operand 7, single buffered']
    %17 = vsyncpa [#allocation5], 0
    %18 = vsyncpa [#allocation7], 0
    // Predicated region
    $region2: #{encoder_forward.1} parent=1 // pred_check
      _
    $region3: #{encoder_forward.1} parent=1 // pred_check_branch
      %20 = sbr.rel (0) target = $region5
    $region4: #{encoder_forward.1} parent=1 // pred_region
      _
    $region5: #{encoder_forward.1} parent=1 // pred_fallthru
      _
    // Predicated region
    $region6: #{encoder_forward.1} parent=1 // pred_check
      _
    $region7: #{encoder_forward.1} parent=1 // pred_check_branch
      %22 = sbr.rel (0) target = $region9
    $region8: #{encoder_forward.1} parent=1 // pred_region
      %s23 = ssub.s32 0, 0
      %s24 = smul.u32 8, %s23
      %p25 = scmp.lt.s32.totalorder %s24, 7
      %s26 = scalar_select %p25, %s24, 7
      %s27 = smul.addr %s26, 2
      %s28 = scalar_lea.vmem %s1, %s27
      %s29 = ssub.s32 0, 0
      %s30 = smul.u32 8, %s29
    $region9: #{encoder_forward.1} parent=1 // pred_fallthru
      _
    // Predicated region
    $region10: #{encoder_forward.1} parent=1 // pred_check
      _
    $region11: #{encoder_forward.1} parent=1 // pred_check_branch
      %32 = sbr.rel (0) target = $region13
    $region12: #{encoder_forward.1} parent=1 // pred_region
      _
    $region13: #{encoder_forward.1} parent=1 // pred_fallthru
      _
    // Predicated region
    $region14: #{encoder_forward.1} parent=1 // pred_check
      _
    $region15: #{encoder_forward.1} parent=1 // pred_check_branch
      %34 = sbr.rel (0) target = $region17
    $region16: #{encoder_forward.1} parent=1 // pred_region
      %s36 = ssub.s32 512, 512
      %37 = vsyncadd [#allocation5], %s36
      %s38 = sshll.u32 [#allocation4], 4
      %s39 = int_to_ptr.vmem [resolvable:$true] %s38
      %44 = dma.hbm_to_vmem [thread:$0]  %s3, 512, %s39, [#allocation5], 128, 128, 8
    $region17: #{encoder_forward.1} parent=1 // pred_fallthru
      _
    // Predicated region
    $region18: #{encoder_forward.1} parent=1 // pred_check
      _
    $region19: #{encoder_forward.1} parent=1 // pred_check_branch
      %46 = sbr.rel (0) target = $region21
    $region20: #{encoder_forward.1} parent=1 // pred_region
      _
    $region21: #{encoder_forward.1} parent=1 // pred_fallthru
      _
    // Predicated region
    $region22: #{encoder_forward.1} parent=1 // pred_check
      _
    $region23: #{encoder_forward.1} parent=1 // pred_check_branch
      %48 = sbr.rel (0) target = $region25
    $region24: #{encoder_forward.1} parent=1 // pred_region
      _
    $region25: #{encoder_forward.1} parent=1 // pred_fallthru
      _
    // Predicated region
    $region26: #{encoder_forward.1} parent=1 // pred_check
      _
    $region27: #{encoder_forward.1} parent=1 // pred_check_branch
      %50 = sbr.rel (0) target = $region29
    $region28: #{encoder_forward.1} parent=1 // pred_region
      %s52 = ssub.s32 512, 512
      %53 = vsyncadd [#allocation7], %s52
      %s54 = sshll.u32 [#allocation6], 4
      %s55 = int_to_ptr.vmem [resolvable:$true] %s54
      %60 = dma.hbm_to_vmem [thread:$0]  %s6, 512, %s55, [#allocation7], 128, 128, 8
    $region29: #{encoder_forward.1} parent=1 // pred_fallthru
      _
    // Predicated region
    $region30: #{encoder_forward.1} parent=1 // pred_check
      _
    $region31: #{encoder_forward.1} parent=1 // pred_check_branch
      %62 = sbr.rel (0) target = $region33
    $region32: #{encoder_forward.1} parent=1 // pred_region
      %s64 = ssub.s32 512, 512
      %65 = vsyncadd [#allocation7], %s64
      %s66 = sshll.u32 [#allocation8], 4
      %s67 = int_to_ptr.vmem [resolvable:$true] %s66
      %72 = dma.hbm_to_vmem [thread:$0]  %s7, 512, %s67, [#allocation7], 128, 128, 8
    $region33: #{encoder_forward.1} parent=1 // pred_fallthru
      _
    // Predicated region
    $region34: #{encoder_forward.1} parent=1 // pred_check
      _
    $region35: #{encoder_forward.1} parent=1 // pred_check_branch
      %74 = sbr.rel (0) target = $region37
    $region36: #{encoder_forward.1} parent=1 // pred_region
      _
    $region37: #{encoder_forward.1} parent=1 // pred_fallthru
      _
    // Predicated region
    $region38: #{encoder_forward.1} parent=1 // pred_check
      _
    $region39: #{encoder_forward.1} parent=1 // pred_check_branch
      %76 = sbr.rel (0) target = $region41
    $region40: #{encoder_forward.1} parent=1 // pred_region
      _
    $region41: #{encoder_forward.1} parent=1 // pred_fallthru
      _
    // Predicated region
    $region42: #{encoder_forward.1} parent=1 // pred_check
      _
    $region43: #{encoder_forward.1} parent=1 // pred_check_branch
      %78 = sbr.rel (0) target = $region45
    $region44: #{encoder_forward.1} parent=1 // pred_region
      %79 = dma.done [#allocation5], 512
    $region45: #{encoder_forward.1} parent=1 // pred_fallthru
      _
    // Predicated region
    $region46: #{encoder_forward.1} parent=1 // pred_check
      _
    $region47: #{encoder_forward.1} parent=1 // pred_check_branch
      %81 = sbr.rel (0) target = $region49
    $region48: #{encoder_forward.1} parent=1 // pred_region
      %82 = dma.done [#allocation7], 512
    $region49: #{encoder_forward.1} parent=1 // pred_fallthru
      _
    // Predicated region
    $region50: #{encoder_forward.1} parent=1 // pred_check
      _
    $region51: #{encoder_forward.1} parent=1 // pred_check_branch
      %84 = sbr.rel (0) target = $region53
    $region52: #{encoder_forward.1} parent=1 // pred_region
      %85 = dma.done [#allocation7], 512
    $region53: #{encoder_forward.1} parent=1 // pred_fallthru
      _
    %s86 = ssub.s32 0, 0
    %s87 = smul.u32 8, %s86
    %p88 = scmp.lt.s32.totalorder %s87, 7
    %s89 = scalar_select %p88, %s87, 7
    %s90 = smul.addr %s89, 2
    %s91 = scalar_lea.vmem %s1, %s90
    %s92 = ssub.s32 0, 0
    %s93 = smul.u32 8, %s92
    %p94 = scmp.lt.s32.totalorder %s93, 7
    %s95 = scalar_select %p94, %s93, 7
    %s96 = smul.addr %s95, 2
    %s97 = scalar_lea.vmem %s11, %s96
    %s98 = ssub.s32 0, 0
    %s99 = smul.u32 8, %s98
    %p100 = scmp.lt.s32.totalorder %s99, 7
    %s101 = scalar_select %p100, %s99, 7
    %s102 = smul.addr %s101, 2
    %s103 = scalar_lea.vmem %s1, %s102
    %s104 = ssub.s32 0, 0
    %s105 = smul.u32 8, %s104
    %s106 = ssub.s32 0, 0
    %s107 = smul.u32 8, %s106
    %p108 = scmp.lt.s32.totalorder %s107, 7
    %s109 = scalar_select %p108, %s107, 7
    %s110 = smul.addr %s109, 2
    %s111 = scalar_lea.vmem %s11, %s110
    %s112 = ssub.s32 0, 0
    %s113 = smul.u32 8, %s112
    %p114 = scmp.eq.s32.totalorder 0, 0
    // Predicated region
    $region54: #{encoder_forward.1} parent=1 // pred_check
      %p115 = pneg %p114
    $region55: #{encoder_forward.1} parent=1 // pred_check_branch
      %117 = sbr.rel (%p115) target = $region57
    $region56: #{encoder_forward.1} parent=1 // pred_region
      %vm118 = vcmask 254976
      %119 = vst.msk [vmem:[#allocation2] sm:$0x3] %vm118, 0.0
      %120 = vst.msk [vmem:[#allocation3] sm:$0x3] %vm118, 0.0
    $region57: #{encoder_forward.1} parent=1 // pred_fallthru
      _
    %v121 = vld [vmem:[%s2] sm:$0xff]
    %v122 = vld [vmem:[%s2 + $0x8] sm:$0xff]
    %v123 = vld [vmem:[%s2 + $0x10] sm:$0xff]
    %v124 = vld [vmem:[%s2 + $0x18] sm:$0xff]
    %v125 = vld [vmem:[#allocation4] sm:$0xff]
    %v126 = vld [vmem:[#allocation4 + $0x8] sm:$0xff]
    %v127 = vld [vmem:[#allocation4 + $0x10] sm:$0xff]
    %v128 = vld [vmem:[#allocation4 + $0x18] sm:$0xff]
    %v129 = vld [vmem:[%s4] sm:$0x1]
    %v130 = vld [vmem:[%s5] sm:$0x1]
    %v131 = vld [vmem:[#allocation6] sm:$0xff]
    %v132 = vld [vmem:[#allocation6 + $0x8] sm:$0xff]
    %v133 = vld [vmem:[#allocation6 + $0x10] sm:$0xff]
    %v134 = vld [vmem:[#allocation6 + $0x18] sm:$0xff]
    %v135 = vld [vmem:[#allocation8] sm:$0xff]
    %v136 = vld [vmem:[#allocation8 + $0x8] sm:$0xff]
    %v137 = vld [vmem:[#allocation8 + $0x10] sm:$0xff]
    %v138 = vld [vmem:[#allocation8 + $0x18] sm:$0xff]
    %v139 = vld [vmem:[%s8] sm:$0x1]
    %v140 = vld [vmem:[%s9] sm:$0x1]
    %v141 = vld [vmem:[#allocation2] sm:$0x3]
    %v142 = vld [vmem:[#allocation3] sm:$0x3]
    %v143 = vld [vmem:[%s0] sm:$0x3]
    %s144 = scalar_lea.vmem %s103, 14
    %v145 = vld [vmem:[%s144] sm:$0x3]
    %v147 = vlaneseq
    %v148 = vshrl.u32 %v147, 7
    %v149 = vsub.s32 0, %v148
    %v150 = vrot.slane %v129, %v149
    %vm152 = vcmask 261120
    %v154 = vsel %vm152, %v143, 0
    %156 = vmatprep.subr.mxu0 0.0
    %157 = vmatpush1.msra.mxu0 %v121
    %158 = vmatprep.subr.mxu0 0.0
    %159 = vmatpush1.msra.mxu0 %v122
    %160 = vmatprep.subr.mxu0 0.0
    %161 = vmatpush1.msra.mxu0 %v123
    %162 = vmatprep.subr.mxu0 0.0
    %163 = vmatpush1.msra.mxu0 %v124
    %164 = vmatprep.subr.mxu0 0.0
    %165 = vmatpush1.msra.mxu0 0.0
    %166 = vmatprep.subr.mxu0 0.0
    %167 = vmatpush1.msra.mxu0 0.0
    %168 = vmatprep.subr.mxu0 0.0
    %169 = vmatpush1.msra.mxu0 0.0
    %170 = vmatprep.subr.mxu0 0.0
    %171 = vmatpush1.msra.mxu0 0.0
    %172 = vmatprep.subr.mxu0 0.0
    %173 = vmatpush1.msra.mxu0 0.0
    %174 = vmatprep.subr.mxu0 0.0
    %175 = vmatpush1.msra.mxu0 0.0
    %176 = vmatprep.subr.mxu0 0.0
    %177 = vmatpush1.msra.mxu0 0.0
    %178 = vmatprep.subr.mxu0 0.0
    %179 = vmatpush1.msra.mxu0 0.0
    %180 = vmatprep.subr.mxu0 0.0
    %181 = vmatpush1.msra.mxu0 0.0
    %182 = vmatprep.subr.mxu0 0.0
    %183 = vmatpush1.msra.mxu0 0.0
    %184 = vmatprep.subr.mxu0 0.0
    %185 = vmatpush1.msra.mxu0 0.0
    %186 = vmatprep.subr.mxu0 0.0
    %187 = vmatpush1.msra.mxu0 0.0
    %188 = vmatprep.subr.mxu0 0.0
    %189 = vmatpush1.msra.mxu0 0.0
    %190 = vmatprep.subr.mxu0 0.0
    %191 = vmatpush1.msra.mxu0 0.0
    %192 = vmatprep.subr.mxu0 0.0
    %193 = vmatpush1.msra.mxu0 0.0
    %194 = vmatprep.subr.mxu0 0.0
    %195 = vmatpush1.msra.mxu0 0.0
    %196 = vmatprep.subr.mxu0 0.0
    %197 = vmatpush1.msra.mxu0 0.0
    %198 = vmatprep.subr.mxu0 0.0
    %199 = vmatpush1.msra.mxu0 0.0
    %200 = vmatprep.subr.mxu0 0.0
    %201 = vmatpush1.msra.mxu0 0.0
    %202 = vmatprep.subr.mxu0 0.0
    %203 = vmatpush1.msra.mxu0 0.0
    %204 = vmatprep.subr.mxu0 0.0
    %205 = vmatpush1.msra.mxu0 0.0
    %206 = vmatprep.subr.mxu0 0.0
    %207 = vmatpush1.msra.mxu0 0.0
    %208 = vmatprep.subr.mxu0 0.0
    %209 = vmatpush1.msra.mxu0 0.0
    %210 = vmatprep.subr.mxu0 0.0
    %211 = vmatpush1.msra.mxu0 0.0
    %212 = vmatprep.subr.mxu0 0.0
    %213 = vmatpush1.msra.mxu0 0.0
    %214 = vmatprep.subr.mxu0 0.0
    %215 = vmatpush1.msra.mxu0 0.0
    %216 = vmatprep.subr.mxu0 0.0
    %217 = vmatpush1.msra.mxu0 0.0
    %218 = vmatprep.subr.mxu0 0.0
    %219 = vmatpush1.msra.mxu0 0.0
    %220 = vmatprep.mubr.f32.mxu0 0.0
    %221 = vmatmul.mubr.f32.gmra.mrb[0].mxu0 %v154
    %v222 = vpop.f32.mrb[0].mxu0
    %v223 = vadd.f32 %v150, %v222
    %v224 = vpop.f32.mrb[0].mxu0
    %225 = vdwg.mxu0
    %v227 = vlaneseq
    %v228 = vshrl.u32 %v227, 7
    %v229 = vsub.s32 0, %v228
    %v230 = vrot.slane %v139, %v229
    %v233 = vsel %vm152, %v141, 0
    %235 = vmatprep.subr.mxu0 0.0
    %236 = vmatpush1.msra.mxu0 %v131
    %237 = vmatprep.subr.mxu0 0.0
    %238 = vmatpush1.msra.mxu0 %v132
    %239 = vmatprep.subr.mxu0 0.0
    %240 = vmatpush1.msra.mxu0 %v133
    %241 = vmatprep.subr.mxu0 0.0
    %242 = vmatpush1.msra.mxu0 %v134
    %243 = vmatprep.subr.mxu0 0.0
    %244 = vmatpush1.msra.mxu0 0.0
    %245 = vmatprep.subr.mxu0 0.0
    %246 = vmatpush1.msra.mxu0 0.0
    %247 = vmatprep.subr.mxu0 0.0
    %248 = vmatpush1.msra.mxu0 0.0
    %249 = vmatprep.subr.mxu0 0.0
    %250 = vmatpush1.msra.mxu0 0.0
    %251 = vmatprep.subr.mxu0 0.0
    %252 = vmatpush1.msra.mxu0 0.0
    %253 = vmatprep.subr.mxu0 0.0
    %254 = vmatpush1.msra.mxu0 0.0
    %255 = vmatprep.subr.mxu0 0.0
    %256 = vmatpush1.msra.mxu0 0.0
    %257 = vmatprep.subr.mxu0 0.0
    %258 = vmatpush1.msra.mxu0 0.0
    %259 = vmatprep.subr.mxu0 0.0
    %260 = vmatpush1.msra.mxu0 0.0
    %261 = vmatprep.subr.mxu0 0.0
    %262 = vmatpush1.msra.mxu0 0.0
    %263 = vmatprep.subr.mxu0 0.0
    %264 = vmatpush1.msra.mxu0 0.0
    %265 = vmatprep.subr.mxu0 0.0
    %266 = vmatpush1.msra.mxu0 0.0
    %267 = vmatprep.subr.mxu0 0.0
    %268 = vmatpush1.msra.mxu0 0.0
    %269 = vmatprep.subr.mxu0 0.0
    %270 = vmatpush1.msra.mxu0 0.0
    %271 = vmatprep.subr.mxu0 0.0
    %272 = vmatpush1.msra.mxu0 0.0
    %273 = vmatprep.subr.mxu0 0.0
    %274 = vmatpush1.msra.mxu0 0.0
    %275 = vmatprep.subr.mxu0 0.0
    %276 = vmatpush1.msra.mxu0 0.0
    %277 = vmatprep.subr.mxu0 0.0
    %278 = vmatpush1.msra.mxu0 0.0
    %279 = vmatprep.subr.mxu0 0.0
    %280 = vmatpush1.msra.mxu0 0.0
    %281 = vmatprep.subr.mxu0 0.0
    %282 = vmatpush1.msra.mxu0 0.0
    %283 = vmatprep.subr.mxu0 0.0
    %284 = vmatpush1.msra.mxu0 0.0
    %285 = vmatprep.subr.mxu0 0.0
    %286 = vmatpush1.msra.mxu0 0.0
    %287 = vmatprep.subr.mxu0 0.0
    %288 = vmatpush1.msra.mxu0 0.0
    %289 = vmatprep.subr.mxu0 0.0
    %290 = vmatpush1.msra.mxu0 0.0
    %291 = vmatprep.subr.mxu0 0.0
    %292 = vmatpush1.msra.mxu0 0.0
    %293 = vmatprep.subr.mxu0 0.0
    %294 = vmatpush1.msra.mxu0 0.0
    %295 = vmatprep.subr.mxu0 0.0
    %296 = vmatpush1.msra.mxu0 0.0
    %297 = vmatprep.subr.mxu0 0.0
    %298 = vmatpush1.msra.mxu0 0.0
    %299 = vmatprep.mubr.f32.mxu0 0.0
    %300 = vmatmul.mubr.f32.gmra.mrb[0].mxu0 %v233
    %v301 = vpop.f32.mrb[0].mxu0
    %v302 = vadd.f32 %v230, %v301
    %v303 = vpop.f32.mrb[0].mxu0
    %304 = vdwg.mxu0
    %v305 = vadd.f32 %v223, %v302
    %v306 = vxor.u32 %v305, 2147483648
    %v307 = vmul.f32 %v306, 1.442695
    %v308 = vpow.pop %v307
    %v309 = vadd.f32 %v308, 1.0
    %v310 = vrcp.pop %v309
    %v311 = vmul.f32 1.0, %v310
    %313 = vrot.lane.b32.xlu0 %v302, 64
    %v314 = vpop.permute.xlu0 %313
    %v316 = vmul.f32 %v311, %v314
    %318 = vrot.lane.b32.xlu0 %v316, 64
    %v319 = vpop.permute.xlu0 %318
    %v321 = vadd.f32 %v223, %v319
    %v322 = vtanh.pop %v321
    %v323 = vsub.f32 1.0, %v311
    %325 = vrot.lane.b32.xlu0 %v322, 96
    %v326 = vpop.permute.xlu0 %325
    %v328 = vmul.f32 %v323, %v326
    %329 = vrot.lane.b32.xlu0 %v141, 32
    %v330 = vpop.permute.xlu0 %329
    %v332 = vmul.f32 %v311, %v330
    %v333 = vadd.f32 %v328, %v332
    %v335 = vlaneseq
    %v336 = vshrl.u32 %v335, 7
    %v337 = vsub.s32 0, %v336
    %v338 = vrot.slane %v130, %v337
    %v341 = vsel %vm152, %v145, 0
    %343 = vmatprep.subr.mxu0 0.0
    %344 = vmatpush1.msra.mxu0 %v125
    %345 = vmatprep.subr.mxu0 0.0
    %346 = vmatpush1.msra.mxu0 %v126
    %347 = vmatprep.subr.mxu0 0.0
    %348 = vmatpush1.msra.mxu0 %v127
    %349 = vmatprep.subr.mxu0 0.0
    %350 = vmatpush1.msra.mxu0 %v128
    %351 = vmatprep.subr.mxu0 0.0
    %352 = vmatpush1.msra.mxu0 0.0
    %353 = vmatprep.subr.mxu0 0.0
    %354 = vmatpush1.msra.mxu0 0.0
    %355 = vmatprep.subr.mxu0 0.0
    %356 = vmatpush1.msra.mxu0 0.0
    %357 = vmatprep.subr.mxu0 0.0
    %358 = vmatpush1.msra.mxu0 0.0
    %359 = vmatprep.subr.mxu0 0.0
    %360 = vmatpush1.msra.mxu0 0.0
    %361 = vmatprep.subr.mxu0 0.0
    %362 = vmatpush1.msra.mxu0 0.0
    %363 = vmatprep.subr.mxu0 0.0
    %364 = vmatpush1.msra.mxu0 0.0
    %365 = vmatprep.subr.mxu0 0.0
    %366 = vmatpush1.msra.mxu0 0.0
    %367 = vmatprep.subr.mxu0 0.0
    %368 = vmatpush1.msra.mxu0 0.0
    %369 = vmatprep.subr.mxu0 0.0
    %370 = vmatpush1.msra.mxu0 0.0
    %371 = vmatprep.subr.mxu0 0.0
    %372 = vmatpush1.msra.mxu0 0.0
    %373 = vmatprep.subr.mxu0 0.0
    %374 = vmatpush1.msra.mxu0 0.0
    %375 = vmatprep.subr.mxu0 0.0
    %376 = vmatpush1.msra.mxu0 0.0
    %377 = vmatprep.subr.mxu0 0.0
    %378 = vmatpush1.msra.mxu0 0.0
    %379 = vmatprep.subr.mxu0 0.0
    %380 = vmatpush1.msra.mxu0 0.0
    %381 = vmatprep.subr.mxu0 0.0
    %382 = vmatpush1.msra.mxu0 0.0
    %383 = vmatprep.subr.mxu0 0.0
    %384 = vmatpush1.msra.mxu0 0.0
    %385 = vmatprep.subr.mxu0 0.0
    %386 = vmatpush1.msra.mxu0 0.0
    %387 = vmatprep.subr.mxu0 0.0
    %388 = vmatpush1.msra.mxu0 0.0
    %389 = vmatprep.subr.mxu0 0.0
    %390 = vmatpush1.msra.mxu0 0.0
    %391 = vmatprep.subr.mxu0 0.0
    %392 = vmatpush1.msra.mxu0 0.0
    %393 = vmatprep.subr.mxu0 0.0
    %394 = vmatpush1.msra.mxu0 0.0
    %395 = vmatprep.subr.mxu0 0.0
    %396 = vmatpush1.msra.mxu0 0.0
    %397 = vmatprep.subr.mxu0 0.0
    %398 = vmatpush1.msra.mxu0 0.0
    %399 = vmatprep.subr.mxu0 0.0
    %400 = vmatpush1.msra.mxu0 0.0
    %401 = vmatprep.subr.mxu0 0.0
    %402 = vmatpush1.msra.mxu0 0.0
    %403 = vmatprep.subr.mxu0 0.0
    %404 = vmatpush1.msra.mxu0 0.0
    %405 = vmatprep.subr.mxu0 0.0
    %406 = vmatpush1.msra.mxu0 0.0
    %407 = vmatprep.mubr.f32.mxu0 0.0
    %408 = vmatmul.mubr.f32.gmra.mrb[0].mxu0 %v341
    %v409 = vpop.f32.mrb[0].mxu0
    %v410 = vadd.f32 %v338, %v409
    %v411 = vpop.f32.mrb[0].mxu0
    %412 = vdwg.mxu0
    %v414 = vlaneseq
    %v415 = vshrl.u32 %v414, 7
    %v416 = vsub.s32 0, %v415
    %v417 = vrot.slane %v140, %v416
    %v420 = vsel %vm152, %v142, 0
    %422 = vmatprep.subr.mxu0 0.0
    %423 = vmatpush1.msra.mxu0 %v135
    %424 = vmatprep.subr.mxu0 0.0
    %425 = vmatpush1.msra.mxu0 %v136
    %426 = vmatprep.subr.mxu0 0.0
    %427 = vmatpush1.msra.mxu0 %v137
    %428 = vmatprep.subr.mxu0 0.0
    %429 = vmatpush1.msra.mxu0 %v138
    %430 = vmatprep.subr.mxu0 0.0
    %431 = vmatpush1.msra.mxu0 0.0
    %432 = vmatprep.subr.mxu0 0.0
    %433 = vmatpush1.msra.mxu0 0.0
    %434 = vmatprep.subr.mxu0 0.0
    %435 = vmatpush1.msra.mxu0 0.0
    %436 = vmatprep.subr.mxu0 0.0
    %437 = vmatpush1.msra.mxu0 0.0
    %438 = vmatprep.subr.mxu0 0.0
    %439 = vmatpush1.msra.mxu0 0.0
    %440 = vmatprep.subr.mxu0 0.0
    %441 = vmatpush1.msra.mxu0 0.0
    %442 = vmatprep.subr.mxu0 0.0
    %443 = vmatpush1.msra.mxu0 0.0
    %444 = vmatprep.subr.mxu0 0.0
    %445 = vmatpush1.msra.mxu0 0.0
    %446 = vmatprep.subr.mxu0 0.0
    %447 = vmatpush1.msra.mxu0 0.0
    %448 = vmatprep.subr.mxu0 0.0
    %449 = vmatpush1.msra.mxu0 0.0
    %450 = vmatprep.subr.mxu0 0.0
    %451 = vmatpush1.msra.mxu0 0.0
    %452 = vmatprep.subr.mxu0 0.0
    %453 = vmatpush1.msra.mxu0 0.0
    %454 = vmatprep.subr.mxu0 0.0
    %455 = vmatpush1.msra.mxu0 0.0
    %456 = vmatprep.subr.mxu0 0.0
    %457 = vmatpush1.msra.mxu0 0.0
    %458 = vmatprep.subr.mxu0 0.0
    %459 = vmatpush1.msra.mxu0 0.0
    %460 = vmatprep.subr.mxu0 0.0
    %461 = vmatpush1.msra.mxu0 0.0
    %462 = vmatprep.subr.mxu0 0.0
    %463 = vmatpush1.msra.mxu0 0.0
    %464 = vmatprep.subr.mxu0 0.0
    %465 = vmatpush1.msra.mxu0 0.0
    %466 = vmatprep.subr.mxu0 0.0
    %467 = vmatpush1.msra.mxu0 0.0
    %468 = vmatprep.subr.mxu0 0.0
    %469 = vmatpush1.msra.mxu0 0.0
    %470 = vmatprep.subr.mxu0 0.0
    %471 = vmatpush1.msra.mxu0 0.0
    %472 = vmatprep.subr.mxu0 0.0
    %473 = vmatpush1.msra.mxu0 0.0
    %474 = vmatprep.subr.mxu0 0.0
    %475 = vmatpush1.msra.mxu0 0.0
    %476 = vmatprep.subr.mxu0 0.0
    %477 = vmatpush1.msra.mxu0 0.0
    %478 = vmatprep.subr.mxu0 0.0
    %479 = vmatpush1.msra.mxu0 0.0
    %480 = vmatprep.subr.mxu0 0.0
    %481 = vmatpush1.msra.mxu0 0.0
    %482 = vmatprep.subr.mxu0 0.0
    %483 = vmatpush1.msra.mxu0 0.0
    %484 = vmatprep.subr.mxu0 0.0
    %485 = vmatpush1.msra.mxu0 0.0
    %486 = vmatprep.mubr.f32.mxu0 0.0
    %487 = vmatmul.mubr.f32.gmra.mrb[0].mxu0 %v420
    %v488 = vpop.f32.mrb[0].mxu0
    %v489 = vadd.f32 %v417, %v488
    %v490 = vpop.f32.mrb[0].mxu0
    %491 = vdwg.mxu0
    %v492 = vadd.f32 %v410, %v489
    %v493 = vxor.u32 %v492, 2147483648
    %v494 = vmul.f32 %v493, 1.442695
    %v495 = vpow.pop %v494
    %v496 = vadd.f32 %v495, 1.0
    %v497 = vrcp.pop %v496
    %v498 = vmul.f32 1.0, %v497
    %500 = vrot.lane.b32.xlu0 %v489, 64
    %v501 = vpop.permute.xlu0 %500
    %v503 = vmul.f32 %v498, %v501
    %505 = vrot.lane.b32.xlu0 %v503, 64
    %v506 = vpop.permute.xlu0 %505
    %v508 = vadd.f32 %v410, %v506
    %v509 = vtanh.pop %v508
    %v510 = vsub.f32 1.0, %v498
    %512 = vrot.lane.b32.xlu0 %v509, 96
    %v513 = vpop.permute.xlu0 %512
    %v515 = vmul.f32 %v510, %v513
    %516 = vrot.lane.b32.xlu0 %v142, 32
    %v517 = vpop.permute.xlu0 %516
    %v519 = vmul.f32 %v498, %v517
    %v520 = vadd.f32 %v515, %v519
    %522 = vrot.lane.b32.xlu0 %v333, 96
    %v523 = vpop.permute.xlu0 %522
    %vm525 = vcmask 254976
    %526 = vst.msk [vmem:[%s10] sm:$0x3] %vm525, %v523
    %528 = vrot.lane.b32.xlu0 %v520, 96
    %v529 = vpop.permute.xlu0 %528
    %s531 = scalar_lea.vmem %s111, 14
    %532 = vst.msk [vmem:[%s531] sm:$0x3] %vm525, %v529
    %s533 = scalar_lea.vmem %s0, 2
    %v534 = vld [vmem:[%s533] sm:$0x3]
    %s535 = scalar_lea.vmem %s103, 12
    %v536 = vld [vmem:[%s535] sm:$0x3]
    %v538 = vsel %vm152, %v534, 0
    %540 = vmatprep.subr.mxu0 0.0
    %541 = vmatpush1.msra.mxu0 %v121
    %542 = vmatprep.subr.mxu0 0.0
    %543 = vmatpush1.msra.mxu0 %v122
    %544 = vmatprep.subr.mxu0 0.0
    %545 = vmatpush1.msra.mxu0 %v123
    %546 = vmatprep.subr.mxu0 0.0
    %547 = vmatpush1.msra.mxu0 %v124
    %548 = vmatprep.subr.mxu0 0.0
    %549 = vmatpush1.msra.mxu0 0.0
    %550 = vmatprep.subr.mxu0 0.0
    %551 = vmatpush1.msra.mxu0 0.0
    %552 = vmatprep.subr.mxu0 0.0
    %553 = vmatpush1.msra.mxu0 0.0
    %554 = vmatprep.subr.mxu0 0.0
    %555 = vmatpush1.msra.mxu0 0.0
    %556 = vmatprep.subr.mxu0 0.0
    %557 = vmatpush1.msra.mxu0 0.0
    %558 = vmatprep.subr.mxu0 0.0
    %559 = vmatpush1.msra.mxu0 0.0
    %560 = vmatprep.subr.mxu0 0.0
    %561 = vmatpush1.msra.mxu0 0.0
    %562 = vmatprep.subr.mxu0 0.0
    %563 = vmatpush1.msra.mxu0 0.0
    %564 = vmatprep.subr.mxu0 0.0
    %565 = vmatpush1.msra.mxu0 0.0
    %566 = vmatprep.subr.mxu0 0.0
    %567 = vmatpush1.msra.mxu0 0.0
    %568 = vmatprep.subr.mxu0 0.0
    %569 = vmatpush1.msra.mxu0 0.0
    %570 = vmatprep.subr.mxu0 0.0
    %571 = vmatpush1.msra.mxu0 0.0
    %572 = vmatprep.subr.mxu0 0.0
    %573 = vmatpush1.msra.mxu0 0.0
    %574 = vmatprep.subr.mxu0 0.0
    %575 = vmatpush1.msra.mxu0 0.0
    %576 = vmatprep.subr.mxu0 0.0
    %577 = vmatpush1.msra.mxu0 0.0
    %578 = vmatprep.subr.mxu0 0.0
    %579 = vmatpush1.msra.mxu0 0.0
    %580 = vmatprep.subr.mxu0 0.0
    %581 = vmatpush1.msra.mxu0 0.0
    %582 = vmatprep.subr.mxu0 0.0
    %583 = vmatpush1.msra.mxu0 0.0
    %584 = vmatprep.subr.mxu0 0.0
    %585 = vmatpush1.msra.mxu0 0.0
    %586 = vmatprep.subr.mxu0 0.0
    %587 = vmatpush1.msra.mxu0 0.0
    %588 = vmatprep.subr.mxu0 0.0
    %589 = vmatpush1.msra.mxu0 0.0
    %590 = vmatprep.subr.mxu0 0.0
    %591 = vmatpush1.msra.mxu0 0.0
    %592 = vmatprep.subr.mxu0 0.0
    %593 = vmatpush1.msra.mxu0 0.0
    %594 = vmatprep.subr.mxu0 0.0
    %595 = vmatpush1.msra.mxu0 0.0
    %596 = vmatprep.subr.mxu0 0.0
    %597 = vmatpush1.msra.mxu0 0.0
    %598 = vmatprep.subr.mxu0 0.0
    %599 = vmatpush1.msra.mxu0 0.0
    %600 = vmatprep.subr.mxu0 0.0
    %601 = vmatpush1.msra.mxu0 0.0
    %602 = vmatprep.subr.mxu0 0.0
    %603 = vmatpush1.msra.mxu0 0.0
    %604 = vmatprep.mubr.f32.mxu0 0.0
    %605 = vmatmul.mubr.f32.gmra.mrb[0].mxu0 %v538
    %v606 = vpop.f32.mrb[0].mxu0
    %v607 = vadd.f32 %v150, %v606
    %v608 = vpop.f32.mrb[0].mxu0
    %609 = vdwg.mxu0
    %v610 = vsel %vm152, %v523, 0
    %612 = vmatprep.subr.mxu0 0.0
    %613 = vmatpush1.msra.mxu0 %v131
    %614 = vmatprep.subr.mxu0 0.0
    %615 = vmatpush1.msra.mxu0 %v132
    %616 = vmatprep.subr.mxu0 0.0
    %617 = vmatpush1.msra.mxu0 %v133
    %618 = vmatprep.subr.mxu0 0.0
    %619 = vmatpush1.msra.mxu0 %v134
    %620 = vmatprep.subr.mxu0 0.0
    %621 = vmatpush1.msra.mxu0 0.0
    %622 = vmatprep.subr.mxu0 0.0
    %623 = vmatpush1.msra.mxu0 0.0
    %624 = vmatprep.subr.mxu0 0.0
    %625 = vmatpush1.msra.mxu0 0.0
    %626 = vmatprep.subr.mxu0 0.0
    %627 = vmatpush1.msra.mxu0 0.0
    %628 = vmatprep.subr.mxu0 0.0
    %629 = vmatpush1.msra.mxu0 0.0
    %630 = vmatprep.subr.mxu0 0.0
    %631 = vmatpush1.msra.mxu0 0.0
    %632 = vmatprep.subr.mxu0 0.0
    %633 = vmatpush1.msra.mxu0 0.0
    %634 = vmatprep.subr.mxu0 0.0
    %635 = vmatpush1.msra.mxu0 0.0
    %636 = vmatprep.subr.mxu0 0.0
    %637 = vmatpush1.msra.mxu0 0.0
    %638 = vmatprep.subr.mxu0 0.0
    %639 = vmatpush1.msra.mxu0 0.0
    %640 = vmatprep.subr.mxu0 0.0
    %641 = vmatpush1.msra.mxu0 0.0
    %642 = vmatprep.subr.mxu0 0.0
    %643 = vmatpush1.msra.mxu0 0.0
    %644 = vmatprep.subr.mxu0 0.0
    %645 = vmatpush1.msra.mxu0 0.0
    %646 = vmatprep.subr.mxu0 0.0
    %647 = vmatpush1.msra.mxu0 0.0
    %648 = vmatprep.subr.mxu0 0.0
    %649 = vmatpush1.msra.mxu0 0.0
    %650 = vmatprep.subr.mxu0 0.0
    %651 = vmatpush1.msra.mxu0 0.0
    %652 = vmatprep.subr.mxu0 0.0
    %653 = vmatpush1.msra.mxu0 0.0
    %654 = vmatprep.subr.mxu0 0.0
    %655 = vmatpush1.msra.mxu0 0.0
    %656 = vmatprep.subr.mxu0 0.0
    %657 = vmatpush1.msra.mxu0 0.0
    %658 = vmatprep.subr.mxu0 0.0
    %659 = vmatpush1.msra.mxu0 0.0
    %660 = vmatprep.subr.mxu0 0.0
    %661 = vmatpush1.msra.mxu0 0.0
    %662 = vmatprep.subr.mxu0 0.0
    %663 = vmatpush1.msra.mxu0 0.0
    %664 = vmatprep.subr.mxu0 0.0
    %665 = vmatpush1.msra.mxu0 0.0
    %666 = vmatprep.subr.mxu0 0.0
    %667 = vmatpush1.msra.mxu0 0.0
    %668 = vmatprep.subr.mxu0 0.0
    %669 = vmatpush1.msra.mxu0 0.0
    %670 = vmatprep.subr.mxu0 0.0
    %671 = vmatpush1.msra.mxu0 0.0
    %672 = vmatprep.subr.mxu0 0.0
    %673 = vmatpush1.msra.mxu0 0.0
    %674 = vmatprep.subr.mxu0 0.0
    %675 = vmatpush1.msra.mxu0 0.0
    %676 = vmatprep.mubr.f32.mxu0 0.0
    %677 = vmatmul.mubr.f32.gmra.mrb[0].mxu0 %v610
    %v678 = vpop.f32.mrb[0].mxu0
    %v679 = vadd.f32 %v230, %v678
    %v680 = vpop.f32.mrb[0].mxu0
    %681 = vdwg.mxu0
    %v682 = vadd.f32 %v607, %v679
    %v683 = vxor.u32 %v682, 2147483648
    %v684 = vmul.f32 %v683, 1.442695
    %v685 = vpow.pop %v684
    %v686 = vadd.f32 %v685, 1.0
    %v687 = vrcp.pop %v686
    %v688 = vmul.f32 1.0, %v687
    %690 = vrot.lane.b32.xlu0 %v679, 64
    %v691 = vpop.permute.xlu0 %690
    %v693 = vmul.f32 %v688, %v691
    %695 = vrot.lane.b32.xlu0 %v693, 64
    %v696 = vpop.permute.xlu0 %695
    %v698 = vadd.f32 %v607, %v696
    %v699 = vtanh.pop %v698
    %v700 = vsub.f32 1.0, %v688
    %702 = vrot.lane.b32.xlu0 %v699, 96
    %v703 = vpop.permute.xlu0 %702
    %v705 = vmul.f32 %v700, %v703
    %v706 = vmul.f32 %v688, %v333
    %v707 = vadd.f32 %v705, %v706
    %v709 = vsel %vm152, %v536, 0
    %711 = vmatprep.subr.mxu0 0.0
    %712 = vmatpush1.msra.mxu0 %v125
    %713 = vmatprep.subr.mxu0 0.0
    %714 = vmatpush1.msra.mxu0 %v126
    %715 = vmatprep.subr.mxu0 0.0
    %716 = vmatpush1.msra.mxu0 %v127
    %717 = vmatprep.subr.mxu0 0.0
    %718 = vmatpush1.msra.mxu0 %v128
    %719 = vmatprep.subr.mxu0 0.0
    %720 = vmatpush1.msra.mxu0 0.0
    %721 = vmatprep.subr.mxu0 0.0
    %722 = vmatpush1.msra.mxu0 0.0
    %723 = vmatprep.subr.mxu0 0.0
    %724 = vmatpush1.msra.mxu0 0.0
    %725 = vmatprep.subr.mxu0 0.0
    %726 = vmatpush1.msra.mxu0 0.0
    %727 = vmatprep.subr.mxu0 0.0
    %728 = vmatpush1.msra.mxu0 0.0
    %729 = vmatprep.subr.mxu0 0.0
    %730 = vmatpush1.msra.mxu0 0.0
    %731 = vmatprep.subr.mxu0 0.0
    %732 = vmatpush1.msra.mxu0 0.0
    %733 = vmatprep.subr.mxu0 0.0
    %734 = vmatpush1.msra.mxu0 0.0
    %735 = vmatprep.subr.mxu0 0.0
    %736 = vmatpush1.msra.mxu0 0.0
    %737 = vmatprep.subr.mxu0 0.0
    %738 = vmatpush1.msra.mxu0 0.0
    %739 = vmatprep.subr.mxu0 0.0
    %740 = vmatpush1.msra.mxu0 0.0
    %741 = vmatprep.subr.mxu0 0.0
    %742 = vmatpush1.msra.mxu0 0.0
    %743 = vmatprep.subr.mxu0 0.0
    %744 = vmatpush1.msra.mxu0 0.0
    %745 = vmatprep.subr.mxu0 0.0
    %746 = vmatpush1.msra.mxu0 0.0
    %747 = vmatprep.subr.mxu0 0.0
    %748 = vmatpush1.msra.mxu0 0.0
    %749 = vmatprep.subr.mxu0 0.0
    %750 = vmatpush1.msra.mxu0 0.0
    %751 = vmatprep.subr.mxu0 0.0
    %752 = vmatpush1.msra.mxu0 0.0
    %753 = vmatprep.subr.mxu0 0.0
    %754 = vmatpush1.msra.mxu0 0.0
    %755 = vmatprep.subr.mxu0 0.0
    %756 = vmatpush1.msra.mxu0 0.0
    %757 = vmatprep.subr.mxu0 0.0
    %758 = vmatpush1.msra.mxu0 0.0
    %759 = vmatprep.subr.mxu0 0.0
    %760 = vmatpush1.msra.mxu0 0.0
    %761 = vmatprep.subr.mxu0 0.0
    %762 = vmatpush1.msra.mxu0 0.0
    %763 = vmatprep.subr.mxu0 0.0
    %764 = vmatpush1.msra.mxu0 0.0
    %765 = vmatprep.subr.mxu0 0.0
    %766 = vmatpush1.msra.mxu0 0.0
    %767 = vmatprep.subr.mxu0 0.0
    %768 = vmatpush1.msra.mxu0 0.0
    %769 = vmatprep.subr.mxu0 0.0
    %770 = vmatpush1.msra.mxu0 0.0
    %771 = vmatprep.subr.mxu0 0.0
    %772 = vmatpush1.msra.mxu0 0.0
    %773 = vmatprep.subr.mxu0 0.0
    %774 = vmatpush1.msra.mxu0 0.0
    %775 = vmatprep.mubr.f32.mxu0 0.0
    %776 = vmatmul.mubr.f32.gmra.mrb[0].mxu0 %v709
    %v777 = vpop.f32.mrb[0].mxu0
    %v778 = vadd.f32 %v338, %v777
    %v779 = vpop.f32.mrb[0].mxu0
    %780 = vdwg.mxu0
    %v781 = vsel %vm152, %v529, 0
    %783 = vmatprep.subr.mxu0 0.0
    %784 = vmatpush1.msra.mxu0 %v135
    %785 = vmatprep.subr.mxu0 0.0
    %786 = vmatpush1.msra.mxu0 %v136
    %787 = vmatprep.subr.mxu0 0.0
    %788 = vmatpush1.msra.mxu0 %v137
    %789 = vmatprep.subr.mxu0 0.0
    %790 = vmatpush1.msra.mxu0 %v138
    %791 = vmatprep.subr.mxu0 0.0
    %792 = vmatpush1.msra.mxu0 0.0
    %793 = vmatprep.subr.mxu0 0.0
    %794 = vmatpush1.msra.mxu0 0.0
    %795 = vmatprep.subr.mxu0 0.0
    %796 = vmatpush1.msra.mxu0 0.0
    %797 = vmatprep.subr.mxu0 0.0
    %798 = vmatpush1.msra.mxu0 0.0
    %799 = vmatprep.subr.mxu0 0.0
    %800 = vmatpush1.msra.mxu0 0.0
    %801 = vmatprep.subr.mxu0 0.0
    %802 = vmatpush1.msra.mxu0 0.0
    %803 = vmatprep.subr.mxu0 0.0
    %804 = vmatpush1.msra.mxu0 0.0
    %805 = vmatprep.subr.mxu0 0.0
    %806 = vmatpush1.msra.mxu0 0.0
    %807 = vmatprep.subr.mxu0 0.0
    %808 = vmatpush1.msra.mxu0 0.0
    %809 = vmatprep.subr.mxu0 0.0
    %810 = vmatpush1.msra.mxu0 0.0
    %811 = vmatprep.subr.mxu0 0.0
    %812 = vmatpush1.msra.mxu0 0.0
    %813 = vmatprep.subr.mxu0 0.0
    %814 = vmatpush1.msra.mxu0 0.0
    %815 = vmatprep.subr.mxu0 0.0
    %816 = vmatpush1.msra.mxu0 0.0
    %817 = vmatprep.subr.mxu0 0.0
    %818 = vmatpush1.msra.mxu0 0.0
    %819 = vmatprep.subr.mxu0 0.0
    %820 = vmatpush1.msra.mxu0 0.0
    %821 = vmatprep.subr.mxu0 0.0
    %822 = vmatpush1.msra.mxu0 0.0
    %823 = vmatprep.subr.mxu0 0.0
    %824 = vmatpush1.msra.mxu0 0.0
    %825 = vmatprep.subr.mxu0 0.0
    %826 = vmatpush1.msra.mxu0 0.0
    %827 = vmatprep.subr.mxu0 0.0
    %828 = vmatpush1.msra.mxu0 0.0
    %829 = vmatprep.subr.mxu0 0.0
    %830 = vmatpush1.msra.mxu0 0.0
    %831 = vmatprep.subr.mxu0 0.0
    %832 = vmatpush1.msra.mxu0 0.0
    %833 = vmatprep.subr.mxu0 0.0
    %834 = vmatpush1.msra.mxu0 0.0
    %835 = vmatprep.subr.mxu0 0.0
    %836 = vmatpush1.msra.mxu0 0.0
    %837 = vmatprep.subr.mxu0 0.0
    %838 = vmatpush1.msra.mxu0 0.0
    %839 = vmatprep.subr.mxu0 0.0
    %840 = vmatpush1.msra.mxu0 0.0
    %841 = vmatprep.subr.mxu0 0.0
    %842 = vmatpush1.msra.mxu0 0.0
    %843 = vmatprep.subr.mxu0 0.0
    %844 = vmatpush1.msra.mxu0 0.0
    %845 = vmatprep.subr.mxu0 0.0
    %846 = vmatpush1.msra.mxu0 0.0
    %847 = vmatprep.mubr.f32.mxu0 0.0
    %848 = vmatmul.mubr.f32.gmra.mrb[0].mxu0 %v781
    %v849 = vpop.f32.mrb[0].mxu0
    %v850 = vadd.f32 %v417, %v849
    %v851 = vpop.f32.mrb[0].mxu0
    %852 = vdwg.mxu0
    %v853 = vadd.f32 %v778, %v850
    %v854 = vxor.u32 %v853, 2147483648
    %v855 = vmul.f32 %v854, 1.442695
    %v856 = vpow.pop %v855
    %v857 = vadd.f32 %v856, 1.0
    %v858 = vrcp.pop %v857
    %v859 = vmul.f32 1.0, %v858
    %861 = vrot.lane.b32.xlu0 %v850, 64
    %v862 = vpop.permute.xlu0 %861
    %v864 = vmul.f32 %v859, %v862
    %866 = vrot.lane.b32.xlu0 %v864, 64
    %v867 = vpop.permute.xlu0 %866
    %v869 = vadd.f32 %v778, %v867
    %v870 = vtanh.pop %v869
    %v871 = vsub.f32 1.0, %v859
    %873 = vrot.lane.b32.xlu0 %v870, 96
    %v874 = vpop.permute.xlu0 %873
    %v876 = vmul.f32 %v871, %v874
    %v877 = vmul.f32 %v859, %v520
    %v878 = vadd.f32 %v876, %v877
    %880 = vrot.lane.b32.xlu0 %v707, 96
    %v881 = vpop.permute.xlu0 %880
    %s883 = scalar_lea.vmem %s10, 2
    %884 = vst.msk [vmem:[%s883] sm:$0x3] %vm525, %v881
    %886 = vrot.lane.b32.xlu0 %v878, 96
    %v887 = vpop.permute.xlu0 %886
    %s889 = scalar_lea.vmem %s111, 12
    %890 = vst.msk [vmem:[%s889] sm:$0x3] %vm525, %v887
    %s891 = scalar_lea.vmem %s0, 4
    %v892 = vld [vmem:[%s891] sm:$0x3]
    %s893 = scalar_lea.vmem %s103, 10
    %v894 = vld [vmem:[%s893] sm:$0x3]
    %v896 = vsel %vm152, %v892, 0
    %898 = vmatprep.subr.mxu0 0.0
    %899 = vmatpush1.msra.mxu0 %v121
    %900 = vmatprep.subr.mxu0 0.0
    %901 = vmatpush1.msra.mxu0 %v122
    %902 = vmatprep.subr.mxu0 0.0
    %903 = vmatpush1.msra.mxu0 %v123
    %904 = vmatprep.subr.mxu0 0.0
    %905 = vmatpush1.msra.mxu0 %v124
    %906 = vmatprep.subr.mxu0 0.0
    %907 = vmatpush1.msra.mxu0 0.0
    %908 = vmatprep.subr.mxu0 0.0
    %909 = vmatpush1.msra.mxu0 0.0
    %910 = vmatprep.subr.mxu0 0.0
    %911 = vmatpush1.msra.mxu0 0.0
    %912 = vmatprep.subr.mxu0 0.0
    %913 = vmatpush1.msra.mxu0 0.0
    %914 = vmatprep.subr.mxu0 0.0
    %915 = vmatpush1.msra.mxu0 0.0
    %916 = vmatprep.subr.mxu0 0.0
    %917 = vmatpush1.msra.mxu0 0.0
    %918 = vmatprep.subr.mxu0 0.0
    %919 = vmatpush1.msra.mxu0 0.0
    %920 = vmatprep.subr.mxu0 0.0
    %921 = vmatpush1.msra.mxu0 0.0
    %922 = vmatprep.subr.mxu0 0.0
    %923 = vmatpush1.msra.mxu0 0.0
    %924 = vmatprep.subr.mxu0 0.0
    %925 = vmatpush1.msra.mxu0 0.0
    %926 = vmatprep.subr.mxu0 0.0
    %927 = vmatpush1.msra.mxu0 0.0
    %928 = vmatprep.subr.mxu0 0.0
    %929 = vmatpush1.msra.mxu0 0.0
    %930 = vmatprep.subr.mxu0 0.0
    %931 = vmatpush1.msra.mxu0 0.0
    %932 = vmatprep.subr.mxu0 0.0
    %933 = vmatpush1.msra.mxu0 0.0
    %934 = vmatprep.subr.mxu0 0.0
    %935 = vmatpush1.msra.mxu0 0.0
    %936 = vmatprep.subr.mxu0 0.0
    %937 = vmatpush1.msra.mxu0 0.0
    %938 = vmatprep.subr.mxu0 0.0
    %939 = vmatpush1.msra.mxu0 0.0
    %940 = vmatprep.subr.mxu0 0.0
    %941 = vmatpush1.msra.mxu0 0.0
    %942 = vmatprep.subr.mxu0 0.0
    %943 = vmatpush1.msra.mxu0 0.0
    %944 = vmatprep.subr.mxu0 0.0
    %945 = vmatpush1.msra.mxu0 0.0
    %946 = vmatprep.subr.mxu0 0.0
    %947 = vmatpush1.msra.mxu0 0.0
    %948 = vmatprep.subr.mxu0 0.0
    %949 = vmatpush1.msra.mxu0 0.0
    %950 = vmatprep.subr.mxu0 0.0
    %951 = vmatpush1.msra.mxu0 0.0
    %952 = vmatprep.subr.mxu0 0.0
    %953 = vmatpush1.msra.mxu0 0.0
    %954 = vmatprep.subr.mxu0 0.0
    %955 = vmatpush1.msra.mxu0 0.0
    %956 = vmatprep.subr.mxu0 0.0
    %957 = vmatpush1.msra.mxu0 0.0
    %958 = vmatprep.subr.mxu0 0.0
    %959 = vmatpush1.msra.mxu0 0.0
    %960 = vmatprep.subr.mxu0 0.0
    %961 = vmatpush1.msra.mxu0 0.0
    %962 = vmatprep.mubr.f32.mxu0 0.0
    %963 = vmatmul.mubr.f32.gmra.mrb[0].mxu0 %v896
    %v964 = vpop.f32.mrb[0].mxu0
    %v965 = vadd.f32 %v150, %v964
    %v966 = vpop.f32.mrb[0].mxu0
    %967 = vdwg.mxu0
    %v968 = vsel %vm152, %v881, 0
    %970 = vmatprep.subr.mxu0 0.0
    %971 = vmatpush1.msra.mxu0 %v131
    %972 = vmatprep.subr.mxu0 0.0
    %973 = vmatpush1.msra.mxu0 %v132
    %974 = vmatprep.subr.mxu0 0.0
    %975 = vmatpush1.msra.mxu0 %v133
    %976 = vmatprep.subr.mxu0 0.0
    %977 = vmatpush1.msra.mxu0 %v134
    %978 = vmatprep.subr.mxu0 0.0
    %979 = vmatpush1.msra.mxu0 0.0
    %980 = vmatprep.subr.mxu0 0.0
    %981 = vmatpush1.msra.mxu0 0.0
    %982 = vmatprep.subr.mxu0 0.0
    %983 = vmatpush1.msra.mxu0 0.0
    %984 = vmatprep.subr.mxu0 0.0
    %985 = vmatpush1.msra.mxu0 0.0
    %986 = vmatprep.subr.mxu0 0.0
    %987 = vmatpush1.msra.mxu0 0.0
    %988 = vmatprep.subr.mxu0 0.0
    %989 = vmatpush1.msra.mxu0 0.0
    %990 = vmatprep.subr.mxu0 0.0
    %991 = vmatpush1.msra.mxu0 0.0
    %992 = vmatprep.subr.mxu0 0.0
    %993 = vmatpush1.msra.mxu0 0.0
    %994 = vmatprep.subr.mxu0 0.0
    %995 = vmatpush1.msra.mxu0 0.0
    %996 = vmatprep.subr.mxu0 0.0
    %997 = vmatpush1.msra.mxu0 0.0
    %998 = vmatprep.subr.mxu0 0.0
    %999 = vmatpush1.msra.mxu0 0.0
    %1000 = vmatprep.subr.mxu0 0.0
    %1001 = vmatpush1.msra.mxu0 0.0
    %1002 = vmatprep.subr.mxu0 0.0
    %1003 = vmatpush1.msra.mxu0 0.0
    %1004 = vmatprep.subr.mxu0 0.0
    %1005 = vmatpush1.msra.mxu0 0.0
    %1006 = vmatprep.subr.mxu0 0.0
    %1007 = vmatpush1.msra.mxu0 0.0
    %1008 = vmatprep.subr.mxu0 0.0
    %1009 = vmatpush1.msra.mxu0 0.0
    %1010 = vmatprep.subr.mxu0 0.0
    %1011 = vmatpush1.msra.mxu0 0.0
    %1012 = vmatprep.subr.mxu0 0.0
    %1013 = vmatpush1.msra.mxu0 0.0
    %1014 = vmatprep.subr.mxu0 0.0
    %1015 = vmatpush1.msra.mxu0 0.0
    %1016 = vmatprep.subr.mxu0 0.0
    %1017 = vmatpush1.msra.mxu0 0.0
    %1018 = vmatprep.subr.mxu0 0.0
    %1019 = vmatpush1.msra.mxu0 0.0
    %1020 = vmatprep.subr.mxu0 0.0
    %1021 = vmatpush1.msra.mxu0 0.0
    %1022 = vmatprep.subr.mxu0 0.0
    %1023 = vmatpush1.msra.mxu0 0.0
    %1024 = vmatprep.subr.mxu0 0.0
    %1025 = vmatpush1.msra.mxu0 0.0
    %1026 = vmatprep.subr.mxu0 0.0
    %1027 = vmatpush1.msra.mxu0 0.0
    %1028 = vmatprep.subr.mxu0 0.0
    %1029 = vmatpush1.msra.mxu0 0.0
    %1030 = vmatprep.subr.mxu0 0.0
    %1031 = vmatpush1.msra.mxu0 0.0
    %1032 = vmatprep.subr.mxu0 0.0
    %1033 = vmatpush1.msra.mxu0 0.0
    %1034 = vmatprep.mubr.f32.mxu0 0.0
    %1035 = vmatmul.mubr.f32.gmra.mrb[0].mxu0 %v968
    %v1036 = vpop.f32.mrb[0].mxu0
    %v1037 = vadd.f32 %v230, %v1036
    %v1038 = vpop.f32.mrb[0].mxu0
    %1039 = vdwg.mxu0
    %v1040 = vadd.f32 %v965, %v1037
    %v1041 = vxor.u32 %v1040, 2147483648
    %v1042 = vmul.f32 %v1041, 1.442695
    %v1043 = vpow.pop %v1042
    %v1044 = vadd.f32 %v1043, 1.0
    %v1045 = vrcp.pop %v1044
    %v1046 = vmul.f32 1.0, %v1045
    %1048 = vrot.lane.b32.xlu0 %v1037, 64
    %v1049 = vpop.permute.xlu0 %1048
    %v1051 = vmul.f32 %v1046, %v1049
    %1053 = vrot.lane.b32.xlu0 %v1051, 64
    %v1054 = vpop.permute.xlu0 %1053
    %v1056 = vadd.f32 %v965, %v1054
    %v1057 = vtanh.pop %v1056
    %v1058 = vsub.f32 1.0, %v1046
    %1060 = vrot.lane.b32.xlu0 %v1057, 96
    %v1061 = vpop.permute.xlu0 %1060
    %v1063 = vmul.f32 %v1058, %v1061
    %v1064 = vmul.f32 %v1046, %v707
    %v1065 = vadd.f32 %v1063, %v1064
    %v1067 = vsel %vm152, %v894, 0
    %1069 = vmatprep.subr.mxu0 0.0
    %1070 = vmatpush1.msra.mxu0 %v125
    %1071 = vmatprep.subr.mxu0 0.0
    %1072 = vmatpush1.msra.mxu0 %v126
    %1073 = vmatprep.subr.mxu0 0.0
    %1074 = vmatpush1.msra.mxu0 %v127
    %1075 = vmatprep.subr.mxu0 0.0
    %1076 = vmatpush1.msra.mxu0 %v128
    %1077 = vmatprep.subr.mxu0 0.0
    %1078 = vmatpush1.msra.mxu0 0.0
    %1079 = vmatprep.subr.mxu0 0.0
    %1080 = vmatpush1.msra.mxu0 0.0
    %1081 = vmatprep.subr.mxu0 0.0
    %1082 = vmatpush1.msra.mxu0 0.0
    %1083 = vmatprep.subr.mxu0 0.0
    %1084 = vmatpush1.msra.mxu0 0.0
    %1085 = vmatprep.subr.mxu0 0.0
    %1086 = vmatpush1.msra.mxu0 0.0
    %1087 = vmatprep.subr.mxu0 0.0
    %1088 = vmatpush1.msra.mxu0 0.0
    %1089 = vmatprep.subr.mxu0 0.0
    %1090 = vmatpush1.msra.mxu0 0.0
    %1091 = vmatprep.subr.mxu0 0.0
    %1092 = vmatpush1.msra.mxu0 0.0
    %1093 = vmatprep.subr.mxu0 0.0
    %1094 = vmatpush1.msra.mxu0 0.0
    %1095 = vmatprep.subr.mxu0 0.0
    %1096 = vmatpush1.msra.mxu0 0.0
    %1097 = vmatprep.subr.mxu0 0.0
    %1098 = vmatpush1.msra.mxu0 0.0
    %1099 = vmatprep.subr.mxu0 0.0
    %1100 = vmatpush1.msra.mxu0 0.0
    %1101 = vmatprep.subr.mxu0 0.0
    %1102 = vmatpush1.msra.mxu0 0.0
    %1103 = vmatprep.subr.mxu0 0.0
    %1104 = vmatpush1.msra.mxu0 0.0
    %1105 = vmatprep.subr.mxu0 0.0
    %1106 = vmatpush1.msra.mxu0 0.0
    %1107 = vmatprep.subr.mxu0 0.0
    %1108 = vmatpush1.msra.mxu0 0.0
    %1109 = vmatprep.subr.mxu0 0.0
    %1110 = vmatpush1.msra.mxu0 0.0
    %1111 = vmatprep.subr.mxu0 0.0
    %1112 = vmatpush1.msra.mxu0 0.0
    %1113 = vmatprep.subr.mxu0 0.0
    %1114 = vmatpush1.msra.mxu0 0.0
    %1115 = vmatprep.subr.mxu0 0.0
    %1116 = vmatpush1.msra.mxu0 0.0
    %1117 = vmatprep.subr.mxu0 0.0
    %1118 = vmatpush1.msra.mxu0 0.0
    %1119 = vmatprep.subr.mxu0 0.0
    %1120 = vmatpush1.msra.mxu0 0.0
    %1121 = vmatprep.subr.mxu0 0.0
    %1122 = vmatpush1.msra.mxu0 0.0
    %1123 = vmatprep.subr.mxu0 0.0
    %1124 = vmatpush1.msra.mxu0 0.0
    %1125 = vmatprep.subr.mxu0 0.0
    %1126 = vmatpush1.msra.mxu0 0.0
    %1127 = vmatprep.subr.mxu0 0.0
    %1128 = vmatpush1.msra.mxu0 0.0
    %1129 = vmatprep.subr.mxu0 0.0
    %1130 = vmatpush1.msra.mxu0 0.0
    %1131 = vmatprep.subr.mxu0 0.0
    %1132 = vmatpush1.msra.mxu0 0.0
    %1133 = vmatprep.mubr.f32.mxu0 0.0
    %1134 = vmatmul.mubr.f32.gmra.mrb[0].mxu0 %v1067
    %v1135 = vpop.f32.mrb[0].mxu0
    %v1136 = vadd.f32 %v338, %v1135
    %v1137 = vpop.f32.mrb[0].mxu0
    %1138 = vdwg.mxu0
    %v1139 = vsel %vm152, %v887, 0
    %1141 = vmatprep.subr.mxu0 0.0
    %1142 = vmatpush1.msra.mxu0 %v135
    %1143 = vmatprep.subr.mxu0 0.0
    %1144 = vmatpush1.msra.mxu0 %v136
    %1145 = vmatprep.subr.mxu0 0.0
    %1146 = vmatpush1.msra.mxu0 %v137
    %1147 = vmatprep.subr.mxu0 0.0
    %1148 = vmatpush1.msra.mxu0 %v138
    %1149 = vmatprep.subr.mxu0 0.0
    %1150 = vmatpush1.msra.mxu0 0.0
    %1151 = vmatprep.subr.mxu0 0.0
    %1152 = vmatpush1.msra.mxu0 0.0
    %1153 = vmatprep.subr.mxu0 0.0
    %1154 = vmatpush1.msra.mxu0 0.0
    %1155 = vmatprep.subr.mxu0 0.0
    %1156 = vmatpush1.msra.mxu0 0.0
    %1157 = vmatprep.subr.mxu0 0.0
    %1158 = vmatpush1.msra.mxu0 0.0
    %1159 = vmatprep.subr.mxu0 0.0
    %1160 = vmatpush1.msra.mxu0 0.0
    %1161 = vmatprep.subr.mxu0 0.0
    %1162 = vmatpush1.msra.mxu0 0.0
    %1163 = vmatprep.subr.mxu0 0.0
    %1164 = vmatpush1.msra.mxu0 0.0
    %1165 = vmatprep.subr.mxu0 0.0
    %1166 = vmatpush1.msra.mxu0 0.0
    %1167 = vmatprep.subr.mxu0 0.0
    %1168 = vmatpush1.msra.mxu0 0.0
    %1169 = vmatprep.subr.mxu0 0.0
    %1170 = vmatpush1.msra.mxu0 0.0
    %1171 = vmatprep.subr.mxu0 0.0
    %1172 = vmatpush1.msra.mxu0 0.0
    %1173 = vmatprep.subr.mxu0 0.0
    %1174 = vmatpush1.msra.mxu0 0.0
    %1175 = vmatprep.subr.mxu0 0.0
    %1176 = vmatpush1.msra.mxu0 0.0
    %1177 = vmatprep.subr.mxu0 0.0
    %1178 = vmatpush1.msra.mxu0 0.0
    %1179 = vmatprep.subr.mxu0 0.0
    %1180 = vmatpush1.msra.mxu0 0.0
    %1181 = vmatprep.subr.mxu0 0.0
    %1182 = vmatpush1.msra.mxu0 0.0
    %1183 = vmatprep.subr.mxu0 0.0
    %1184 = vmatpush1.msra.mxu0 0.0
    %1185 = vmatprep.subr.mxu0 0.0
    %1186 = vmatpush1.msra.mxu0 0.0
    %1187 = vmatprep.subr.mxu0 0.0
    %1188 = vmatpush1.msra.mxu0 0.0
    %1189 = vmatprep.subr.mxu0 0.0
    %1190 = vmatpush1.msra.mxu0 0.0
    %1191 = vmatprep.subr.mxu0 0.0
    %1192 = vmatpush1.msra.mxu0 0.0
    %1193 = vmatprep.subr.mxu0 0.0
    %1194 = vmatpush1.msra.mxu0 0.0
    %1195 = vmatprep.subr.mxu0 0.0
    %1196 = vmatpush1.msra.mxu0 0.0
    %1197 = vmatprep.subr.mxu0 0.0
    %1198 = vmatpush1.msra.mxu0 0.0
    %1199 = vmatprep.subr.mxu0 0.0
    %1200 = vmatpush1.msra.mxu0 0.0
    %1201 = vmatprep.subr.mxu0 0.0
    %1202 = vmatpush1.msra.mxu0 0.0
    %1203 = vmatprep.subr.mxu0 0.0
    %1204 = vmatpush1.msra.mxu0 0.0
    %1205 = vmatprep.mubr.f32.mxu0 0.0
    %1206 = vmatmul.mubr.f32.gmra.mrb[0].mxu0 %v1139
    %v1207 = vpop.f32.mrb[0].mxu0
    %v1208 = vadd.f32 %v417, %v1207
    %v1209 = vpop.f32.mrb[0].mxu0
    %1210 = vdwg.mxu0
    %v1211 = vadd.f32 %v1136, %v1208
    %v1212 = vxor.u32 %v1211, 2147483648
    %v1213 = vmul.f32 %v1212, 1.442695
    %v1214 = vpow.pop %v1213
    %v1215 = vadd.f32 %v1214, 1.0
    %v1216 = vrcp.pop %v1215
    %v1217 = vmul.f32 1.0, %v1216
    %1219 = vrot.lane.b32.xlu0 %v1208, 64
    %v1220 = vpop.permute.xlu0 %1219
    %v1222 = vmul.f32 %v1217, %v1220
    %1224 = vrot.lane.b32.xlu0 %v1222, 64
    %v1225 = vpop.permute.xlu0 %1224
    %v1227 = vadd.f32 %v1136, %v1225
    %v1228 = vtanh.pop %v1227
    %v1229 = vsub.f32 1.0, %v1217
    %1231 = vrot.lane.b32.xlu0 %v1228, 96
    %v1232 = vpop.permute.xlu0 %1231
    %v1234 = vmul.f32 %v1229, %v1232
    %v1235 = vmul.f32 %v1217, %v878
    %v1236 = vadd.f32 %v1234, %v1235
    %1238 = vrot.lane.b32.xlu0 %v1065, 96
    %v1239 = vpop.permute.xlu0 %1238
    %s1241 = scalar_lea.vmem %s10, 4
    %1242 = vst.msk [vmem:[%s1241] sm:$0x3] %vm525, %v1239
    %1244 = vrot.lane.b32.xlu0 %v1236, 96
    %v1245 = vpop.permute.xlu0 %1244
    %s1247 = scalar_lea.vmem %s111, 10
    %1248 = vst.msk [vmem:[%s1247] sm:$0x3] %vm525, %v1245
    %s1249 = scalar_lea.vmem %s0, 6
    %v1250 = vld [vmem:[%s1249] sm:$0x3]
    %s1251 = scalar_lea.vmem %s103, 8
    %v1252 = vld [vmem:[%s1251] sm:$0x3]
    %v1254 = vsel %vm152, %v1250, 0
    %1256 = vmatprep.subr.mxu0 0.0
    %1257 = vmatpush1.msra.mxu0 %v121
    %1258 = vmatprep.subr.mxu0 0.0
    %1259 = vmatpush1.msra.mxu0 %v122
    %1260 = vmatprep.subr.mxu0 0.0
    %1261 = vmatpush1.msra.mxu0 %v123
    %1262 = vmatprep.subr.mxu0 0.0
    %1263 = vmatpush1.msra.mxu0 %v124
    %1264 = vmatprep.subr.mxu0 0.0
    %1265 = vmatpush1.msra.mxu0 0.0
    %1266 = vmatprep.subr.mxu0 0.0
    %1267 = vmatpush1.msra.mxu0 0.0
    %1268 = vmatprep.subr.mxu0 0.0
    %1269 = vmatpush1.msra.mxu0 0.0
    %1270 = vmatprep.subr.mxu0 0.0
    %1271 = vmatpush1.msra.mxu0 0.0
    %1272 = vmatprep.subr.mxu0 0.0
    %1273 = vmatpush1.msra.mxu0 0.0
    %1274 = vmatprep.subr.mxu0 0.0
    %1275 = vmatpush1.msra.mxu0 0.0
    %1276 = vmatprep.subr.mxu0 0.0
    %1277 = vmatpush1.msra.mxu0 0.0
    %1278 = vmatprep.subr.mxu0 0.0
    %1279 = vmatpush1.msra.mxu0 0.0
    %1280 = vmatprep.subr.mxu0 0.0
    %1281 = vmatpush1.msra.mxu0 0.0
    %1282 = vmatprep.subr.mxu0 0.0
    %1283 = vmatpush1.msra.mxu0 0.0
    %1284 = vmatprep.subr.mxu0 0.0
    %1285 = vmatpush1.msra.mxu0 0.0
    %1286 = vmatprep.subr.mxu0 0.0
    %1287 = vmatpush1.msra.mxu0 0.0
    %1288 = vmatprep.subr.mxu0 0.0
    %1289 = vmatpush1.msra.mxu0 0.0
    %1290 = vmatprep.subr.mxu0 0.0
    %1291 = vmatpush1.msra.mxu0 0.0
    %1292 = vmatprep.subr.mxu0 0.0
    %1293 = vmatpush1.msra.mxu0 0.0
    %1294 = vmatprep.subr.mxu0 0.0
    %1295 = vmatpush1.msra.mxu0 0.0
    %1296 = vmatprep.subr.mxu0 0.0
    %1297 = vmatpush1.msra.mxu0 0.0
    %1298 = vmatprep.subr.mxu0 0.0
    %1299 = vmatpush1.msra.mxu0 0.0
    %1300 = vmatprep.subr.mxu0 0.0
    %1301 = vmatpush1.msra.mxu0 0.0
    %1302 = vmatprep.subr.mxu0 0.0
    %1303 = vmatpush1.msra.mxu0 0.0
    %1304 = vmatprep.subr.mxu0 0.0
    %1305 = vmatpush1.msra.mxu0 0.0
    %1306 = vmatprep.subr.mxu0 0.0
    %1307 = vmatpush1.msra.mxu0 0.0
    %1308 = vmatprep.subr.mxu0 0.0
    %1309 = vmatpush1.msra.mxu0 0.0
    %1310 = vmatprep.subr.mxu0 0.0
    %1311 = vmatpush1.msra.mxu0 0.0
    %1312 = vmatprep.subr.mxu0 0.0
    %1313 = vmatpush1.msra.mxu0 0.0
    %1314 = vmatprep.subr.mxu0 0.0
    %1315 = vmatpush1.msra.mxu0 0.0
    %1316 = vmatprep.subr.mxu0 0.0
    %1317 = vmatpush1.msra.mxu0 0.0
    %1318 = vmatprep.subr.mxu0 0.0
    %1319 = vmatpush1.msra.mxu0 0.0
    %1320 = vmatprep.mubr.f32.mxu0 0.0
    %1321 = vmatmul.mubr.f32.gmra.mrb[0].mxu0 %v1254
    %v1322 = vpop.f32.mrb[0].mxu0
    %v1323 = vadd.f32 %v150, %v1322
    %v1324 = vpop.f32.mrb[0].mxu0
    %1325 = vdwg.mxu0
    %v1326 = vsel %vm152, %v1239, 0
    %1328 = vmatprep.subr.mxu0 0.0
    %1329 = vmatpush1.msra.mxu0 %v131
    %1330 = vmatprep.subr.mxu0 0.0
    %1331 = vmatpush1.msra.mxu0 %v132
    %1332 = vmatprep.subr.mxu0 0.0
    %1333 = vmatpush1.msra.mxu0 %v133
    %1334 = vmatprep.subr.mxu0 0.0
    %1335 = vmatpush1.msra.mxu0 %v134
    %1336 = vmatprep.subr.mxu0 0.0
    %1337 = vmatpush1.msra.mxu0 0.0
    %1338 = vmatprep.subr.mxu0 0.0
    %1339 = vmatpush1.msra.mxu0 0.0
    %1340 = vmatprep.subr.mxu0 0.0
    %1341 = vmatpush1.msra.mxu0 0.0
    %1342 = vmatprep.subr.mxu0 0.0
    %1343 = vmatpush1.msra.mxu0 0.0
    %1344 = vmatprep.subr.mxu0 0.0
    %1345 = vmatpush1.msra.mxu0 0.0
    %1346 = vmatprep.subr.mxu0 0.0
    %1347 = vmatpush1.msra.mxu0 0.0
    %1348 = vmatprep.subr.mxu0 0.0
    %1349 = vmatpush1.msra.mxu0 0.0
    %1350 = vmatprep.subr.mxu0 0.0
    %1351 = vmatpush1.msra.mxu0 0.0
    %1352 = vmatprep.subr.mxu0 0.0
    %1353 = vmatpush1.msra.mxu0 0.0
    %1354 = vmatprep.subr.mxu0 0.0
    %1355 = vmatpush1.msra.mxu0 0.0
    %1356 = vmatprep.subr.mxu0 0.0
    %1357 = vmatpush1.msra.mxu0 0.0
    %1358 = vmatprep.subr.mxu0 0.0
    %1359 = vmatpush1.msra.mxu0 0.0
    %1360 = vmatprep.subr.mxu0 0.0
    %1361 = vmatpush1.msra.mxu0 0.0
    %1362 = vmatprep.subr.mxu0 0.0
    %1363 = vmatpush1.msra.mxu0 0.0
    %1364 = vmatprep.subr.mxu0 0.0
    %1365 = vmatpush1.msra.mxu0 0.0
    %1366 = vmatprep.subr.mxu0 0.0
    %1367 = vmatpush1.msra.mxu0 0.0
    %1368 = vmatprep.subr.mxu0 0.0
    %1369 = vmatpush1.msra.mxu0 0.0
    %1370 = vmatprep.subr.mxu0 0.0
    %1371 = vmatpush1.msra.mxu0 0.0
    %1372 = vmatprep.subr.mxu0 0.0
    %1373 = vmatpush1.msra.mxu0 0.0
    %1374 = vmatprep.subr.mxu0 0.0
    %1375 = vmatpush1.msra.mxu0 0.0
    %1376 = vmatprep.subr.mxu0 0.0
    %1377 = vmatpush1.msra.mxu0 0.0
    %1378 = vmatprep.subr.mxu0 0.0
    %1379 = vmatpush1.msra.mxu0 0.0
    %1380 = vmatprep.subr.mxu0 0.0
    %1381 = vmatpush1.msra.mxu0 0.0
    %1382 = vmatprep.subr.mxu0 0.0
    %1383 = vmatpush1.msra.mxu0 0.0
    %1384 = vmatprep.subr.mxu0 0.0
    %1385 = vmatpush1.msra.mxu0 0.0
    %1386 = vmatprep.subr.mxu0 0.0
    %1387 = vmatpush1.msra.mxu0 0.0
    %1388 = vmatprep.subr.mxu0 0.0
    %1389 = vmatpush1.msra.mxu0 0.0
    %1390 = vmatprep.subr.mxu0 0.0
    %1391 = vmatpush1.msra.mxu0 0.0
    %1392 = vmatprep.mubr.f32.mxu0 0.0
    %1393 = vmatmul.mubr.f32.gmra.mrb[0].mxu0 %v1326
    %v1394 = vpop.f32.mrb[0].mxu0
    %v1395 = vadd.f32 %v230, %v1394
    %v1396 = vpop.f32.mrb[0].mxu0
    %1397 = vdwg.mxu0
    %v1398 = vadd.f32 %v1323, %v1395
    %v1399 = vxor.u32 %v1398, 2147483648
    %v1400 = vmul.f32 %v1399, 1.442695
    %v1401 = vpow.pop %v1400
    %v1402 = vadd.f32 %v1401, 1.0
    %v1403 = vrcp.pop %v1402
    %v1404 = vmul.f32 1.0, %v1403
    %1406 = vrot.lane.b32.xlu0 %v1395, 64
    %v1407 = vpop.permute.xlu0 %1406
    %v1409 = vmul.f32 %v1404, %v1407
    %1411 = vrot.lane.b32.xlu0 %v1409, 64
    %v1412 = vpop.permute.xlu0 %1411
    %v1414 = vadd.f32 %v1323, %v1412
    %v1415 = vtanh.pop %v1414
    %v1416 = vsub.f32 1.0, %v1404
    %1418 = vrot.lane.b32.xlu0 %v1415, 96
    %v1419 = vpop.permute.xlu0 %1418
    %v1421 = vmul.f32 %v1416, %v1419
    %v1422 = vmul.f32 %v1404, %v1065
    %v1423 = vadd.f32 %v1421, %v1422
    %v1425 = vsel %vm152, %v1252, 0
    %1427 = vmatprep.subr.mxu0 0.0
    %1428 = vmatpush1.msra.mxu0 %v125
    %1429 = vmatprep.subr.mxu0 0.0
    %1430 = vmatpush1.msra.mxu0 %v126
    %1431 = vmatprep.subr.mxu0 0.0
    %1432 = vmatpush1.msra.mxu0 %v127
    %1433 = vmatprep.subr.mxu0 0.0
    %1434 = vmatpush1.msra.mxu0 %v128
    %1435 = vmatprep.subr.mxu0 0.0
    %1436 = vmatpush1.msra.mxu0 0.0
    %1437 = vmatprep.subr.mxu0 0.0
    %1438 = vmatpush1.msra.mxu0 0.0
    %1439 = vmatprep.subr.mxu0 0.0
    %1440 = vmatpush1.msra.mxu0 0.0
    %1441 = vmatprep.subr.mxu0 0.0
    %1442 = vmatpush1.msra.mxu0 0.0
    %1443 = vmatprep.subr.mxu0 0.0
    %1444 = vmatpush1.msra.mxu0 0.0
    %1445 = vmatprep.subr.mxu0 0.0
    %1446 = vmatpush1.msra.mxu0 0.0
    %1447 = vmatprep.subr.mxu0 0.0
    %1448 = vmatpush1.msra.mxu0 0.0
    %1449 = vmatprep.subr.mxu0 0.0
    %1450 = vmatpush1.msra.mxu0 0.0
    %1451 = vmatprep.subr.mxu0 0.0
    %1452 = vmatpush1.msra.mxu0 0.0
    %1453 = vmatprep.subr.mxu0 0.0
    %1454 = vmatpush1.msra.mxu0 0.0
    %1455 = vmatprep.subr.mxu0 0.0
    %1456 = vmatpush1.msra.mxu0 0.0
    %1457 = vmatprep.subr.mxu0 0.0
    %1458 = vmatpush1.msra.mxu0 0.0
    %1459 = vmatprep.subr.mxu0 0.0
    %1460 = vmatpush1.msra.mxu0 0.0
    %1461 = vmatprep.subr.mxu0 0.0
    %1462 = vmatpush1.msra.mxu0 0.0
    %1463 = vmatprep.subr.mxu0 0.0
    %1464 = vmatpush1.msra.mxu0 0.0
    %1465 = vmatprep.subr.mxu0 0.0
    %1466 = vmatpush1.msra.mxu0 0.0
    %1467 = vmatprep.subr.mxu0 0.0
    %1468 = vmatpush1.msra.mxu0 0.0
    %1469 = vmatprep.subr.mxu0 0.0
    %1470 = vmatpush1.msra.mxu0 0.0
    %1471 = vmatprep.subr.mxu0 0.0
    %1472 = vmatpush1.msra.mxu0 0.0
    %1473 = vmatprep.subr.mxu0 0.0
    %1474 = vmatpush1.msra.mxu0 0.0
    %1475 = vmatprep.subr.mxu0 0.0
    %1476 = vmatpush1.msra.mxu0 0.0
    %1477 = vmatprep.subr.mxu0 0.0
    %1478 = vmatpush1.msra.mxu0 0.0
    %1479 = vmatprep.subr.mxu0 0.0
    %1480 = vmatpush1.msra.mxu0 0.0
    %1481 = vmatprep.subr.mxu0 0.0
    %1482 = vmatpush1.msra.mxu0 0.0
    %1483 = vmatprep.subr.mxu0 0.0
    %1484 = vmatpush1.msra.mxu0 0.0
    %1485 = vmatprep.subr.mxu0 0.0
    %1486 = vmatpush1.msra.mxu0 0.0
    %1487 = vmatprep.subr.mxu0 0.0
    %1488 = vmatpush1.msra.mxu0 0.0
    %1489 = vmatprep.subr.mxu0 0.0
    %1490 = vmatpush1.msra.mxu0 0.0
    %1491 = vmatprep.mubr.f32.mxu0 0.0
    %1492 = vmatmul.mubr.f32.gmra.mrb[0].mxu0 %v1425
    %v1493 = vpop.f32.mrb[0].mxu0
    %v1494 = vadd.f32 %v338, %v1493
    %v1495 = vpop.f32.mrb[0].mxu0
    %1496 = vdwg.mxu0
    %v1497 = vsel %vm152, %v1245, 0
    %1499 = vmatprep.subr.mxu0 0.0
    %1500 = vmatpush1.msra.mxu0 %v135
    %1501 = vmatprep.subr.mxu0 0.0
    %1502 = vmatpush1.msra.mxu0 %v136
    %1503 = vmatprep.subr.mxu0 0.0
    %1504 = vmatpush1.msra.mxu0 %v137
    %1505 = vmatprep.subr.mxu0 0.0
    %1506 = vmatpush1.msra.mxu0 %v138
    %1507 = vmatprep.subr.mxu0 0.0
    %1508 = vmatpush1.msra.mxu0 0.0
    %1509 = vmatprep.subr.mxu0 0.0
    %1510 = vmatpush1.msra.mxu0 0.0
    %1511 = vmatprep.subr.mxu0 0.0
    %1512 = vmatpush1.msra.mxu0 0.0
    %1513 = vmatprep.subr.mxu0 0.0
    %1514 = vmatpush1.msra.mxu0 0.0
    %1515 = vmatprep.subr.mxu0 0.0
    %1516 = vmatpush1.msra.mxu0 0.0
    %1517 = vmatprep.subr.mxu0 0.0
    %1518 = vmatpush1.msra.mxu0 0.0
    %1519 = vmatprep.subr.mxu0 0.0
    %1520 = vmatpush1.msra.mxu0 0.0
    %1521 = vmatprep.subr.mxu0 0.0
    %1522 = vmatpush1.msra.mxu0 0.0
    %1523 = vmatprep.subr.mxu0 0.0
    %1524 = vmatpush1.msra.mxu0 0.0
    %1525 = vmatprep.subr.mxu0 0.0
    %1526 = vmatpush1.msra.mxu0 0.0
    %1527 = vmatprep.subr.mxu0 0.0
    %1528 = vmatpush1.msra.mxu0 0.0
    %1529 = vmatprep.subr.mxu0 0.0
    %1530 = vmatpush1.msra.mxu0 0.0
    %1531 = vmatprep.subr.mxu0 0.0
    %1532 = vmatpush1.msra.mxu0 0.0
    %1533 = vmatprep.subr.mxu0 0.0
    %1534 = vmatpush1.msra.mxu0 0.0
    %1535 = vmatprep.subr.mxu0 0.0
    %1536 = vmatpush1.msra.mxu0 0.0
    %1537 = vmatprep.subr.mxu0 0.0
    %1538 = vmatpush1.msra.mxu0 0.0
    %1539 = vmatprep.subr.mxu0 0.0
    %1540 = vmatpush1.msra.mxu0 0.0
    %1541 = vmatprep.subr.mxu0 0.0
    %1542 = vmatpush1.msra.mxu0 0.0
    %1543 = vmatprep.subr.mxu0 0.0
    %1544 = vmatpush1.msra.mxu0 0.0
    %1545 = vmatprep.subr.mxu0 0.0
    %1546 = vmatpush1.msra.mxu0 0.0
    %1547 = vmatprep.subr.mxu0 0.0
    %1548 = vmatpush1.msra.mxu0 0.0
    %1549 = vmatprep.subr.mxu0 0.0
    %1550 = vmatpush1.msra.mxu0 0.0
    %1551 = vmatprep.subr.mxu0 0.0
    %1552 = vmatpush1.msra.mxu0 0.0
    %1553 = vmatprep.subr.mxu0 0.0
    %1554 = vmatpush1.msra.mxu0 0.0
    %1555 = vmatprep.subr.mxu0 0.0
    %1556 = vmatpush1.msra.mxu0 0.0
    %1557 = vmatprep.subr.mxu0 0.0
    %1558 = vmatpush1.msra.mxu0 0.0
    %1559 = vmatprep.subr.mxu0 0.0
    %1560 = vmatpush1.msra.mxu0 0.0
    %1561 = vmatprep.subr.mxu0 0.0
    %1562 = vmatpush1.msra.mxu0 0.0
    %1563 = vmatprep.mubr.f32.mxu0 0.0
    %1564 = vmatmul.mubr.f32.gmra.mrb[0].mxu0 %v1497
    %v1565 = vpop.f32.mrb[0].mxu0
    %v1566 = vadd.f32 %v417, %v1565
    %v1567 = vpop.f32.mrb[0].mxu0
    %1568 = vdwg.mxu0
    %v1569 = vadd.f32 %v1494, %v1566
    %v1570 = vxor.u32 %v1569, 2147483648
    %v1571 = vmul.f32 %v1570, 1.442695
    %v1572 = vpow.pop %v1571
    %v1573 = vadd.f32 %v1572, 1.0
    %v1574 = vrcp.pop %v1573
    %v1575 = vmul.f32 1.0, %v1574
    %1577 = vrot.lane.b32.xlu0 %v1566, 64
    %v1578 = vpop.permute.xlu0 %1577
    %v1580 = vmul.f32 %v1575, %v1578
    %1582 = vrot.lane.b32.xlu0 %v1580, 64
    %v1583 = vpop.permute.xlu0 %1582
    %v1585 = vadd.f32 %v1494, %v1583
    %v1586 = vtanh.pop %v1585
    %v1587 = vsub.f32 1.0, %v1575
    %1589 = vrot.lane.b32.xlu0 %v1586, 96
    %v1590 = vpop.permute.xlu0 %1589
    %v1592 = vmul.f32 %v1587, %v1590
    %v1593 = vmul.f32 %v1575, %v1236
    %v1594 = vadd.f32 %v1592, %v1593
    %1596 = vrot.lane.b32.xlu0 %v1423, 96
    %v1597 = vpop.permute.xlu0 %1596
    %s1599 = scalar_lea.vmem %s10, 6
    %1600 = vst.msk [vmem:[%s1599] sm:$0x3] %vm525, %v1597
    %1602 = vrot.lane.b32.xlu0 %v1594, 96
    %v1603 = vpop.permute.xlu0 %1602
    %s1605 = scalar_lea.vmem %s111, 8
    %1606 = vst.msk [vmem:[%s1605] sm:$0x3] %vm525, %v1603
    %s1607 = scalar_lea.vmem %s0, 8
    %v1608 = vld [vmem:[%s1607] sm:$0x3]
    %s1609 = scalar_lea.vmem %s103, 6
    %v1610 = vld [vmem:[%s1609] sm:$0x3]
    %v1612 = vsel %vm152, %v1608, 0
    %1614 = vmatprep.subr.mxu0 0.0
    %1615 = vmatpush1.msra.mxu0 %v121
    %1616 = vmatprep.subr.mxu0 0.0
    %1617 = vmatpush1.msra.mxu0 %v122
    %1618 = vmatprep.subr.mxu0 0.0
    %1619 = vmatpush1.msra.mxu0 %v123
    %1620 = vmatprep.subr.mxu0 0.0
    %1621 = vmatpush1.msra.mxu0 %v124
    %1622 = vmatprep.subr.mxu0 0.0
    %1623 = vmatpush1.msra.mxu0 0.0
    %1624 = vmatprep.subr.mxu0 0.0
    %1625 = vmatpush1.msra.mxu0 0.0
    %1626 = vmatprep.subr.mxu0 0.0
    %1627 = vmatpush1.msra.mxu0 0.0
    %1628 = vmatprep.subr.mxu0 0.0
    %1629 = vmatpush1.msra.mxu0 0.0
    %1630 = vmatprep.subr.mxu0 0.0
    %1631 = vmatpush1.msra.mxu0 0.0
    %1632 = vmatprep.subr.mxu0 0.0
    %1633 = vmatpush1.msra.mxu0 0.0
    %1634 = vmatprep.subr.mxu0 0.0
    %1635 = vmatpush1.msra.mxu0 0.0
    %1636 = vmatprep.subr.mxu0 0.0
    %1637 = vmatpush1.msra.mxu0 0.0
    %1638 = vmatprep.subr.mxu0 0.0
    %1639 = vmatpush1.msra.mxu0 0.0
    %1640 = vmatprep.subr.mxu0 0.0
    %1641 = vmatpush1.msra.mxu0 0.0
    %1642 = vmatprep.subr.mxu0 0.0
    %1643 = vmatpush1.msra.mxu0 0.0
    %1644 = vmatprep.subr.mxu0 0.0
    %1645 = vmatpush1.msra.mxu0 0.0
    %1646 = vmatprep.subr.mxu0 0.0
    %1647 = vmatpush1.msra.mxu0 0.0
    %1648 = vmatprep.subr.mxu0 0.0
    %1649 = vmatpush1.msra.mxu0 0.0
    %1650 = vmatprep.subr.mxu0 0.0
    %1651 = vmatpush1.msra.mxu0 0.0
    %1652 = vmatprep.subr.mxu0 0.0
    %1653 = vmatpush1.msra.mxu0 0.0
    %1654 = vmatprep.subr.mxu0 0.0
    %1655 = vmatpush1.msra.mxu0 0.0
    %1656 = vmatprep.subr.mxu0 0.0
    %1657 = vmatpush1.msra.mxu0 0.0
    %1658 = vmatprep.subr.mxu0 0.0
    %1659 = vmatpush1.msra.mxu0 0.0
    %1660 = vmatprep.subr.mxu0 0.0
    %1661 = vmatpush1.msra.mxu0 0.0
    %1662 = vmatprep.subr.mxu0 0.0
    %1663 = vmatpush1.msra.mxu0 0.0
    %1664 = vmatprep.subr.mxu0 0.0
    %1665 = vmatpush1.msra.mxu0 0.0
    %1666 = vmatprep.subr.mxu0 0.0
    %1667 = vmatpush1.msra.mxu0 0.0
    %1668 = vmatprep.subr.mxu0 0.0
    %1669 = vmatpush1.msra.mxu0 0.0
    %1670 = vmatprep.subr.mxu0 0.0
    %1671 = vmatpush1.msra.mxu0 0.0
    %1672 = vmatprep.subr.mxu0 0.0
    %1673 = vmatpush1.msra.mxu0 0.0
    %1674 = vmatprep.subr.mxu0 0.0
    %1675 = vmatpush1.msra.mxu0 0.0
    %1676 = vmatprep.subr.mxu0 0.0
    %1677 = vmatpush1.msra.mxu0 0.0
    %1678 = vmatprep.mubr.f32.mxu0 0.0
    %1679 = vmatmul.mubr.f32.gmra.mrb[0].mxu0 %v1612
    %v1680 = vpop.f32.mrb[0].mxu0
    %v1681 = vadd.f32 %v150, %v1680
    %v1682 = vpop.f32.mrb[0].mxu0
    %1683 = vdwg.mxu0
    %v1684 = vsel %vm152, %v1597, 0
    %1686 = vmatprep.subr.mxu0 0.0
    %1687 = vmatpush1.msra.mxu0 %v131
    %1688 = vmatprep.subr.mxu0 0.0
    %1689 = vmatpush1.msra.mxu0 %v132
    %1690 = vmatprep.subr.mxu0 0.0
    %1691 = vmatpush1.msra.mxu0 %v133
    %1692 = vmatprep.subr.mxu0 0.0
    %1693 = vmatpush1.msra.mxu0 %v134
    %1694 = vmatprep.subr.mxu0 0.0
    %1695 = vmatpush1.msra.mxu0 0.0
    %1696 = vmatprep.subr.mxu0 0.0
    %1697 = vmatpush1.msra.mxu0 0.0
    %1698 = vmatprep.subr.mxu0 0.0
    %1699 = vmatpush1.msra.mxu0 0.0
    %1700 = vmatprep.subr.mxu0 0.0
    %1701 = vmatpush1.msra.mxu0 0.0
    %1702 = vmatprep.subr.mxu0 0.0
    %1703 = vmatpush1.msra.mxu0 0.0
    %1704 = vmatprep.subr.mxu0 0.0
    %1705 = vmatpush1.msra.mxu0 0.0
    %1706 = vmatprep.subr.mxu0 0.0
    %1707 = vmatpush1.msra.mxu0 0.0
    %1708 = vmatprep.subr.mxu0 0.0
    %1709 = vmatpush1.msra.mxu0 0.0
    %1710 = vmatprep.subr.mxu0 0.0
    %1711 = vmatpush1.msra.mxu0 0.0
    %1712 = vmatprep.subr.mxu0 0.0
    %1713 = vmatpush1.msra.mxu0 0.0
    %1714 = vmatprep.subr.mxu0 0.0
    %1715 = vmatpush1.msra.mxu0 0.0
    %1716 = vmatprep.subr.mxu0 0.0
    %1717 = vmatpush1.msra.mxu0 0.0
    %1718 = vmatprep.subr.mxu0 0.0
    %1719 = vmatpush1.msra.mxu0 0.0
    %1720 = vmatprep.subr.mxu0 0.0
    %1721 = vmatpush1.msra.mxu0 0.0
    %1722 = vmatprep.subr.mxu0 0.0
    %1723 = vmatpush1.msra.mxu0 0.0
    %1724 = vmatprep.subr.mxu0 0.0
    %1725 = vmatpush1.msra.mxu0 0.0
    %1726 = vmatprep.subr.mxu0 0.0
    %1727 = vmatpush1.msra.mxu0 0.0
    %1728 = vmatprep.subr.mxu0 0.0
    %1729 = vmatpush1.msra.mxu0 0.0
    %1730 = vmatprep.subr.mxu0 0.0
    %1731 = vmatpush1.msra.mxu0 0.0
    %1732 = vmatprep.subr.mxu0 0.0
    %1733 = vmatpush1.msra.mxu0 0.0
    %1734 = vmatprep.subr.mxu0 0.0
    %1735 = vmatpush1.msra.mxu0 0.0
    %1736 = vmatprep.subr.mxu0 0.0
    %1737 = vmatpush1.msra.mxu0 0.0
    %1738 = vmatprep.subr.mxu0 0.0
    %1739 = vmatpush1.msra.mxu0 0.0
    %1740 = vmatprep.subr.mxu0 0.0
    %1741 = vmatpush1.msra.mxu0 0.0
    %1742 = vmatprep.subr.mxu0 0.0
    %1743 = vmatpush1.msra.mxu0 0.0
    %1744 = vmatprep.subr.mxu0 0.0
    %1745 = vmatpush1.msra.mxu0 0.0
    %1746 = vmatprep.subr.mxu0 0.0
    %1747 = vmatpush1.msra.mxu0 0.0
    %1748 = vmatprep.subr.mxu0 0.0
    %1749 = vmatpush1.msra.mxu0 0.0
    %1750 = vmatprep.mubr.f32.mxu0 0.0
    %1751 = vmatmul.mubr.f32.gmra.mrb[0].mxu0 %v1684
    %v1752 = vpop.f32.mrb[0].mxu0
    %v1753 = vadd.f32 %v230, %v1752
    %v1754 = vpop.f32.mrb[0].mxu0
    %1755 = vdwg.mxu0
    %v1756 = vadd.f32 %v1681, %v1753
    %v1757 = vxor.u32 %v1756, 2147483648
    %v1758 = vmul.f32 %v1757, 1.442695
    %v1759 = vpow.pop %v1758
    %v1760 = vadd.f32 %v1759, 1.0
    %v1761 = vrcp.pop %v1760
    %v1762 = vmul.f32 1.0, %v1761
    %1764 = vrot.lane.b32.xlu0 %v1753, 64
    %v1765 = vpop.permute.xlu0 %1764
    %v1767 = vmul.f32 %v1762, %v1765
    %1769 = vrot.lane.b32.xlu0 %v1767, 64
    %v1770 = vpop.permute.xlu0 %1769
    %v1772 = vadd.f32 %v1681, %v1770
    %v1773 = vtanh.pop %v1772
    %v1774 = vsub.f32 1.0, %v1762
    %1776 = vrot.lane.b32.xlu0 %v1773, 96
    %v1777 = vpop.permute.xlu0 %1776
    %v1779 = vmul.f32 %v1774, %v1777
    %v1780 = vmul.f32 %v1762, %v1423
    %v1781 = vadd.f32 %v1779, %v1780
    %v1783 = vsel %vm152, %v1610, 0
    %1785 = vmatprep.subr.mxu0 0.0
    %1786 = vmatpush1.msra.mxu0 %v125
    %1787 = vmatprep.subr.mxu0 0.0
    %1788 = vmatpush1.msra.mxu0 %v126
    %1789 = vmatprep.subr.mxu0 0.0
    %1790 = vmatpush1.msra.mxu0 %v127
    %1791 = vmatprep.subr.mxu0 0.0
    %1792 = vmatpush1.msra.mxu0 %v128
    %1793 = vmatprep.subr.mxu0 0.0
    %1794 = vmatpush1.msra.mxu0 0.0
    %1795 = vmatprep.subr.mxu0 0.0
    %1796 = vmatpush1.msra.mxu0 0.0
    %1797 = vmatprep.subr.mxu0 0.0
    %1798 = vmatpush1.msra.mxu0 0.0
    %1799 = vmatprep.subr.mxu0 0.0
    %1800 = vmatpush1.msra.mxu0 0.0
    %1801 = vmatprep.subr.mxu0 0.0
    %1802 = vmatpush1.msra.mxu0 0.0
    %1803 = vmatprep.subr.mxu0 0.0
    %1804 = vmatpush1.msra.mxu0 0.0
    %1805 = vmatprep.subr.mxu0 0.0
    %1806 = vmatpush1.msra.mxu0 0.0
    %1807 = vmatprep.subr.mxu0 0.0
    %1808 = vmatpush1.msra.mxu0 0.0
    %1809 = vmatprep.subr.mxu0 0.0
    %1810 = vmatpush1.msra.mxu0 0.0
    %1811 = vmatprep.subr.mxu0 0.0
    %1812 = vmatpush1.msra.mxu0 0.0
    %1813 = vmatprep.subr.mxu0 0.0
    %1814 = vmatpush1.msra.mxu0 0.0
    %1815 = vmatprep.subr.mxu0 0.0
    %1816 = vmatpush1.msra.mxu0 0.0
    %1817 = vmatprep.subr.mxu0 0.0
    %1818 = vmatpush1.msra.mxu0 0.0
    %1819 = vmatprep.subr.mxu0 0.0
    %1820 = vmatpush1.msra.mxu0 0.0
    %1821 = vmatprep.subr.mxu0 0.0
    %1822 = vmatpush1.msra.mxu0 0.0
    %1823 = vmatprep.subr.mxu0 0.0
    %1824 = vmatpush1.msra.mxu0 0.0
    %1825 = vmatprep.subr.mxu0 0.0
    %1826 = vmatpush1.msra.mxu0 0.0
    %1827 = vmatprep.subr.mxu0 0.0
    %1828 = vmatpush1.msra.mxu0 0.0
    %1829 = vmatprep.subr.mxu0 0.0
    %1830 = vmatpush1.msra.mxu0 0.0
    %1831 = vmatprep.subr.mxu0 0.0
    %1832 = vmatpush1.msra.mxu0 0.0
    %1833 = vmatprep.subr.mxu0 0.0
    %1834 = vmatpush1.msra.mxu0 0.0
    %1835 = vmatprep.subr.mxu0 0.0
    %1836 = vmatpush1.msra.mxu0 0.0
    %1837 = vmatprep.subr.mxu0 0.0
    %1838 = vmatpush1.msra.mxu0 0.0
    %1839 = vmatprep.subr.mxu0 0.0
    %1840 = vmatpush1.msra.mxu0 0.0
    %1841 = vmatprep.subr.mxu0 0.0
    %1842 = vmatpush1.msra.mxu0 0.0
    %1843 = vmatprep.subr.mxu0 0.0
    %1844 = vmatpush1.msra.mxu0 0.0
    %1845 = vmatprep.subr.mxu0 0.0
    %1846 = vmatpush1.msra.mxu0 0.0
    %1847 = vmatprep.subr.mxu0 0.0
    %1848 = vmatpush1.msra.mxu0 0.0
    %1849 = vmatprep.mubr.f32.mxu0 0.0
    %1850 = vmatmul.mubr.f32.gmra.mrb[0].mxu0 %v1783
    %v1851 = vpop.f32.mrb[0].mxu0
    %v1852 = vadd.f32 %v338, %v1851
    %v1853 = vpop.f32.mrb[0].mxu0
    %1854 = vdwg.mxu0
    %v1855 = vsel %vm152, %v1603, 0
    %1857 = vmatprep.subr.mxu0 0.0
    %1858 = vmatpush1.msra.mxu0 %v135
    %1859 = vmatprep.subr.mxu0 0.0
    %1860 = vmatpush1.msra.mxu0 %v136
    %1861 = vmatprep.subr.mxu0 0.0
    %1862 = vmatpush1.msra.mxu0 %v137
    %1863 = vmatprep.subr.mxu0 0.0
    %1864 = vmatpush1.msra.mxu0 %v138
    %1865 = vmatprep.subr.mxu0 0.0
    %1866 = vmatpush1.msra.mxu0 0.0
    %1867 = vmatprep.subr.mxu0 0.0
    %1868 = vmatpush1.msra.mxu0 0.0
    %1869 = vmatprep.subr.mxu0 0.0
    %1870 = vmatpush1.msra.mxu0 0.0
    %1871 = vmatprep.subr.mxu0 0.0
    %1872 = vmatpush1.msra.mxu0 0.0
    %1873 = vmatprep.subr.mxu0 0.0
    %1874 = vmatpush1.msra.mxu0 0.0
    %1875 = vmatprep.subr.mxu0 0.0
    %1876 = vmatpush1.msra.mxu0 0.0
    %1877 = vmatprep.subr.mxu0 0.0
    %1878 = vmatpush1.msra.mxu0 0.0
    %1879 = vmatprep.subr.mxu0 0.0
    %1880 = vmatpush1.msra.mxu0 0.0
    %1881 = vmatprep.subr.mxu0 0.0
    %1882 = vmatpush1.msra.mxu0 0.0
    %1883 = vmatprep.subr.mxu0 0.0
    %1884 = vmatpush1.msra.mxu0 0.0
    %1885 = vmatprep.subr.mxu0 0.0
    %1886 = vmatpush1.msra.mxu0 0.0
    %1887 = vmatprep.subr.mxu0 0.0
    %1888 = vmatpush1.msra.mxu0 0.0
    %1889 = vmatprep.subr.mxu0 0.0
    %1890 = vmatpush1.msra.mxu0 0.0
    %1891 = vmatprep.subr.mxu0 0.0
    %1892 = vmatpush1.msra.mxu0 0.0
    %1893 = vmatprep.subr.mxu0 0.0
    %1894 = vmatpush1.msra.mxu0 0.0
    %1895 = vmatprep.subr.mxu0 0.0
    %1896 = vmatpush1.msra.mxu0 0.0
    %1897 = vmatprep.subr.mxu0 0.0
    %1898 = vmatpush1.msra.mxu0 0.0
    %1899 = vmatprep.subr.mxu0 0.0
    %1900 = vmatpush1.msra.mxu0 0.0
    %1901 = vmatprep.subr.mxu0 0.0
    %1902 = vmatpush1.msra.mxu0 0.0
    %1903 = vmatprep.subr.mxu0 0.0
    %1904 = vmatpush1.msra.mxu0 0.0
    %1905 = vmatprep.subr.mxu0 0.0
    %1906 = vmatpush1.msra.mxu0 0.0
    %1907 = vmatprep.subr.mxu0 0.0
    %1908 = vmatpush1.msra.mxu0 0.0
    %1909 = vmatprep.subr.mxu0 0.0
    %1910 = vmatpush1.msra.mxu0 0.0
    %1911 = vmatprep.subr.mxu0 0.0
    %1912 = vmatpush1.msra.mxu0 0.0
    %1913 = vmatprep.subr.mxu0 0.0
    %1914 = vmatpush1.msra.mxu0 0.0
    %1915 = vmatprep.subr.mxu0 0.0
    %1916 = vmatpush1.msra.mxu0 0.0
    %1917 = vmatprep.subr.mxu0 0.0
    %1918 = vmatpush1.msra.mxu0 0.0
    %1919 = vmatprep.subr.mxu0 0.0
    %1920 = vmatpush1.msra.mxu0 0.0
    %1921 = vmatprep.mubr.f32.mxu0 0.0
    %1922 = vmatmul.mubr.f32.gmra.mrb[0].mxu0 %v1855
    %v1923 = vpop.f32.mrb[0].mxu0
    %v1924 = vadd.f32 %v417, %v1923
    %v1925 = vpop.f32.mrb[0].mxu0
    %1926 = vdwg.mxu0
    %v1927 = vadd.f32 %v1852, %v1924
    %v1928 = vxor.u32 %v1927, 2147483648
    %v1929 = vmul.f32 %v1928, 1.442695
    %v1930 = vpow.pop %v1929
    %v1931 = vadd.f32 %v1930, 1.0
    %v1932 = vrcp.pop %v1931
    %v1933 = vmul.f32 1.0, %v1932
    %1935 = vrot.lane.b32.xlu0 %v1924, 64
    %v1936 = vpop.permute.xlu0 %1935
    %v1938 = vmul.f32 %v1933, %v1936
    %1940 = vrot.lane.b32.xlu0 %v1938, 64
    %v1941 = vpop.permute.xlu0 %1940
    %v1943 = vadd.f32 %v1852, %v1941
    %v1944 = vtanh.pop %v1943
    %v1945 = vsub.f32 1.0, %v1933
    %1947 = vrot.lane.b32.xlu0 %v1944, 96
    %v1948 = vpop.permute.xlu0 %1947
    %v1950 = vmul.f32 %v1945, %v1948
    %v1951 = vmul.f32 %v1933, %v1594
    %v1952 = vadd.f32 %v1950, %v1951
    %1954 = vrot.lane.b32.xlu0 %v1781, 96
    %v1955 = vpop.permute.xlu0 %1954
    %s1957 = scalar_lea.vmem %s10, 8
    %1958 = vst.msk [vmem:[%s1957] sm:$0x3] %vm525, %v1955
    %1960 = vrot.lane.b32.xlu0 %v1952, 96
    %v1961 = vpop.permute.xlu0 %1960
    %s1963 = scalar_lea.vmem %s111, 6
    %1964 = vst.msk [vmem:[%s1963] sm:$0x3] %vm525, %v1961
    %s1965 = scalar_lea.vmem %s0, 10
    %v1966 = vld [vmem:[%s1965] sm:$0x3]
    %s1967 = scalar_lea.vmem %s103, 4
    %v1968 = vld [vmem:[%s1967] sm:$0x3]
    %v1970 = vsel %vm152, %v1966, 0
    %1972 = vmatprep.subr.mxu0 0.0
    %1973 = vmatpush1.msra.mxu0 %v121
    %1974 = vmatprep.subr.mxu0 0.0
    %1975 = vmatpush1.msra.mxu0 %v122
    %1976 = vmatprep.subr.mxu0 0.0
    %1977 = vmatpush1.msra.mxu0 %v123
    %1978 = vmatprep.subr.mxu0 0.0
    %1979 = vmatpush1.msra.mxu0 %v124
    %1980 = vmatprep.subr.mxu0 0.0
    %1981 = vmatpush1.msra.mxu0 0.0
    %1982 = vmatprep.subr.mxu0 0.0
    %1983 = vmatpush1.msra.mxu0 0.0
    %1984 = vmatprep.subr.mxu0 0.0
    %1985 = vmatpush1.msra.mxu0 0.0
    %1986 = vmatprep.subr.mxu0 0.0
    %1987 = vmatpush1.msra.mxu0 0.0
    %1988 = vmatprep.subr.mxu0 0.0
    %1989 = vmatpush1.msra.mxu0 0.0
    %1990 = vmatprep.subr.mxu0 0.0
    %1991 = vmatpush1.msra.mxu0 0.0
    %1992 = vmatprep.subr.mxu0 0.0
    %1993 = vmatpush1.msra.mxu0 0.0
    %1994 = vmatprep.subr.mxu0 0.0
    %1995 = vmatpush1.msra.mxu0 0.0
    %1996 = vmatprep.subr.mxu0 0.0
    %1997 = vmatpush1.msra.mxu0 0.0
    %1998 = vmatprep.subr.mxu0 0.0
    %1999 = vmatpush1.msra.mxu0 0.0
    %2000 = vmatprep.subr.mxu0 0.0
    %2001 = vmatpush1.msra.mxu0 0.0
    %2002 = vmatprep.subr.mxu0 0.0
    %2003 = vmatpush1.msra.mxu0 0.0
    %2004 = vmatprep.subr.mxu0 0.0
    %2005 = vmatpush1.msra.mxu0 0.0
    %2006 = vmatprep.subr.mxu0 0.0
    %2007 = vmatpush1.msra.mxu0 0.0
    %2008 = vmatprep.subr.mxu0 0.0
    %2009 = vmatpush1.msra.mxu0 0.0
    %2010 = vmatprep.subr.mxu0 0.0
    %2011 = vmatpush1.msra.mxu0 0.0
    %2012 = vmatprep.subr.mxu0 0.0
    %2013 = vmatpush1.msra.mxu0 0.0
    %2014 = vmatprep.subr.mxu0 0.0
    %2015 = vmatpush1.msra.mxu0 0.0
    %2016 = vmatprep.subr.mxu0 0.0
    %2017 = vmatpush1.msra.mxu0 0.0
    %2018 = vmatprep.subr.mxu0 0.0
    %2019 = vmatpush1.msra.mxu0 0.0
    %2020 = vmatprep.subr.mxu0 0.0
    %2021 = vmatpush1.msra.mxu0 0.0
    %2022 = vmatprep.subr.mxu0 0.0
    %2023 = vmatpush1.msra.mxu0 0.0
    %2024 = vmatprep.subr.mxu0 0.0
    %2025 = vmatpush1.msra.mxu0 0.0
    %2026 = vmatprep.subr.mxu0 0.0
    %2027 = vmatpush1.msra.mxu0 0.0
    %2028 = vmatprep.subr.mxu0 0.0
    %2029 = vmatpush1.msra.mxu0 0.0
    %2030 = vmatprep.subr.mxu0 0.0
    %2031 = vmatpush1.msra.mxu0 0.0
    %2032 = vmatprep.subr.mxu0 0.0
    %2033 = vmatpush1.msra.mxu0 0.0
    %2034 = vmatprep.subr.mxu0 0.0
    %2035 = vmatpush1.msra.mxu0 0.0
    %2036 = vmatprep.mubr.f32.mxu0 0.0
    %2037 = vmatmul.mubr.f32.gmra.mrb[0].mxu0 %v1970
    %v2038 = vpop.f32.mrb[0].mxu0
    %v2039 = vadd.f32 %v150, %v2038
    %v2040 = vpop.f32.mrb[0].mxu0
    %2041 = vdwg.mxu0
    %v2042 = vsel %vm152, %v1955, 0
    %2044 = vmatprep.subr.mxu0 0.0
    %2045 = vmatpush1.msra.mxu0 %v131
    %2046 = vmatprep.subr.mxu0 0.0
    %2047 = vmatpush1.msra.mxu0 %v132
    %2048 = vmatprep.subr.mxu0 0.0
    %2049 = vmatpush1.msra.mxu0 %v133
    %2050 = vmatprep.subr.mxu0 0.0
    %2051 = vmatpush1.msra.mxu0 %v134
    %2052 = vmatprep.subr.mxu0 0.0
    %2053 = vmatpush1.msra.mxu0 0.0
    %2054 = vmatprep.subr.mxu0 0.0
    %2055 = vmatpush1.msra.mxu0 0.0
    %2056 = vmatprep.subr.mxu0 0.0
    %2057 = vmatpush1.msra.mxu0 0.0
    %2058 = vmatprep.subr.mxu0 0.0
    %2059 = vmatpush1.msra.mxu0 0.0
    %2060 = vmatprep.subr.mxu0 0.0
    %2061 = vmatpush1.msra.mxu0 0.0
    %2062 = vmatprep.subr.mxu0 0.0
    %2063 = vmatpush1.msra.mxu0 0.0
    %2064 = vmatprep.subr.mxu0 0.0
    %2065 = vmatpush1.msra.mxu0 0.0
    %2066 = vmatprep.subr.mxu0 0.0
    %2067 = vmatpush1.msra.mxu0 0.0
    %2068 = vmatprep.subr.mxu0 0.0
    %2069 = vmatpush1.msra.mxu0 0.0
    %2070 = vmatprep.subr.mxu0 0.0
    %2071 = vmatpush1.msra.mxu0 0.0
    %2072 = vmatprep.subr.mxu0 0.0
    %2073 = vmatpush1.msra.mxu0 0.0
    %2074 = vmatprep.subr.mxu0 0.0
    %2075 = vmatpush1.msra.mxu0 0.0
    %2076 = vmatprep.subr.mxu0 0.0
    %2077 = vmatpush1.msra.mxu0 0.0
    %2078 = vmatprep.subr.mxu0 0.0
    %2079 = vmatpush1.msra.mxu0 0.0
    %2080 = vmatprep.subr.mxu0 0.0
    %2081 = vmatpush1.msra.mxu0 0.0
    %2082 = vmatprep.subr.mxu0 0.0
    %2083 = vmatpush1.msra.mxu0 0.0
    %2084 = vmatprep.subr.mxu0 0.0
    %2085 = vmatpush1.msra.mxu0 0.0
    %2086 = vmatprep.subr.mxu0 0.0
    %2087 = vmatpush1.msra.mxu0 0.0
    %2088 = vmatprep.subr.mxu0 0.0
    %2089 = vmatpush1.msra.mxu0 0.0
    %2090 = vmatprep.subr.mxu0 0.0
    %2091 = vmatpush1.msra.mxu0 0.0
    %2092 = vmatprep.subr.mxu0 0.0
    %2093 = vmatpush1.msra.mxu0 0.0
    %2094 = vmatprep.subr.mxu0 0.0
    %2095 = vmatpush1.msra.mxu0 0.0
    %2096 = vmatprep.subr.mxu0 0.0
    %2097 = vmatpush1.msra.mxu0 0.0
    %2098 = vmatprep.subr.mxu0 0.0
    %2099 = vmatpush1.msra.mxu0 0.0
    %2100 = vmatprep.subr.mxu0 0.0
    %2101 = vmatpush1.msra.mxu0 0.0
    %2102 = vmatprep.subr.mxu0 0.0
    %2103 = vmatpush1.msra.mxu0 0.0
    %2104 = vmatprep.subr.mxu0 0.0
    %2105 = vmatpush1.msra.mxu0 0.0
    %2106 = vmatprep.subr.mxu0 0.0
    %2107 = vmatpush1.msra.mxu0 0.0
    %2108 = vmatprep.mubr.f32.mxu0 0.0
    %2109 = vmatmul.mubr.f32.gmra.mrb[0].mxu0 %v2042
    %v2110 = vpop.f32.mrb[0].mxu0
    %v2111 = vadd.f32 %v230, %v2110
    %v2112 = vpop.f32.mrb[0].mxu0
    %2113 = vdwg.mxu0
    %v2114 = vadd.f32 %v2039, %v2111
    %v2115 = vxor.u32 %v2114, 2147483648
    %v2116 = vmul.f32 %v2115, 1.442695
    %v2117 = vpow.pop %v2116
    %v2118 = vadd.f32 %v2117, 1.0
    %v2119 = vrcp.pop %v2118
    %v2120 = vmul.f32 1.0, %v2119
    %2122 = vrot.lane.b32.xlu0 %v2111, 64
    %v2123 = vpop.permute.xlu0 %2122
    %v2125 = vmul.f32 %v2120, %v2123
    %2127 = vrot.lane.b32.xlu0 %v2125, 64
    %v2128 = vpop.permute.xlu0 %2127
    %v2130 = vadd.f32 %v2039, %v2128
    %v2131 = vtanh.pop %v2130
    %v2132 = vsub.f32 1.0, %v2120
    %2134 = vrot.lane.b32.xlu0 %v2131, 96
    %v2135 = vpop.permute.xlu0 %2134
    %v2137 = vmul.f32 %v2132, %v2135
    %v2138 = vmul.f32 %v2120, %v1781
    %v2139 = vadd.f32 %v2137, %v2138
    %v2141 = vsel %vm152, %v1968, 0
    %2143 = vmatprep.subr.mxu0 0.0
    %2144 = vmatpush1.msra.mxu0 %v125
    %2145 = vmatprep.subr.mxu0 0.0
    %2146 = vmatpush1.msra.mxu0 %v126
    %2147 = vmatprep.subr.mxu0 0.0
    %2148 = vmatpush1.msra.mxu0 %v127
    %2149 = vmatprep.subr.mxu0 0.0
    %2150 = vmatpush1.msra.mxu0 %v128
    %2151 = vmatprep.subr.mxu0 0.0
    %2152 = vmatpush1.msra.mxu0 0.0
    %2153 = vmatprep.subr.mxu0 0.0
    %2154 = vmatpush1.msra.mxu0 0.0
    %2155 = vmatprep.subr.mxu0 0.0
    %2156 = vmatpush1.msra.mxu0 0.0
    %2157 = vmatprep.subr.mxu0 0.0
    %2158 = vmatpush1.msra.mxu0 0.0
    %2159 = vmatprep.subr.mxu0 0.0
    %2160 = vmatpush1.msra.mxu0 0.0
    %2161 = vmatprep.subr.mxu0 0.0
    %2162 = vmatpush1.msra.mxu0 0.0
    %2163 = vmatprep.subr.mxu0 0.0
    %2164 = vmatpush1.msra.mxu0 0.0
    %2165 = vmatprep.subr.mxu0 0.0
    %2166 = vmatpush1.msra.mxu0 0.0
    %2167 = vmatprep.subr.mxu0 0.0
    %2168 = vmatpush1.msra.mxu0 0.0
    %2169 = vmatprep.subr.mxu0 0.0
    %2170 = vmatpush1.msra.mxu0 0.0
    %2171 = vmatprep.subr.mxu0 0.0
    %2172 = vmatpush1.msra.mxu0 0.0
    %2173 = vmatprep.subr.mxu0 0.0
    %2174 = vmatpush1.msra.mxu0 0.0
    %2175 = vmatprep.subr.mxu0 0.0
    %2176 = vmatpush1.msra.mxu0 0.0
    %2177 = vmatprep.subr.mxu0 0.0
    %2178 = vmatpush1.msra.mxu0 0.0
    %2179 = vmatprep.subr.mxu0 0.0
    %2180 = vmatpush1.msra.mxu0 0.0
    %2181 = vmatprep.subr.mxu0 0.0
    %2182 = vmatpush1.msra.mxu0 0.0
    %2183 = vmatprep.subr.mxu0 0.0
    %2184 = vmatpush1.msra.mxu0 0.0
    %2185 = vmatprep.subr.mxu0 0.0
    %2186 = vmatpush1.msra.mxu0 0.0
    %2187 = vmatprep.subr.mxu0 0.0
    %2188 = vmatpush1.msra.mxu0 0.0
    %2189 = vmatprep.subr.mxu0 0.0
    %2190 = vmatpush1.msra.mxu0 0.0
    %2191 = vmatprep.subr.mxu0 0.0
    %2192 = vmatpush1.msra.mxu0 0.0
    %2193 = vmatprep.subr.mxu0 0.0
    %2194 = vmatpush1.msra.mxu0 0.0
    %2195 = vmatprep.subr.mxu0 0.0
    %2196 = vmatpush1.msra.mxu0 0.0
    %2197 = vmatprep.subr.mxu0 0.0
    %2198 = vmatpush1.msra.mxu0 0.0
    %2199 = vmatprep.subr.mxu0 0.0
    %2200 = vmatpush1.msra.mxu0 0.0
    %2201 = vmatprep.subr.mxu0 0.0
    %2202 = vmatpush1.msra.mxu0 0.0
    %2203 = vmatprep.subr.mxu0 0.0
    %2204 = vmatpush1.msra.mxu0 0.0
    %2205 = vmatprep.subr.mxu0 0.0
    %2206 = vmatpush1.msra.mxu0 0.0
    %2207 = vmatprep.mubr.f32.mxu0 0.0
    %2208 = vmatmul.mubr.f32.gmra.mrb[0].mxu0 %v2141
    %v2209 = vpop.f32.mrb[0].mxu0
    %v2210 = vadd.f32 %v338, %v2209
    %v2211 = vpop.f32.mrb[0].mxu0
    %2212 = vdwg.mxu0
    %v2213 = vsel %vm152, %v1961, 0
    %2215 = vmatprep.subr.mxu0 0.0
    %2216 = vmatpush1.msra.mxu0 %v135
    %2217 = vmatprep.subr.mxu0 0.0
    %2218 = vmatpush1.msra.mxu0 %v136
    %2219 = vmatprep.subr.mxu0 0.0
    %2220 = vmatpush1.msra.mxu0 %v137
    %2221 = vmatprep.subr.mxu0 0.0
    %2222 = vmatpush1.msra.mxu0 %v138
    %2223 = vmatprep.subr.mxu0 0.0
    %2224 = vmatpush1.msra.mxu0 0.0
    %2225 = vmatprep.subr.mxu0 0.0
    %2226 = vmatpush1.msra.mxu0 0.0
    %2227 = vmatprep.subr.mxu0 0.0
    %2228 = vmatpush1.msra.mxu0 0.0
    %2229 = vmatprep.subr.mxu0 0.0
    %2230 = vmatpush1.msra.mxu0 0.0
    %2231 = vmatprep.subr.mxu0 0.0
    %2232 = vmatpush1.msra.mxu0 0.0
    %2233 = vmatprep.subr.mxu0 0.0
    %2234 = vmatpush1.msra.mxu0 0.0
    %2235 = vmatprep.subr.mxu0 0.0
    %2236 = vmatpush1.msra.mxu0 0.0
    %2237 = vmatprep.subr.mxu0 0.0
    %2238 = vmatpush1.msra.mxu0 0.0
    %2239 = vmatprep.subr.mxu0 0.0
    %2240 = vmatpush1.msra.mxu0 0.0
    %2241 = vmatprep.subr.mxu0 0.0
    %2242 = vmatpush1.msra.mxu0 0.0
    %2243 = vmatprep.subr.mxu0 0.0
    %2244 = vmatpush1.msra.mxu0 0.0
    %2245 = vmatprep.subr.mxu0 0.0
    %2246 = vmatpush1.msra.mxu0 0.0
    %2247 = vmatprep.subr.mxu0 0.0
    %2248 = vmatpush1.msra.mxu0 0.0
    %2249 = vmatprep.subr.mxu0 0.0
    %2250 = vmatpush1.msra.mxu0 0.0
    %2251 = vmatprep.subr.mxu0 0.0
    %2252 = vmatpush1.msra.mxu0 0.0
    %2253 = vmatprep.subr.mxu0 0.0
    %2254 = vmatpush1.msra.mxu0 0.0
    %2255 = vmatprep.subr.mxu0 0.0
    %2256 = vmatpush1.msra.mxu0 0.0
    %2257 = vmatprep.subr.mxu0 0.0
    %2258 = vmatpush1.msra.mxu0 0.0
    %2259 = vmatprep.subr.mxu0 0.0
    %2260 = vmatpush1.msra.mxu0 0.0
    %2261 = vmatprep.subr.mxu0 0.0
    %2262 = vmatpush1.msra.mxu0 0.0
    %2263 = vmatprep.subr.mxu0 0.0
    %2264 = vmatpush1.msra.mxu0 0.0
    %2265 = vmatprep.subr.mxu0 0.0
    %2266 = vmatpush1.msra.mxu0 0.0
    %2267 = vmatprep.subr.mxu0 0.0
    %2268 = vmatpush1.msra.mxu0 0.0
    %2269 = vmatprep.subr.mxu0 0.0
    %2270 = vmatpush1.msra.mxu0 0.0
    %2271 = vmatprep.subr.mxu0 0.0
    %2272 = vmatpush1.msra.mxu0 0.0
    %2273 = vmatprep.subr.mxu0 0.0
    %2274 = vmatpush1.msra.mxu0 0.0
    %2275 = vmatprep.subr.mxu0 0.0
    %2276 = vmatpush1.msra.mxu0 0.0
    %2277 = vmatprep.subr.mxu0 0.0
    %2278 = vmatpush1.msra.mxu0 0.0
    %2279 = vmatprep.mubr.f32.mxu0 0.0
    %2280 = vmatmul.mubr.f32.gmra.mrb[0].mxu0 %v2213
    %v2281 = vpop.f32.mrb[0].mxu0
    %v2282 = vadd.f32 %v417, %v2281
    %v2283 = vpop.f32.mrb[0].mxu0
    %2284 = vdwg.mxu0
    %v2285 = vadd.f32 %v2210, %v2282
    %v2286 = vxor.u32 %v2285, 2147483648
    %v2287 = vmul.f32 %v2286, 1.442695
    %v2288 = vpow.pop %v2287
    %v2289 = vadd.f32 %v2288, 1.0
    %v2290 = vrcp.pop %v2289
    %v2291 = vmul.f32 1.0, %v2290
    %2293 = vrot.lane.b32.xlu0 %v2282, 64
    %v2294 = vpop.permute.xlu0 %2293
    %v2296 = vmul.f32 %v2291, %v2294
    %2298 = vrot.lane.b32.xlu0 %v2296, 64
    %v2299 = vpop.permute.xlu0 %2298
    %v2301 = vadd.f32 %v2210, %v2299
    %v2302 = vtanh.pop %v2301
    %v2303 = vsub.f32 1.0, %v2291
    %2305 = vrot.lane.b32.xlu0 %v2302, 96
    %v2306 = vpop.permute.xlu0 %2305
    %v2308 = vmul.f32 %v2303, %v2306
    %v2309 = vmul.f32 %v2291, %v1952
    %v2310 = vadd.f32 %v2308, %v2309
    %2312 = vrot.lane.b32.xlu0 %v2139, 96
    %v2313 = vpop.permute.xlu0 %2312
    %s2315 = scalar_lea.vmem %s10, 10
    %2316 = vst.msk [vmem:[%s2315] sm:$0x3] %vm525, %v2313
    %2318 = vrot.lane.b32.xlu0 %v2310, 96
    %v2319 = vpop.permute.xlu0 %2318
    %s2321 = scalar_lea.vmem %s111, 4
    %2322 = vst.msk [vmem:[%s2321] sm:$0x3] %vm525, %v2319
    %s2323 = scalar_lea.vmem %s0, 12
    %v2324 = vld [vmem:[%s2323] sm:$0x3]
    %s2325 = scalar_lea.vmem %s103, 2
    %v2326 = vld [vmem:[%s2325] sm:$0x3]
    %v2328 = vsel %vm152, %v2324, 0
    %2330 = vmatprep.subr.mxu0 0.0
    %2331 = vmatpush1.msra.mxu0 %v121
    %2332 = vmatprep.subr.mxu0 0.0
    %2333 = vmatpush1.msra.mxu0 %v122
    %2334 = vmatprep.subr.mxu0 0.0
    %2335 = vmatpush1.msra.mxu0 %v123
    %2336 = vmatprep.subr.mxu0 0.0
    %2337 = vmatpush1.msra.mxu0 %v124
    %2338 = vmatprep.subr.mxu0 0.0
    %2339 = vmatpush1.msra.mxu0 0.0
    %2340 = vmatprep.subr.mxu0 0.0
    %2341 = vmatpush1.msra.mxu0 0.0
    %2342 = vmatprep.subr.mxu0 0.0
    %2343 = vmatpush1.msra.mxu0 0.0
    %2344 = vmatprep.subr.mxu0 0.0
    %2345 = vmatpush1.msra.mxu0 0.0
    %2346 = vmatprep.subr.mxu0 0.0
    %2347 = vmatpush1.msra.mxu0 0.0
    %2348 = vmatprep.subr.mxu0 0.0
    %2349 = vmatpush1.msra.mxu0 0.0
    %2350 = vmatprep.subr.mxu0 0.0
    %2351 = vmatpush1.msra.mxu0 0.0
    %2352 = vmatprep.subr.mxu0 0.0
    %2353 = vmatpush1.msra.mxu0 0.0
    %2354 = vmatprep.subr.mxu0 0.0
    %2355 = vmatpush1.msra.mxu0 0.0
    %2356 = vmatprep.subr.mxu0 0.0
    %2357 = vmatpush1.msra.mxu0 0.0
    %2358 = vmatprep.subr.mxu0 0.0
    %2359 = vmatpush1.msra.mxu0 0.0
    %2360 = vmatprep.subr.mxu0 0.0
    %2361 = vmatpush1.msra.mxu0 0.0
    %2362 = vmatprep.subr.mxu0 0.0
    %2363 = vmatpush1.msra.mxu0 0.0
    %2364 = vmatprep.subr.mxu0 0.0
    %2365 = vmatpush1.msra.mxu0 0.0
    %2366 = vmatprep.subr.mxu0 0.0
    %2367 = vmatpush1.msra.mxu0 0.0
    %2368 = vmatprep.subr.mxu0 0.0
    %2369 = vmatpush1.msra.mxu0 0.0
    %2370 = vmatprep.subr.mxu0 0.0
    %2371 = vmatpush1.msra.mxu0 0.0
    %2372 = vmatprep.subr.mxu0 0.0
    %2373 = vmatpush1.msra.mxu0 0.0
    %2374 = vmatprep.subr.mxu0 0.0
    %2375 = vmatpush1.msra.mxu0 0.0
    %2376 = vmatprep.subr.mxu0 0.0
    %2377 = vmatpush1.msra.mxu0 0.0
    %2378 = vmatprep.subr.mxu0 0.0
    %2379 = vmatpush1.msra.mxu0 0.0
    %2380 = vmatprep.subr.mxu0 0.0
    %2381 = vmatpush1.msra.mxu0 0.0
    %2382 = vmatprep.subr.mxu0 0.0
    %2383 = vmatpush1.msra.mxu0 0.0
    %2384 = vmatprep.subr.mxu0 0.0
    %2385 = vmatpush1.msra.mxu0 0.0
    %2386 = vmatprep.subr.mxu0 0.0
    %2387 = vmatpush1.msra.mxu0 0.0
    %2388 = vmatprep.subr.mxu0 0.0
    %2389 = vmatpush1.msra.mxu0 0.0
    %2390 = vmatprep.subr.mxu0 0.0
    %2391 = vmatpush1.msra.mxu0 0.0
    %2392 = vmatprep.subr.mxu0 0.0
    %2393 = vmatpush1.msra.mxu0 0.0
    %2394 = vmatprep.mubr.f32.mxu0 0.0
    %2395 = vmatmul.mubr.f32.gmra.mrb[0].mxu0 %v2328
    %v2396 = vpop.f32.mrb[0].mxu0
    %v2397 = vadd.f32 %v150, %v2396
    %v2398 = vpop.f32.mrb[0].mxu0
    %2399 = vdwg.mxu0
    %v2400 = vsel %vm152, %v2313, 0
    %2402 = vmatprep.subr.mxu0 0.0
    %2403 = vmatpush1.msra.mxu0 %v131
    %2404 = vmatprep.subr.mxu0 0.0
    %2405 = vmatpush1.msra.mxu0 %v132
    %2406 = vmatprep.subr.mxu0 0.0
    %2407 = vmatpush1.msra.mxu0 %v133
    %2408 = vmatprep.subr.mxu0 0.0
    %2409 = vmatpush1.msra.mxu0 %v134
    %2410 = vmatprep.subr.mxu0 0.0
    %2411 = vmatpush1.msra.mxu0 0.0
    %2412 = vmatprep.subr.mxu0 0.0
    %2413 = vmatpush1.msra.mxu0 0.0
    %2414 = vmatprep.subr.mxu0 0.0
    %2415 = vmatpush1.msra.mxu0 0.0
    %2416 = vmatprep.subr.mxu0 0.0
    %2417 = vmatpush1.msra.mxu0 0.0
    %2418 = vmatprep.subr.mxu0 0.0
    %2419 = vmatpush1.msra.mxu0 0.0
    %2420 = vmatprep.subr.mxu0 0.0
    %2421 = vmatpush1.msra.mxu0 0.0
    %2422 = vmatprep.subr.mxu0 0.0
    %2423 = vmatpush1.msra.mxu0 0.0
    %2424 = vmatprep.subr.mxu0 0.0
    %2425 = vmatpush1.msra.mxu0 0.0
    %2426 = vmatprep.subr.mxu0 0.0
    %2427 = vmatpush1.msra.mxu0 0.0
    %2428 = vmatprep.subr.mxu0 0.0
    %2429 = vmatpush1.msra.mxu0 0.0
    %2430 = vmatprep.subr.mxu0 0.0
    %2431 = vmatpush1.msra.mxu0 0.0
    %2432 = vmatprep.subr.mxu0 0.0
    %2433 = vmatpush1.msra.mxu0 0.0
    %2434 = vmatprep.subr.mxu0 0.0
    %2435 = vmatpush1.msra.mxu0 0.0
    %2436 = vmatprep.subr.mxu0 0.0
    %2437 = vmatpush1.msra.mxu0 0.0
    %2438 = vmatprep.subr.mxu0 0.0
    %2439 = vmatpush1.msra.mxu0 0.0
    %2440 = vmatprep.subr.mxu0 0.0
    %2441 = vmatpush1.msra.mxu0 0.0
    %2442 = vmatprep.subr.mxu0 0.0
    %2443 = vmatpush1.msra.mxu0 0.0
    %2444 = vmatprep.subr.mxu0 0.0
    %2445 = vmatpush1.msra.mxu0 0.0
    %2446 = vmatprep.subr.mxu0 0.0
    %2447 = vmatpush1.msra.mxu0 0.0
    %2448 = vmatprep.subr.mxu0 0.0
    %2449 = vmatpush1.msra.mxu0 0.0
    %2450 = vmatprep.subr.mxu0 0.0
    %2451 = vmatpush1.msra.mxu0 0.0
    %2452 = vmatprep.subr.mxu0 0.0
    %2453 = vmatpush1.msra.mxu0 0.0
    %2454 = vmatprep.subr.mxu0 0.0
    %2455 = vmatpush1.msra.mxu0 0.0
    %2456 = vmatprep.subr.mxu0 0.0
    %2457 = vmatpush1.msra.mxu0 0.0
    %2458 = vmatprep.subr.mxu0 0.0
    %2459 = vmatpush1.msra.mxu0 0.0
    %2460 = vmatprep.subr.mxu0 0.0
    %2461 = vmatpush1.msra.mxu0 0.0
    %2462 = vmatprep.subr.mxu0 0.0
    %2463 = vmatpush1.msra.mxu0 0.0
    %2464 = vmatprep.subr.mxu0 0.0
    %2465 = vmatpush1.msra.mxu0 0.0
    %2466 = vmatprep.mubr.f32.mxu0 0.0
    %2467 = vmatmul.mubr.f32.gmra.mrb[0].mxu0 %v2400
    %v2468 = vpop.f32.mrb[0].mxu0
    %v2469 = vadd.f32 %v230, %v2468
    %v2470 = vpop.f32.mrb[0].mxu0
    %2471 = vdwg.mxu0
    %v2472 = vadd.f32 %v2397, %v2469
    %v2473 = vxor.u32 %v2472, 2147483648
    %v2474 = vmul.f32 %v2473, 1.442695
    %v2475 = vpow.pop %v2474
    %v2476 = vadd.f32 %v2475, 1.0
    %v2477 = vrcp.pop %v2476
    %v2478 = vmul.f32 1.0, %v2477
    %2480 = vrot.lane.b32.xlu0 %v2469, 64
    %v2481 = vpop.permute.xlu0 %2480
    %v2483 = vmul.f32 %v2478, %v2481
    %2485 = vrot.lane.b32.xlu0 %v2483, 64
    %v2486 = vpop.permute.xlu0 %2485
    %v2488 = vadd.f32 %v2397, %v2486
    %v2489 = vtanh.pop %v2488
    %v2490 = vsub.f32 1.0, %v2478
    %2492 = vrot.lane.b32.xlu0 %v2489, 96
    %v2493 = vpop.permute.xlu0 %2492
    %v2495 = vmul.f32 %v2490, %v2493
    %v2496 = vmul.f32 %v2478, %v2139
    %v2497 = vadd.f32 %v2495, %v2496
    %v2499 = vsel %vm152, %v2326, 0
    %2501 = vmatprep.subr.mxu0 0.0
    %2502 = vmatpush1.msra.mxu0 %v125
    %2503 = vmatprep.subr.mxu0 0.0
    %2504 = vmatpush1.msra.mxu0 %v126
    %2505 = vmatprep.subr.mxu0 0.0
    %2506 = vmatpush1.msra.mxu0 %v127
    %2507 = vmatprep.subr.mxu0 0.0
    %2508 = vmatpush1.msra.mxu0 %v128
    %2509 = vmatprep.subr.mxu0 0.0
    %2510 = vmatpush1.msra.mxu0 0.0
    %2511 = vmatprep.subr.mxu0 0.0
    %2512 = vmatpush1.msra.mxu0 0.0
    %2513 = vmatprep.subr.mxu0 0.0
    %2514 = vmatpush1.msra.mxu0 0.0
    %2515 = vmatprep.subr.mxu0 0.0
    %2516 = vmatpush1.msra.mxu0 0.0
    %2517 = vmatprep.subr.mxu0 0.0
    %2518 = vmatpush1.msra.mxu0 0.0
    %2519 = vmatprep.subr.mxu0 0.0
    %2520 = vmatpush1.msra.mxu0 0.0
    %2521 = vmatprep.subr.mxu0 0.0
    %2522 = vmatpush1.msra.mxu0 0.0
    %2523 = vmatprep.subr.mxu0 0.0
    %2524 = vmatpush1.msra.mxu0 0.0
    %2525 = vmatprep.subr.mxu0 0.0
    %2526 = vmatpush1.msra.mxu0 0.0
    %2527 = vmatprep.subr.mxu0 0.0
    %2528 = vmatpush1.msra.mxu0 0.0
    %2529 = vmatprep.subr.mxu0 0.0
    %2530 = vmatpush1.msra.mxu0 0.0
    %2531 = vmatprep.subr.mxu0 0.0
    %2532 = vmatpush1.msra.mxu0 0.0
    %2533 = vmatprep.subr.mxu0 0.0
    %2534 = vmatpush1.msra.mxu0 0.0
    %2535 = vmatprep.subr.mxu0 0.0
    %2536 = vmatpush1.msra.mxu0 0.0
    %2537 = vmatprep.subr.mxu0 0.0
    %2538 = vmatpush1.msra.mxu0 0.0
    %2539 = vmatprep.subr.mxu0 0.0
    %2540 = vmatpush1.msra.mxu0 0.0
    %2541 = vmatprep.subr.mxu0 0.0
    %2542 = vmatpush1.msra.mxu0 0.0
    %2543 = vmatprep.subr.mxu0 0.0
    %2544 = vmatpush1.msra.mxu0 0.0
    %2545 = vmatprep.subr.mxu0 0.0
    %2546 = vmatpush1.msra.mxu0 0.0
    %2547 = vmatprep.subr.mxu0 0.0
    %2548 = vmatpush1.msra.mxu0 0.0
    %2549 = vmatprep.subr.mxu0 0.0
    %2550 = vmatpush1.msra.mxu0 0.0
    %2551 = vmatprep.subr.mxu0 0.0
    %2552 = vmatpush1.msra.mxu0 0.0
    %2553 = vmatprep.subr.mxu0 0.0
    %2554 = vmatpush1.msra.mxu0 0.0
    %2555 = vmatprep.subr.mxu0 0.0
    %2556 = vmatpush1.msra.mxu0 0.0
    %2557 = vmatprep.subr.mxu0 0.0
    %2558 = vmatpush1.msra.mxu0 0.0
    %2559 = vmatprep.subr.mxu0 0.0
    %2560 = vmatpush1.msra.mxu0 0.0
    %2561 = vmatprep.subr.mxu0 0.0
    %2562 = vmatpush1.msra.mxu0 0.0
    %2563 = vmatprep.subr.mxu0 0.0
    %2564 = vmatpush1.msra.mxu0 0.0
    %2565 = vmatprep.mubr.f32.mxu0 0.0
    %2566 = vmatmul.mubr.f32.gmra.mrb[0].mxu0 %v2499
    %v2567 = vpop.f32.mrb[0].mxu0
    %v2568 = vadd.f32 %v338, %v2567
    %v2569 = vpop.f32.mrb[0].mxu0
    %2570 = vdwg.mxu0
    %v2571 = vsel %vm152, %v2319, 0
    %2573 = vmatprep.subr.mxu0 0.0
    %2574 = vmatpush1.msra.mxu0 %v135
    %2575 = vmatprep.subr.mxu0 0.0
    %2576 = vmatpush1.msra.mxu0 %v136
    %2577 = vmatprep.subr.mxu0 0.0
    %2578 = vmatpush1.msra.mxu0 %v137
    %2579 = vmatprep.subr.mxu0 0.0
    %2580 = vmatpush1.msra.mxu0 %v138
    %2581 = vmatprep.subr.mxu0 0.0
    %2582 = vmatpush1.msra.mxu0 0.0
    %2583 = vmatprep.subr.mxu0 0.0
    %2584 = vmatpush1.msra.mxu0 0.0
    %2585 = vmatprep.subr.mxu0 0.0
    %2586 = vmatpush1.msra.mxu0 0.0
    %2587 = vmatprep.subr.mxu0 0.0
    %2588 = vmatpush1.msra.mxu0 0.0
    %2589 = vmatprep.subr.mxu0 0.0
    %2590 = vmatpush1.msra.mxu0 0.0
    %2591 = vmatprep.subr.mxu0 0.0
    %2592 = vmatpush1.msra.mxu0 0.0
    %2593 = vmatprep.subr.mxu0 0.0
    %2594 = vmatpush1.msra.mxu0 0.0
    %2595 = vmatprep.subr.mxu0 0.0
    %2596 = vmatpush1.msra.mxu0 0.0
    %2597 = vmatprep.subr.mxu0 0.0
    %2598 = vmatpush1.msra.mxu0 0.0
    %2599 = vmatprep.subr.mxu0 0.0
    %2600 = vmatpush1.msra.mxu0 0.0
    %2601 = vmatprep.subr.mxu0 0.0
    %2602 = vmatpush1.msra.mxu0 0.0
    %2603 = vmatprep.subr.mxu0 0.0
    %2604 = vmatpush1.msra.mxu0 0.0
    %2605 = vmatprep.subr.mxu0 0.0
    %2606 = vmatpush1.msra.mxu0 0.0
    %2607 = vmatprep.subr.mxu0 0.0
    %2608 = vmatpush1.msra.mxu0 0.0
    %2609 = vmatprep.subr.mxu0 0.0
    %2610 = vmatpush1.msra.mxu0 0.0
    %2611 = vmatprep.subr.mxu0 0.0
    %2612 = vmatpush1.msra.mxu0 0.0
    %2613 = vmatprep.subr.mxu0 0.0
    %2614 = vmatpush1.msra.mxu0 0.0
    %2615 = vmatprep.subr.mxu0 0.0
    %2616 = vmatpush1.msra.mxu0 0.0
    %2617 = vmatprep.subr.mxu0 0.0
    %2618 = vmatpush1.msra.mxu0 0.0
    %2619 = vmatprep.subr.mxu0 0.0
    %2620 = vmatpush1.msra.mxu0 0.0
    %2621 = vmatprep.subr.mxu0 0.0
    %2622 = vmatpush1.msra.mxu0 0.0
    %2623 = vmatprep.subr.mxu0 0.0
    %2624 = vmatpush1.msra.mxu0 0.0
    %2625 = vmatprep.subr.mxu0 0.0
    %2626 = vmatpush1.msra.mxu0 0.0
    %2627 = vmatprep.subr.mxu0 0.0
    %2628 = vmatpush1.msra.mxu0 0.0
    %2629 = vmatprep.subr.mxu0 0.0
    %2630 = vmatpush1.msra.mxu0 0.0
    %2631 = vmatprep.subr.mxu0 0.0
    %2632 = vmatpush1.msra.mxu0 0.0
    %2633 = vmatprep.subr.mxu0 0.0
    %2634 = vmatpush1.msra.mxu0 0.0
    %2635 = vmatprep.subr.mxu0 0.0
    %2636 = vmatpush1.msra.mxu0 0.0
    %2637 = vmatprep.mubr.f32.mxu0 0.0
    %2638 = vmatmul.mubr.f32.gmra.mrb[0].mxu0 %v2571
    %v2639 = vpop.f32.mrb[0].mxu0
    %v2640 = vadd.f32 %v417, %v2639
    %v2641 = vpop.f32.mrb[0].mxu0
    %2642 = vdwg.mxu0
    %v2643 = vadd.f32 %v2568, %v2640
    %v2644 = vxor.u32 %v2643, 2147483648
    %v2645 = vmul.f32 %v2644, 1.442695
    %v2646 = vpow.pop %v2645
    %v2647 = vadd.f32 %v2646, 1.0
    %v2648 = vrcp.pop %v2647
    %v2649 = vmul.f32 1.0, %v2648
    %2651 = vrot.lane.b32.xlu0 %v2640, 64
    %v2652 = vpop.permute.xlu0 %2651
    %v2654 = vmul.f32 %v2649, %v2652
    %2656 = vrot.lane.b32.xlu0 %v2654, 64
    %v2657 = vpop.permute.xlu0 %2656
    %v2659 = vadd.f32 %v2568, %v2657
    %v2660 = vtanh.pop %v2659
    %v2661 = vsub.f32 1.0, %v2649
    %2663 = vrot.lane.b32.xlu0 %v2660, 96
    %v2664 = vpop.permute.xlu0 %2663
    %v2666 = vmul.f32 %v2661, %v2664
    %v2667 = vmul.f32 %v2649, %v2310
    %v2668 = vadd.f32 %v2666, %v2667
    %2670 = vrot.lane.b32.xlu0 %v2497, 96
    %v2671 = vpop.permute.xlu0 %2670
    %s2673 = scalar_lea.vmem %s10, 12
    %2674 = vst.msk [vmem:[%s2673] sm:$0x3] %vm525, %v2671
    %2676 = vrot.lane.b32.xlu0 %v2668, 96
    %v2677 = vpop.permute.xlu0 %2676
    %s2679 = scalar_lea.vmem %s111, 2
    %2680 = vst.msk [vmem:[%s2679] sm:$0x3] %vm525, %v2677
    %s2681 = scalar_lea.vmem %s0, 14
    %v2682 = vld [vmem:[%s2681] sm:$0x3]
    %v2683 = vld [vmem:[%s103] sm:$0x3]
    %v2685 = vsel %vm152, %v2682, 0
    %2687 = vmatprep.subr.mxu0 0.0
    %2688 = vmatpush1.msra.mxu0 %v121
    %2689 = vmatprep.subr.mxu0 0.0
    %2690 = vmatpush1.msra.mxu0 %v122
    %2691 = vmatprep.subr.mxu0 0.0
    %2692 = vmatpush1.msra.mxu0 %v123
    %2693 = vmatprep.subr.mxu0 0.0
    %2694 = vmatpush1.msra.mxu0 %v124
    %2695 = vmatprep.subr.mxu0 0.0
    %2696 = vmatpush1.msra.mxu0 0.0
    %2697 = vmatprep.subr.mxu0 0.0
    %2698 = vmatpush1.msra.mxu0 0.0
    %2699 = vmatprep.subr.mxu0 0.0
    %2700 = vmatpush1.msra.mxu0 0.0
    %2701 = vmatprep.subr.mxu0 0.0
    %2702 = vmatpush1.msra.mxu0 0.0
    %2703 = vmatprep.subr.mxu0 0.0
    %2704 = vmatpush1.msra.mxu0 0.0
    %2705 = vmatprep.subr.mxu0 0.0
    %2706 = vmatpush1.msra.mxu0 0.0
    %2707 = vmatprep.subr.mxu0 0.0
    %2708 = vmatpush1.msra.mxu0 0.0
    %2709 = vmatprep.subr.mxu0 0.0
    %2710 = vmatpush1.msra.mxu0 0.0
    %2711 = vmatprep.subr.mxu0 0.0
    %2712 = vmatpush1.msra.mxu0 0.0
    %2713 = vmatprep.subr.mxu0 0.0
    %2714 = vmatpush1.msra.mxu0 0.0
    %2715 = vmatprep.subr.mxu0 0.0
    %2716 = vmatpush1.msra.mxu0 0.0
    %2717 = vmatprep.subr.mxu0 0.0
    %2718 = vmatpush1.msra.mxu0 0.0
    %2719 = vmatprep.subr.mxu0 0.0
    %2720 = vmatpush1.msra.mxu0 0.0
    %2721 = vmatprep.subr.mxu0 0.0
    %2722 = vmatpush1.msra.mxu0 0.0
    %2723 = vmatprep.subr.mxu0 0.0
    %2724 = vmatpush1.msra.mxu0 0.0
    %2725 = vmatprep.subr.mxu0 0.0
    %2726 = vmatpush1.msra.mxu0 0.0
    %2727 = vmatprep.subr.mxu0 0.0
    %2728 = vmatpush1.msra.mxu0 0.0
    %2729 = vmatprep.subr.mxu0 0.0
    %2730 = vmatpush1.msra.mxu0 0.0
    %2731 = vmatprep.subr.mxu0 0.0
    %2732 = vmatpush1.msra.mxu0 0.0
    %2733 = vmatprep.subr.mxu0 0.0
    %2734 = vmatpush1.msra.mxu0 0.0
    %2735 = vmatprep.subr.mxu0 0.0
    %2736 = vmatpush1.msra.mxu0 0.0
    %2737 = vmatprep.subr.mxu0 0.0
    %2738 = vmatpush1.msra.mxu0 0.0
    %2739 = vmatprep.subr.mxu0 0.0
    %2740 = vmatpush1.msra.mxu0 0.0
    %2741 = vmatprep.subr.mxu0 0.0
    %2742 = vmatpush1.msra.mxu0 0.0
    %2743 = vmatprep.subr.mxu0 0.0
    %2744 = vmatpush1.msra.mxu0 0.0
    %2745 = vmatprep.subr.mxu0 0.0
    %2746 = vmatpush1.msra.mxu0 0.0
    %2747 = vmatprep.subr.mxu0 0.0
    %2748 = vmatpush1.msra.mxu0 0.0
    %2749 = vmatprep.subr.mxu0 0.0
    %2750 = vmatpush1.msra.mxu0 0.0
    %2751 = vmatprep.mubr.f32.mxu0 0.0
    %2752 = vmatmul.mubr.f32.gmra.mrb[0].mxu0 %v2685
    %v2753 = vpop.f32.mrb[0].mxu0
    %v2754 = vadd.f32 %v150, %v2753
    %v2755 = vpop.f32.mrb[0].mxu0
    %2756 = vdwg.mxu0
    %v2757 = vsel %vm152, %v2671, 0
    %2759 = vmatprep.subr.mxu0 0.0
    %2760 = vmatpush1.msra.mxu0 %v131
    %2761 = vmatprep.subr.mxu0 0.0
    %2762 = vmatpush1.msra.mxu0 %v132
    %2763 = vmatprep.subr.mxu0 0.0
    %2764 = vmatpush1.msra.mxu0 %v133
    %2765 = vmatprep.subr.mxu0 0.0
    %2766 = vmatpush1.msra.mxu0 %v134
    %2767 = vmatprep.subr.mxu0 0.0
    %2768 = vmatpush1.msra.mxu0 0.0
    %2769 = vmatprep.subr.mxu0 0.0
    %2770 = vmatpush1.msra.mxu0 0.0
    %2771 = vmatprep.subr.mxu0 0.0
    %2772 = vmatpush1.msra.mxu0 0.0
    %2773 = vmatprep.subr.mxu0 0.0
    %2774 = vmatpush1.msra.mxu0 0.0
    %2775 = vmatprep.subr.mxu0 0.0
    %2776 = vmatpush1.msra.mxu0 0.0
    %2777 = vmatprep.subr.mxu0 0.0
    %2778 = vmatpush1.msra.mxu0 0.0
    %2779 = vmatprep.subr.mxu0 0.0
    %2780 = vmatpush1.msra.mxu0 0.0
    %2781 = vmatprep.subr.mxu0 0.0
    %2782 = vmatpush1.msra.mxu0 0.0
    %2783 = vmatprep.subr.mxu0 0.0
    %2784 = vmatpush1.msra.mxu0 0.0
    %2785 = vmatprep.subr.mxu0 0.0
    %2786 = vmatpush1.msra.mxu0 0.0
    %2787 = vmatprep.subr.mxu0 0.0
    %2788 = vmatpush1.msra.mxu0 0.0
    %2789 = vmatprep.subr.mxu0 0.0
    %2790 = vmatpush1.msra.mxu0 0.0
    %2791 = vmatprep.subr.mxu0 0.0
    %2792 = vmatpush1.msra.mxu0 0.0
    %2793 = vmatprep.subr.mxu0 0.0
    %2794 = vmatpush1.msra.mxu0 0.0
    %2795 = vmatprep.subr.mxu0 0.0
    %2796 = vmatpush1.msra.mxu0 0.0
    %2797 = vmatprep.subr.mxu0 0.0
    %2798 = vmatpush1.msra.mxu0 0.0
    %2799 = vmatprep.subr.mxu0 0.0
    %2800 = vmatpush1.msra.mxu0 0.0
    %2801 = vmatprep.subr.mxu0 0.0
    %2802 = vmatpush1.msra.mxu0 0.0
    %2803 = vmatprep.subr.mxu0 0.0
    %2804 = vmatpush1.msra.mxu0 0.0
    %2805 = vmatprep.subr.mxu0 0.0
    %2806 = vmatpush1.msra.mxu0 0.0
    %2807 = vmatprep.subr.mxu0 0.0
    %2808 = vmatpush1.msra.mxu0 0.0
    %2809 = vmatprep.subr.mxu0 0.0
    %2810 = vmatpush1.msra.mxu0 0.0
    %2811 = vmatprep.subr.mxu0 0.0
    %2812 = vmatpush1.msra.mxu0 0.0
    %2813 = vmatprep.subr.mxu0 0.0
    %2814 = vmatpush1.msra.mxu0 0.0
    %2815 = vmatprep.subr.mxu0 0.0
    %2816 = vmatpush1.msra.mxu0 0.0
    %2817 = vmatprep.subr.mxu0 0.0
    %2818 = vmatpush1.msra.mxu0 0.0
    %2819 = vmatprep.subr.mxu0 0.0
    %2820 = vmatpush1.msra.mxu0 0.0
    %2821 = vmatprep.subr.mxu0 0.0
    %2822 = vmatpush1.msra.mxu0 0.0
    %2823 = vmatprep.mubr.f32.mxu0 0.0
    %2824 = vmatmul.mubr.f32.gmra.mrb[0].mxu0 %v2757
    %v2825 = vpop.f32.mrb[0].mxu0
    %v2826 = vadd.f32 %v230, %v2825
    %v2827 = vpop.f32.mrb[0].mxu0
    %2828 = vdwg.mxu0
    %v2829 = vadd.f32 %v2754, %v2826
    %v2830 = vxor.u32 %v2829, 2147483648
    %v2831 = vmul.f32 %v2830, 1.442695
    %v2832 = vpow.pop %v2831
    %v2833 = vadd.f32 %v2832, 1.0
    %v2834 = vrcp.pop %v2833
    %v2835 = vmul.f32 1.0, %v2834
    %2837 = vrot.lane.b32.xlu0 %v2826, 64
    %v2838 = vpop.permute.xlu0 %2837
    %v2840 = vmul.f32 %v2835, %v2838
    %2842 = vrot.lane.b32.xlu0 %v2840, 64
    %v2843 = vpop.permute.xlu0 %2842
    %v2845 = vadd.f32 %v2754, %v2843
    %v2846 = vtanh.pop %v2845
    %v2847 = vsub.f32 1.0, %v2835
    %2849 = vrot.lane.b32.xlu0 %v2846, 96
    %v2850 = vpop.permute.xlu0 %2849
    %v2852 = vmul.f32 %v2847, %v2850
    %v2853 = vmul.f32 %v2835, %v2497
    %v2854 = vadd.f32 %v2852, %v2853
    %v2856 = vsel %vm152, %v2683, 0
    %2858 = vmatprep.subr.mxu0 0.0
    %2859 = vmatpush1.msra.mxu0 %v125
    %2860 = vmatprep.subr.mxu0 0.0
    %2861 = vmatpush1.msra.mxu0 %v126
    %2862 = vmatprep.subr.mxu0 0.0
    %2863 = vmatpush1.msra.mxu0 %v127
    %2864 = vmatprep.subr.mxu0 0.0
    %2865 = vmatpush1.msra.mxu0 %v128
    %2866 = vmatprep.subr.mxu0 0.0
    %2867 = vmatpush1.msra.mxu0 0.0
    %2868 = vmatprep.subr.mxu0 0.0
    %2869 = vmatpush1.msra.mxu0 0.0
    %2870 = vmatprep.subr.mxu0 0.0
    %2871 = vmatpush1.msra.mxu0 0.0
    %2872 = vmatprep.subr.mxu0 0.0
    %2873 = vmatpush1.msra.mxu0 0.0
    %2874 = vmatprep.subr.mxu0 0.0
    %2875 = vmatpush1.msra.mxu0 0.0
    %2876 = vmatprep.subr.mxu0 0.0
    %2877 = vmatpush1.msra.mxu0 0.0
    %2878 = vmatprep.subr.mxu0 0.0
    %2879 = vmatpush1.msra.mxu0 0.0
    %2880 = vmatprep.subr.mxu0 0.0
    %2881 = vmatpush1.msra.mxu0 0.0
    %2882 = vmatprep.subr.mxu0 0.0
    %2883 = vmatpush1.msra.mxu0 0.0
    %2884 = vmatprep.subr.mxu0 0.0
    %2885 = vmatpush1.msra.mxu0 0.0
    %2886 = vmatprep.subr.mxu0 0.0
    %2887 = vmatpush1.msra.mxu0 0.0
    %2888 = vmatprep.subr.mxu0 0.0
    %2889 = vmatpush1.msra.mxu0 0.0
    %2890 = vmatprep.subr.mxu0 0.0
    %2891 = vmatpush1.msra.mxu0 0.0
    %2892 = vmatprep.subr.mxu0 0.0
    %2893 = vmatpush1.msra.mxu0 0.0
    %2894 = vmatprep.subr.mxu0 0.0
    %2895 = vmatpush1.msra.mxu0 0.0
    %2896 = vmatprep.subr.mxu0 0.0
    %2897 = vmatpush1.msra.mxu0 0.0
    %2898 = vmatprep.subr.mxu0 0.0
    %2899 = vmatpush1.msra.mxu0 0.0
    %2900 = vmatprep.subr.mxu0 0.0
    %2901 = vmatpush1.msra.mxu0 0.0
    %2902 = vmatprep.subr.mxu0 0.0
    %2903 = vmatpush1.msra.mxu0 0.0
    %2904 = vmatprep.subr.mxu0 0.0
    %2905 = vmatpush1.msra.mxu0 0.0
    %2906 = vmatprep.subr.mxu0 0.0
    %2907 = vmatpush1.msra.mxu0 0.0
    %2908 = vmatprep.subr.mxu0 0.0
    %2909 = vmatpush1.msra.mxu0 0.0
    %2910 = vmatprep.subr.mxu0 0.0
    %2911 = vmatpush1.msra.mxu0 0.0
    %2912 = vmatprep.subr.mxu0 0.0
    %2913 = vmatpush1.msra.mxu0 0.0
    %2914 = vmatprep.subr.mxu0 0.0
    %2915 = vmatpush1.msra.mxu0 0.0
    %2916 = vmatprep.subr.mxu0 0.0
    %2917 = vmatpush1.msra.mxu0 0.0
    %2918 = vmatprep.subr.mxu0 0.0
    %2919 = vmatpush1.msra.mxu0 0.0
    %2920 = vmatprep.subr.mxu0 0.0
    %2921 = vmatpush1.msra.mxu0 0.0
    %2922 = vmatprep.mubr.f32.mxu0 0.0
    %2923 = vmatmul.mubr.f32.gmra.mrb[0].mxu0 %v2856
    %v2924 = vpop.f32.mrb[0].mxu0
    %v2925 = vadd.f32 %v338, %v2924
    %v2926 = vpop.f32.mrb[0].mxu0
    %2927 = vdwg.mxu0
    %v2928 = vsel %vm152, %v2677, 0
    %2930 = vmatprep.subr.mxu0 0.0
    %2931 = vmatpush1.msra.mxu0 %v135
    %2932 = vmatprep.subr.mxu0 0.0
    %2933 = vmatpush1.msra.mxu0 %v136
    %2934 = vmatprep.subr.mxu0 0.0
    %2935 = vmatpush1.msra.mxu0 %v137
    %2936 = vmatprep.subr.mxu0 0.0
    %2937 = vmatpush1.msra.mxu0 %v138
    %2938 = vmatprep.subr.mxu0 0.0
    %2939 = vmatpush1.msra.mxu0 0.0
    %2940 = vmatprep.subr.mxu0 0.0
    %2941 = vmatpush1.msra.mxu0 0.0
    %2942 = vmatprep.subr.mxu0 0.0
    %2943 = vmatpush1.msra.mxu0 0.0
    %2944 = vmatprep.subr.mxu0 0.0
    %2945 = vmatpush1.msra.mxu0 0.0
    %2946 = vmatprep.subr.mxu0 0.0
    %2947 = vmatpush1.msra.mxu0 0.0
    %2948 = vmatprep.subr.mxu0 0.0
    %2949 = vmatpush1.msra.mxu0 0.0
    %2950 = vmatprep.subr.mxu0 0.0
    %2951 = vmatpush1.msra.mxu0 0.0
    %2952 = vmatprep.subr.mxu0 0.0
    %2953 = vmatpush1.msra.mxu0 0.0
    %2954 = vmatprep.subr.mxu0 0.0
    %2955 = vmatpush1.msra.mxu0 0.0
    %2956 = vmatprep.subr.mxu0 0.0
    %2957 = vmatpush1.msra.mxu0 0.0
    %2958 = vmatprep.subr.mxu0 0.0
    %2959 = vmatpush1.msra.mxu0 0.0
    %2960 = vmatprep.subr.mxu0 0.0
    %2961 = vmatpush1.msra.mxu0 0.0
    %2962 = vmatprep.subr.mxu0 0.0
    %2963 = vmatpush1.msra.mxu0 0.0
    %2964 = vmatprep.subr.mxu0 0.0
    %2965 = vmatpush1.msra.mxu0 0.0
    %2966 = vmatprep.subr.mxu0 0.0
    %2967 = vmatpush1.msra.mxu0 0.0
    %2968 = vmatprep.subr.mxu0 0.0
    %2969 = vmatpush1.msra.mxu0 0.0
    %2970 = vmatprep.subr.mxu0 0.0
    %2971 = vmatpush1.msra.mxu0 0.0
    %2972 = vmatprep.subr.mxu0 0.0
    %2973 = vmatpush1.msra.mxu0 0.0
    %2974 = vmatprep.subr.mxu0 0.0
    %2975 = vmatpush1.msra.mxu0 0.0
    %2976 = vmatprep.subr.mxu0 0.0
    %2977 = vmatpush1.msra.mxu0 0.0
    %2978 = vmatprep.subr.mxu0 0.0
    %2979 = vmatpush1.msra.mxu0 0.0
    %2980 = vmatprep.subr.mxu0 0.0
    %2981 = vmatpush1.msra.mxu0 0.0
    %2982 = vmatprep.subr.mxu0 0.0
    %2983 = vmatpush1.msra.mxu0 0.0
    %2984 = vmatprep.subr.mxu0 0.0
    %2985 = vmatpush1.msra.mxu0 0.0
    %2986 = vmatprep.subr.mxu0 0.0
    %2987 = vmatpush1.msra.mxu0 0.0
    %2988 = vmatprep.subr.mxu0 0.0
    %2989 = vmatpush1.msra.mxu0 0.0
    %2990 = vmatprep.subr.mxu0 0.0
    %2991 = vmatpush1.msra.mxu0 0.0
    %2992 = vmatprep.subr.mxu0 0.0
    %2993 = vmatpush1.msra.mxu0 0.0
    %2994 = vmatprep.mubr.f32.mxu0 0.0
    %2995 = vmatmul.mubr.f32.gmra.mrb[0].mxu0 %v2928
    %v2996 = vpop.f32.mrb[0].mxu0
    %v2997 = vadd.f32 %v417, %v2996
    %v2998 = vpop.f32.mrb[0].mxu0
    %2999 = vdwg.mxu0
    %v3000 = vadd.f32 %v2925, %v2997
    %v3001 = vxor.u32 %v3000, 2147483648
    %v3002 = vmul.f32 %v3001, 1.442695
    %v3003 = vpow.pop %v3002
    %v3004 = vadd.f32 %v3003, 1.0
    %v3005 = vrcp.pop %v3004
    %v3006 = vmul.f32 1.0, %v3005
    %3008 = vrot.lane.b32.xlu0 %v2997, 64
    %v3009 = vpop.permute.xlu0 %3008
    %v3011 = vmul.f32 %v3006, %v3009
    %3013 = vrot.lane.b32.xlu0 %v3011, 64
    %v3014 = vpop.permute.xlu0 %3013
    %v3016 = vadd.f32 %v2925, %v3014
    %v3017 = vtanh.pop %v3016
    %v3018 = vsub.f32 1.0, %v3006
    %3020 = vrot.lane.b32.xlu0 %v3017, 96
    %v3021 = vpop.permute.xlu0 %3020
    %v3023 = vmul.f32 %v3018, %v3021
    %v3024 = vmul.f32 %v3006, %v2668
    %v3025 = vadd.f32 %v3023, %v3024
    %3027 = vrot.lane.b32.xlu0 %v2854, 96
    %v3028 = vpop.permute.xlu0 %3027
    %s3030 = scalar_lea.vmem %s10, 14
    %3031 = vst.msk [vmem:[%s3030] sm:$0x3] %vm525, %v3028
    %3033 = vrot.lane.b32.xlu0 %v3025, 96
    %v3034 = vpop.permute.xlu0 %3033
    %3036 = vst.msk [vmem:[%s111] sm:$0x3] %vm525, %v3034
    %3037 = vst.msk [vmem:[#allocation2] sm:$0x3] %vm525, %v3028
    %3038 = vst.msk [vmem:[#allocation3] sm:$0x3] %vm525, %v3034
    %s3039 = ssub.s32 0, 0
    %s3040 = smul.u32 8, %s3039
    %p3041 = scmp.lt.s32.totalorder %s3040, 7
    %s3042 = scalar_select %p3041, %s3040, 7
    %s3043 = smul.addr %s3042, 2
    %s3044 = scalar_lea.vmem %s11, %s3043
    // Predicated region
    $region58: #{encoder_forward.1} parent=1 // pred_check
      _
    $region59: #{encoder_forward.1} parent=1 // pred_check_branch
      %3046 = sbr.rel (0) target = $region61
    $region60: #{encoder_forward.1} parent=1 // pred_region
      _
    $region61: #{encoder_forward.1} parent=1 // pred_fallthru
      _
    // Predicated region
    $region62: #{encoder_forward.1} parent=1 // pred_check
      _
    $region63: #{encoder_forward.1} parent=1 // pred_check_branch
      %3048 = sbr.rel (0) target = $region65
    $region64: #{encoder_forward.1} parent=1 // pred_region
      %s3049 = ssub.s32 0, 0
      %s3050 = smul.u32 8, %s3049
    $region65: #{encoder_forward.1} parent=1 // pred_fallthru
      _
    // Predicated region
    $region66: #{encoder_forward.1} parent=1 // pred_check
      _
    $region67: #{encoder_forward.1} parent=1 // pred_check_branch
      %3052 = sbr.rel (0) target = $region69
    $region68: #{encoder_forward.1} parent=1 // pred_region
      _
    $region69: #{encoder_forward.1} parent=1 // pred_fallthru
      _
    // Predicated region
    $region70: #{encoder_forward.1} parent=1 // pred_check
      _
    $region71: #{encoder_forward.1} parent=1 // pred_check_branch
      %3054 = sbr.rel (0) target = $region73
    $region72: #{encoder_forward.1} parent=1 // pred_region
      %s3055 = ssub.s32 0, 0
      %s3056 = smul.u32 8, %s3055
      %p3057 = scmp.lt.s32.totalorder %s3056, 7
      %s3058 = scalar_select %p3057, %s3056, 7
      %s3059 = smul.addr %s3058, 2
      %s3060 = scalar_lea.vmem %s11, %s3059
    $region73: #{encoder_forward.1} parent=1 // pred_fallthru
      _
    %3061 = vsyncpa [#allocation5], 1
    %3062 = vsyncpa [#allocation7], 1

</llo_original>
